<compile_context>
chip_gen: v6e
topology: v6e:2x2x1
jax: 0.10.0
libtpu: 0.0.40
codegen_flags: <defaults>
</compile_context>

<pallas_src>
import jax
import jax.numpy as jnp
from jax.experimental import pallas as pl
from jax.experimental.pallas import tpu as pltpu

GIN_EPS = 0.0  # GIN epsilon (default 0.0 in torch_geometric GINConv)


def _round_up(x, m):
    return ((x + m - 1) // m) * m


def _pad2(x, rows, cols):
    return jnp.zeros((rows, cols), x.dtype).at[: x.shape[0], : x.shape[1]].set(x)


# ----------------------------------------------------------------------------
# Pallas kernel: one tile of TN nodes per grid step.
# ----------------------------------------------------------------------------
def _masked_signinv_kernel(v_full_ref, a_ref, cnt_ref,
                           aw1_ref, ab1_ref, w2_ref, b2e_ref,
                           w3_ref, b3_ref, w4_ref, b4_ref,
                           out_ref):
    tn = a_ref.shape[0]
    k = v_full_ref.shape[1]

    # Slice this tile's eigenvector rows out of the resident full V (no second
    # DMA stream for V).
    row0 = pl.multiple_of(pl.program_id(0) * tn, tn)
    v_blk = v_full_ref[pl.ds(row0, tn), :]                     # [TN, K]
    cnt = cnt_ref[...]                                         # [TN, 1] int32

    # GIN aggregation (message passing over the node dimension) on the MXU.
    agg = jnp.dot(a_ref[...], v_full_ref[...],
                  preferred_element_type=jnp.float32)          # [TN, K]
    pre = (1.0 + GIN_EPS) * v_blk + agg                        # [TN, K]

    # mask[n, k] = (k < num_nodes_of_graph_of(n)); folded into |pre| (2-D, cheap).
    kk = jax.lax.broadcasted_iota(jnp.int32, (tn, k), 1)       # [TN, K]
    maskf = (kk < cnt).astype(jnp.float32)                     # [TN, K]
    ap = maskf * jnp.abs(pre)                                  # [TN, K]
    mcount = jnp.minimum(cnt, k).astype(jnp.float32)           # [TN, 1]

    # Sign-invariant first layer + mask + sum over the pe dim, fused:
    #   relu(x*w1+b1) + relu(-x*w1+b1) = b1 + max(|x|*|w1|, |b1|)
    #   sum_k m*(...) = 2*mcount*relu(b1) + sum_k relu(m*|x|*|w1| - |b1|)
    # (the 2*mcount*relu(b1) term is folded into b2_eff after the w2 hoist).
    aw1 = aw1_ref[...]                                         # [1, HP] = |w1|
    ab1 = ab1_ref[...]                                         # [1, HP] = |b1|
    s = jnp.sum(
        jnp.maximum(ap[:, :, None] * aw1[None, :, :] - ab1[None, :, :], 0.0),
        axis=1)                                                # [TN, HP]

    # Hoisted Lin(H,H):  pooled = S @ w2 + mcount * b2_eff,
    #   b2_eff = 2*(relu(b1) @ w2 + b2)   (precomputed in the wrapper).
    pooled = (jnp.dot(s, w2_ref[...], preferred_element_type=jnp.float32)
              + mcount * b2e_ref[...])                         # [TN, HP]

    # rho: Lin(H,H) - ReLU - Lin(H,Dout)   (all lane-dense, padded to 128)
    r = jnp.maximum(
        jnp.dot(pooled, w3_ref[...], preferred_element_type=jnp.float32)
        + b3_ref[...], 0.0)
    out = jnp.dot(r, w4_ref[...], preferred_element_type=jnp.float32) + b4_ref[...]
    out_ref[...] = out.astype(out_ref.dtype)


# ----------------------------------------------------------------------------
# Wrapper (glue: dense adjacency from edge_index, per-node graph sizes, padding,
# and the host-side algebraic precomputation of |w1|, |b1|, b2_eff).
# ----------------------------------------------------------------------------
def masked_sign_inv_pe(Lambda, V, edge_index, batch, num_graphs, params, *, tn=128):
    del Lambda  # unused in the reference forward as well
    N, K = V.shape
    H = params["w2"].shape[0]
    Dout = params["w4"].shape[1]

    HP = _round_up(H, 128)     # lane-dense hidden dim
    DP = _round_up(Dout, 128)  # lane-dense output dim (sliced back afterwards)
    NP = _round_up(N, tn)      # node padding for the tile grid

    # Zero-padded weights: padded hidden/output lanes stay exactly zero through
    # ReLU + matmuls, so the math is unchanged.
    aw1 = _pad2(jnp.abs(params["w1"]), 1, HP)
    ab1 = _pad2(jnp.abs(params["b1"]), 1, HP)
    w2 = _pad2(params["w2"], HP, HP)
    # b2_eff = 2*(relu(b1)@w2 + b2): absorbs both the phi bias and the mask-count
    # contribution of the sign-invariant fusion (computed at the unpadded size).
    b2_eff = 2.0 * (jnp.maximum(params["b1"], 0.0) @ params["w2"] + params["b2"])
    b2e = _pad2(b2_eff, 1, HP)
    w3 = _pad2(params["w3"], HP, HP)
    b3 = _pad2(params["b3"], 1, HP)
    w4 = _pad2(params["w4"], HP, DP)
    b4 = _pad2(params["b4"], 1, DP)

    # TODO(synk): for large graphs, replace the dense NxN adjacency with a sparse
    # segment-sum / CSR-gather aggregation (dense A is O(N^2) HBM traffic); int8/bf16
    # A compression is a further HBM-bound win on v5e/v6e (bf16/fp8 on v7x).
    A = jnp.zeros((NP, NP), jnp.float32).at[edge_index[1], edge_index[0]].add(1.0)

    # num_nodes per graph, gathered back per node; padded rows get cnt = 0 so the
    # in-kernel mask zeroes them completely.
    counts = jnp.zeros((num_graphs,), jnp.int32).at[batch].add(1)
    cnt = jnp.zeros((NP, 1), jnp.int32).at[:N, 0].set(counts[batch])
    Vp = jnp.zeros((NP, K), jnp.float32).at[:N, :].set(V)

    full = lambda i: (0, 0)
    grid_spec = pltpu.PrefetchScalarGridSpec(
        num_scalar_prefetch=0,
        grid=(NP // tn,),
        in_specs=[
            pl.BlockSpec((NP, K), full),               # V (full, aggregation + tile slice)
            pl.BlockSpec((tn, NP), lambda i: (i, 0)),  # A row tile
            pl.BlockSpec((tn, 1), lambda i: (i, 0)),   # cnt tile
            pl.BlockSpec((1, HP), full),               # |phi W1|
            pl.BlockSpec((1, HP), full),               # |phi b1|
            pl.BlockSpec((HP, HP), full),              # phi W2
            pl.BlockSpec((1, HP), full),               # b2_eff
            pl.BlockSpec((HP, HP), full),              # rho W3
            pl.BlockSpec((1, HP), full),               # rho b3
            pl.BlockSpec((HP, DP), full),              # rho W4
            pl.BlockSpec((1, DP), full),               # rho b4
        ],
        out_specs=pl.BlockSpec((tn, DP), lambda i: (i, 0)),
    )

    out = pl.pallas_call(
        _masked_signinv_kernel,
        out_shape=jax.ShapeDtypeStruct((NP, DP), jnp.float32),
        grid_spec=grid_spec,
        compiler_params=pltpu.CompilerParams(
            dimension_semantics=("parallel",),
            vmem_limit_bytes=48 * 1024 * 1024,  # fits v7x's 64 MiB as well as v5e/v6e
        ),
    )(Vp, A, cnt, aw1, ab1, w2, b2e, w3, b3, w4, b4)

    return out[:N, :Dout]


# ----------------------------------------------------------------------------
# Pure-JAX reference (same math, unpadded, literal phi(x)+phi(-x)) for correctness.
# ----------------------------------------------------------------------------
def _reference(V, edge_index, batch, num_graphs, params):
    N, K = V.shape
    A = jnp.zeros((N, N), jnp.float32).at[edge_index[1], edge_index[0]].add(1.0)
    counts = jnp.zeros((num_graphs,), jnp.int32).at[batch].add(1)
    cnt = counts[batch][:, None]

    agg = A @ V
    pre = (1.0 + GIN_EPS) * V + agg

    def phi(x):
        h1 = jnp.maximum(x[:, :, None] * params["w1"][0] + params["b1"][0], 0.0)
        return jnp.einsum("nkh,hm->nkm", h1, params["w2"]) + params["b2"][0]

    s = phi(pre) + phi(-pre)
    mask = (jnp.arange(K)[None, :] < cnt).astype(jnp.float32)
    pooled = (s * mask[:, :, None]).sum(axis=1)
    r = jnp.maximum(pooled @ params["w3"] + params["b3"][0], 0.0)
    return r @ params["w4"] + params["b4"][0]


# ----------------------------------------------------------------------------
def _init_params(key, hidden, dout):
    ks = jax.random.split(key, 8)

    def lin(k, fan_in, shape):
        return jax.random.normal(k, shape, jnp.float32) / jnp.sqrt(float(fan_in))

    return {
        "w1": lin(ks[0], 1, (1, hidden)),
        "b1": lin(ks[1], 1, (1, hidden)),
        "w2": lin(ks[2], hidden, (hidden, hidden)),
        "b2": lin(ks[3], hidden, (1, hidden)),
        "w3": lin(ks[4], hidden, (hidden, hidden)),
        "b3": lin(ks[5], hidden, (1, hidden)),
        "w4": lin(ks[6], hidden, (hidden, dout)),
        "b4": lin(ks[7], hidden, (1, dout)),
    }


if __name__ == "__main__":
    N, K, H, DOUT = 16, 8, 32, 16        # 2 graphs x 8 nodes, pe_dim=8
    NUM_GRAPHS = 2                       # static (no device->host sync)
    key = jax.random.PRNGKey(0)
    k_lam, k_v, k_par = jax.random.split(key, 3)

    Lambda = jax.random.normal(k_lam, (N, K), jnp.float32)       # unused by forward
    V = jax.random.normal(k_v, (N, K), jnp.float32)

    # Two 8-node ring graphs, bidirectional edges.
    src, dst = [], []
    for g in range(NUM_GRAPHS):
        base = g * 8
        for i in range(8):
            a, b = base + i, base + (i + 1) % 8
            src += [a, b]
            dst += [b, a]
    edge_index = jnp.array([src, dst], dtype=jnp.int32)           # [2, 32]
    batch = jnp.array([0] * 8 + [1] * 8, dtype=jnp.int32)         # [16]

    params = _init_params(k_par, H, DOUT)

    out = masked_sign_inv_pe(Lambda, V, edge_index, batch, NUM_GRAPHS, params, tn=128)
    out = jax.block_until_ready(out)

    ref = _reference(V, edge_index, batch, NUM_GRAPHS, params)
    assert out.shape == (N, DOUT)
    assert jnp.allclose(out, ref, rtol=1e-4, atol=1e-4), (
        f"max abs err {jnp.max(jnp.abs(out - ref))}")

    print("KERNEL_OK")
</pallas_src>

<mosaic_0001>
module attributes {stable_mosaic.version = 11 : i64} {
  func.func @_masked_signinv_kernel(%arg0: i32, %arg1: memref<128x8xf32, #tpu.memory_space<vmem>>, %arg2: memref<128x128xf32, #tpu.memory_space<vmem>>, %arg3: memref<128x1xi32, #tpu.memory_space<vmem>>, %arg4: memref<1x128xf32, #tpu.memory_space<vmem>>, %arg5: memref<1x128xf32, #tpu.memory_space<vmem>>, %arg6: memref<128x128xf32, #tpu.memory_space<vmem>>, %arg7: memref<1x128xf32, #tpu.memory_space<vmem>>, %arg8: memref<128x128xf32, #tpu.memory_space<vmem>>, %arg9: memref<1x128xf32, #tpu.memory_space<vmem>>, %arg10: memref<128x128xf32, #tpu.memory_space<vmem>>, %arg11: memref<1x128xf32, #tpu.memory_space<vmem>>, %arg12: memref<128x128xf32, #tpu.memory_space<vmem>>) attributes {dimension_semantics = [#tpu.dimension_semantics<parallel>], iteration_bounds = array<i64: 1>, scalar_prefetch = 0 : i64, scratch_operands = 0 : i64, tpu.core_type = #tpu.core_type<tc>, window_params = [{pipeline_mode = #tpu.pipeline_mode<synchronous>, transform_indices = @transform_0, window_bounds = array<i64: 128, 8>}, {transform_indices = @transform_1, window_bounds = array<i64: 128, 128>}, {transform_indices = @transform_2, window_bounds = array<i64: 128, 1>}, {pipeline_mode = #tpu.pipeline_mode<synchronous>, transform_indices = @transform_3, window_bounds = array<i64: 1, 128>}, {pipeline_mode = #tpu.pipeline_mode<synchronous>, transform_indices = @transform_4, window_bounds = array<i64: 1, 128>}, {pipeline_mode = #tpu.pipeline_mode<synchronous>, transform_indices = @transform_5, window_bounds = array<i64: 128, 128>}, {pipeline_mode = #tpu.pipeline_mode<synchronous>, transform_indices = @transform_6, window_bounds = array<i64: 1, 128>}, {pipeline_mode = #tpu.pipeline_mode<synchronous>, transform_indices = @transform_7, window_bounds = array<i64: 128, 128>}, {pipeline_mode = #tpu.pipeline_mode<synchronous>, transform_indices = @transform_8, window_bounds = array<i64: 1, 128>}, {pipeline_mode = #tpu.pipeline_mode<synchronous>, transform_indices = @transform_9, window_bounds = array<i64: 128, 128>}, {pipeline_mode = #tpu.pipeline_mode<synchronous>, transform_indices = @transform_10, window_bounds = array<i64: 1, 128>}, {transform_indices = @transform_11, window_bounds = array<i64: 128, 128>}]} {
    %c128_i32 = arith.constant 128 : i32
    %0 = arith.muli %arg0, %c128_i32 : i32
    %1 = tpu.assume_multiple %0, 128 : i32
    %2 = arith.index_cast %1 : i32 to index
    %c0 = arith.constant 0 : index
    %3 = vector.load %arg1[%2, %c0] : memref<128x8xf32, #tpu.memory_space<vmem>>, vector<128x8xf32>
    %c0_0 = arith.constant 0 : index
    %c0_1 = arith.constant 0 : index
    %4 = vector.load %arg3[%c0_0, %c0_1] : memref<128x1xi32, #tpu.memory_space<vmem>>, vector<128x1xi32>
    %c0_2 = arith.constant 0 : index
    %c0_3 = arith.constant 0 : index
    %5 = vector.load %arg2[%c0_2, %c0_3] : memref<128x128xf32, #tpu.memory_space<vmem>>, vector<128x128xf32>
    %c0_4 = arith.constant 0 : index
    %c0_5 = arith.constant 0 : index
    %6 = vector.load %arg1[%c0_4, %c0_5] : memref<128x8xf32, #tpu.memory_space<vmem>>, vector<128x8xf32>
    %cst = arith.constant dense<0.000000e+00> : vector<128x8xf32>
    %7 = tpu.matmul %5, %6, %cst {dimension_numbers = #tpu.dot_dimension_numbers<[1], [0], [0], [1], [0, 0, 1, 1], [], []>} : vector<128x128xf32>, vector<128x8xf32>, vector<128x8xf32> -> vector<128x8xf32>
    %cst_6 = arith.constant 1.000000e+00 : f32
    %8 = vector.broadcast %cst_6 : f32 to vector<128x8xf32>
    %9 = arith.mulf %8, %3 : vector<128x8xf32>
    %10 = arith.addf %9, %7 : vector<128x8xf32>
    %11 = tpu.iota {dimensions = array<i32: 1>} : vector<128x8xi32>
    %12 = vector.broadcast %4 : vector<128x1xi32> to vector<128x8xi32>
    %13 = arith.cmpi slt, %11, %12 : vector<128x8xi32>
    %14 = arith.extui %13 : vector<128x8xi1> to vector<128x8xi32>
    %15 = arith.sitofp %14 : vector<128x8xi32> to vector<128x8xf32>
    %16 = math.absf %10 : vector<128x8xf32>
    %17 = arith.mulf %15, %16 : vector<128x8xf32>
    %c8_i32 = arith.constant 8 : i32
    %18 = vector.broadcast %c8_i32 : i32 to vector<128x1xi32>
    %19 = arith.minsi %4, %18 : vector<128x1xi32>
    %20 = arith.sitofp %19 : vector<128x1xi32> to vector<128x1xf32>
    %c0_7 = arith.constant 0 : index
    %c0_8 = arith.constant 0 : index
    %21 = vector.load %arg4[%c0_7, %c0_8] : memref<1x128xf32, #tpu.memory_space<vmem>>, vector<1x128xf32>
    %c0_9 = arith.constant 0 : index
    %c0_10 = arith.constant 0 : index
    %22 = vector.load %arg5[%c0_9, %c0_10] : memref<1x128xf32, #tpu.memory_space<vmem>>, vector<1x128xf32>
    %23 = vector.shape_cast %17 : vector<128x8xf32> to vector<128x8x1xf32>
    %24 = vector.shape_cast %21 : vector<1x128xf32> to vector<1x1x128xf32>
    %25 = vector.broadcast %23 : vector<128x8x1xf32> to vector<128x8x128xf32>
    %26 = vector.broadcast %24 : vector<1x1x128xf32> to vector<128x8x128xf32>
    %27 = arith.mulf %25, %26 : vector<128x8x128xf32>
    %28 = vector.shape_cast %22 : vector<1x128xf32> to vector<1x1x128xf32>
    %29 = vector.broadcast %28 : vector<1x1x128xf32> to vector<128x8x128xf32>
    %30 = arith.subf %27, %29 : vector<128x8x128xf32>
    %cst_11 = arith.constant 0.000000e+00 : f32
    %31 = vector.broadcast %cst_11 : f32 to vector<128x8x128xf32>
    %32 = arith.maximumf %30, %31 : vector<128x8x128xf32>
    %cst_12 = arith.constant dense<0.000000e+00> : vector<128x128xf32>
    %33 = vector.multi_reduction <add>, %32, %cst_12 [1] : vector<128x8x128xf32> to vector<128x128xf32>
    %c0_13 = arith.constant 0 : index
    %c0_14 = arith.constant 0 : index
    %34 = vector.load %arg6[%c0_13, %c0_14] : memref<128x128xf32, #tpu.memory_space<vmem>>, vector<128x128xf32>
    %cst_15 = arith.constant dense<0.000000e+00> : vector<128x128xf32>
    %35 = tpu.matmul %33, %34, %cst_15 {dimension_numbers = #tpu.dot_dimension_numbers<[1], [0], [0], [1], [0, 0, 1, 1], [], []>} : vector<128x128xf32>, vector<128x128xf32>, vector<128x128xf32> -> vector<128x128xf32>
    %c0_16 = arith.constant 0 : index
    %c0_17 = arith.constant 0 : index
    %36 = vector.load %arg7[%c0_16, %c0_17] : memref<1x128xf32, #tpu.memory_space<vmem>>, vector<1x128xf32>
    %37 = vector.broadcast %20 : vector<128x1xf32> to vector<128x128xf32>
    %38 = vector.broadcast %36 : vector<1x128xf32> to vector<128x128xf32>
    %39 = arith.mulf %37, %38 : vector<128x128xf32>
    %40 = arith.addf %35, %39 : vector<128x128xf32>
    %c0_18 = arith.constant 0 : index
    %c0_19 = arith.constant 0 : index
    %41 = vector.load %arg8[%c0_18, %c0_19] : memref<128x128xf32, #tpu.memory_space<vmem>>, vector<128x128xf32>
    %cst_20 = arith.constant dense<0.000000e+00> : vector<128x128xf32>
    %42 = tpu.matmul %40, %41, %cst_20 {dimension_numbers = #tpu.dot_dimension_numbers<[1], [0], [0], [1], [0, 0, 1, 1], [], []>} : vector<128x128xf32>, vector<128x128xf32>, vector<128x128xf32> -> vector<128x128xf32>
    %c0_21 = arith.constant 0 : index
    %c0_22 = arith.constant 0 : index
    %43 = vector.load %arg9[%c0_21, %c0_22] : memref<1x128xf32, #tpu.memory_space<vmem>>, vector<1x128xf32>
    %44 = vector.broadcast %43 : vector<1x128xf32> to vector<128x128xf32>
    %45 = arith.addf %42, %44 : vector<128x128xf32>
    %cst_23 = arith.constant 0.000000e+00 : f32
    %46 = vector.broadcast %cst_23 : f32 to vector<128x128xf32>
    %47 = arith.maximumf %45, %46 : vector<128x128xf32>
    %c0_24 = arith.constant 0 : index
    %c0_25 = arith.constant 0 : index
    %48 = vector.load %arg10[%c0_24, %c0_25] : memref<128x128xf32, #tpu.memory_space<vmem>>, vector<128x128xf32>
    %cst_26 = arith.constant dense<0.000000e+00> : vector<128x128xf32>
    %49 = tpu.matmul %47, %48, %cst_26 {dimension_numbers = #tpu.dot_dimension_numbers<[1], [0], [0], [1], [0, 0, 1, 1], [], []>} : vector<128x128xf32>, vector<128x128xf32>, vector<128x128xf32> -> vector<128x128xf32>
    %c0_27 = arith.constant 0 : index
    %c0_28 = arith.constant 0 : index
    %50 = vector.load %arg11[%c0_27, %c0_28] : memref<1x128xf32, #tpu.memory_space<vmem>>, vector<1x128xf32>
    %51 = vector.broadcast %50 : vector<1x128xf32> to vector<128x128xf32>
    %52 = arith.addf %49, %51 : vector<128x128xf32>
    %c0_29 = arith.constant 0 : index
    %c0_30 = arith.constant 0 : index
    %53 = vector.load %arg12[%c0_29, %c0_30] : memref<128x128xf32, #tpu.memory_space<vmem>>, vector<128x128xf32>
    tpu.vector_store %arg12[%c0_29, %c0_30], %52 {strides = array<i32>} : memref<128x128xf32, #tpu.memory_space<vmem>>, vector<128x128xf32>,
    return
  }
  func.func @transform_0(%arg0: i32) -> (i32, i32) {
    %c0_i32 = arith.constant 0 : i32
    %c0_i32_0 = arith.constant 0 : i32
    %c0_i32_1 = arith.constant 0 : i32
    return %c0_i32, %c0_i32_0 : i32, i32
  }
  func.func @transform_1(%arg0: i32) -> (i32, i32) {
    %c0_i32 = arith.constant 0 : i32
    %c0_i32_0 = arith.constant 0 : i32
    return %arg0, %c0_i32 : i32, i32
  }
  func.func @transform_2(%arg0: i32) -> (i32, i32) {
    %c0_i32 = arith.constant 0 : i32
    %c0_i32_0 = arith.constant 0 : i32
    return %arg0, %c0_i32 : i32, i32
  }
  func.func @transform_3(%arg0: i32) -> (i32, i32) {
    %c0_i32 = arith.constant 0 : i32
    %c0_i32_0 = arith.constant 0 : i32
    %c0_i32_1 = arith.constant 0 : i32
    return %c0_i32, %c0_i32_0 : i32, i32
  }
  func.func @transform_4(%arg0: i32) -> (i32, i32) {
    %c0_i32 = arith.constant 0 : i32
    %c0_i32_0 = arith.constant 0 : i32
    %c0_i32_1 = arith.constant 0 : i32
    return %c0_i32, %c0_i32_0 : i32, i32
  }
  func.func @transform_5(%arg0: i32) -> (i32, i32) {
    %c0_i32 = arith.constant 0 : i32
    %c0_i32_0 = arith.constant 0 : i32
    %c0_i32_1 = arith.constant 0 : i32
    return %c0_i32, %c0_i32_0 : i32, i32
  }
  func.func @transform_6(%arg0: i32) -> (i32, i32) {
    %c0_i32 = arith.constant 0 : i32
    %c0_i32_0 = arith.constant 0 : i32
    %c0_i32_1 = arith.constant 0 : i32
    return %c0_i32, %c0_i32_0 : i32, i32
  }
  func.func @transform_7(%arg0: i32) -> (i32, i32) {
    %c0_i32 = arith.constant 0 : i32
    %c0_i32_0 = arith.constant 0 : i32
    %c0_i32_1 = arith.constant 0 : i32
    return %c0_i32, %c0_i32_0 : i32, i32
  }
  func.func @transform_8(%arg0: i32) -> (i32, i32) {
    %c0_i32 = arith.constant 0 : i32
    %c0_i32_0 = arith.constant 0 : i32
    %c0_i32_1 = arith.constant 0 : i32
    return %c0_i32, %c0_i32_0 : i32, i32
  }
  func.func @transform_9(%arg0: i32) -> (i32, i32) {
    %c0_i32 = arith.constant 0 : i32
    %c0_i32_0 = arith.constant 0 : i32
    %c0_i32_1 = arith.constant 0 : i32
    return %c0_i32, %c0_i32_0 : i32, i32
  }
  func.func @transform_10(%arg0: i32) -> (i32, i32) {
    %c0_i32 = arith.constant 0 : i32
    %c0_i32_0 = arith.constant 0 : i32
    %c0_i32_1 = arith.constant 0 : i32
    return %c0_i32, %c0_i32_0 : i32, i32
  }
  func.func @transform_11(%arg0: i32) -> (i32, i32) {
    %c0_i32 = arith.constant 0 : i32
    %c0_i32_0 = arith.constant 0 : i32
    return %arg0, %c0_i32 : i32, i32
  }
}

</mosaic_0001>

<llo_original>
// kernel: tpu_custom_call.1
$region0: #{tpu_custom_call.1}
  #allocation0 [shape = 'u32[]', space=smem, size = 0x4, offset = 0x4, fixed_abs, tag = 'smem constant byte address 0x4 - core index']
  #allocation1 [shape = 'u32[144,128]{1,0:T(1,128)}', space=vmem, size = 0x12000, scoped, tag = 'internal scratch']
  %s0 = inlined_call_operand.vmem [shape: f32[128,8], index: 0, kind: input, shape index: {}]
  %s1 = inlined_call_operand.vmem [shape: f32[128,128], index: 1, kind: input, shape index: {}]
  %s2 = inlined_call_operand.vmem [shape: s32[128,1], index: 2, kind: input, shape index: {}]
  %s3 = inlined_call_operand.vmem [shape: f32[1,128], index: 3, kind: input, shape index: {}]
  %s4 = inlined_call_operand.vmem [shape: f32[1,128], index: 4, kind: input, shape index: {}]
  %s5 = inlined_call_operand.vmem [shape: f32[128,128], index: 5, kind: input, shape index: {}]
  %s6 = inlined_call_operand.vmem [shape: f32[1,128], index: 6, kind: input, shape index: {}]
  %s7 = inlined_call_operand.hbm [shape: f32[128,128], index: 7, kind: input, shape index: {}]
  %s8 = inlined_call_operand.vmem [shape: f32[1,128], index: 8, kind: input, shape index: {}]
  %s9 = inlined_call_operand.hbm [shape: f32[128,128], index: 9, kind: input, shape index: {}]
  %s10 = inlined_call_operand.vmem [shape: f32[1,128], index: 10, kind: input, shape index: {}]
  %s11 = inlined_call_operand.hbm [shape: f32[128,128], index: 11, kind: output, shape index: {}]
  %s12 = sld [smem:[#allocation0]]
  $region62: #{tpu_custom_call.1} parent=0
    _
  %s14 = ssub.s32 1, %s12
  %s15 = scalar_select 0, %s14, %s12
  $region1: #{tpu_custom_call.1} parent=0
    #allocation2 [shape = 'u8[65536]{0}', space=vmem, size = 0x10000, scoped, tag = 'input window, operand 7, single buffered']
    #allocation3 [shape = 's32[1]{0}', space=sflag, size = 0x4, scoped, tag = 'scoped memory for tpu_custom_call.1']
    #allocation4 [shape = 's32[1]{0}', space=sflag, size = 0x4, scoped, tag = 'scoped memory for tpu_custom_call.1']
    #allocation5 [shape = 'u8[65536]{0}', space=vmem, size = 0x10000, scoped, tag = 'input window, operand 9, single buffered']
    #allocation6 [shape = 's32[1]{0}', space=sflag, size = 0x4, scoped, tag = 'scoped memory for tpu_custom_call.1']
    #allocation7 [shape = 'u8[65536]{0}', space=vmem, size = 0x10000, scoped, tag = 'output window, operand 0, single buffered']
    %16 = vsyncpa [#allocation3], 0
    %17 = vsyncpa [#allocation6], 0
    %18 = vsyncpa [#allocation4], 0
    // Predicated region
    $region2: #{tpu_custom_call.1} parent=1 // pred_check
      _
    $region3: #{tpu_custom_call.1} parent=1 // pred_check_branch
      %20 = sbr.rel (0) target = $region5
    $region4: #{tpu_custom_call.1} parent=1 // pred_region
      _
    $region5: #{tpu_custom_call.1} parent=1 // pred_fallthru
      _
    // Predicated region
    $region6: #{tpu_custom_call.1} parent=1 // pred_check
      _
    $region7: #{tpu_custom_call.1} parent=1 // pred_check_branch
      %22 = sbr.rel (0) target = $region9
    $region8: #{tpu_custom_call.1} parent=1 // pred_region
      _
    $region9: #{tpu_custom_call.1} parent=1 // pred_fallthru
      _
    // Predicated region
    $region10: #{tpu_custom_call.1} parent=1 // pred_check
      _
    $region11: #{tpu_custom_call.1} parent=1 // pred_check_branch
      %24 = sbr.rel (0) target = $region13
    $region12: #{tpu_custom_call.1} parent=1 // pred_region
      _
    $region13: #{tpu_custom_call.1} parent=1 // pred_fallthru
      _
    // Predicated region
    $region14: #{tpu_custom_call.1} parent=1 // pred_check
      _
    $region15: #{tpu_custom_call.1} parent=1 // pred_check_branch
      %26 = sbr.rel (0) target = $region17
    $region16: #{tpu_custom_call.1} parent=1 // pred_region
      _
    $region17: #{tpu_custom_call.1} parent=1 // pred_fallthru
      _
    // Predicated region
    $region18: #{tpu_custom_call.1} parent=1 // pred_check
      _
    $region19: #{tpu_custom_call.1} parent=1 // pred_check_branch
      %28 = sbr.rel (0) target = $region21
    $region20: #{tpu_custom_call.1} parent=1 // pred_region
      _
    $region21: #{tpu_custom_call.1} parent=1 // pred_fallthru
      _
    // Predicated region
    $region22: #{tpu_custom_call.1} parent=1 // pred_check
      _
    $region23: #{tpu_custom_call.1} parent=1 // pred_check_branch
      %30 = sbr.rel (0) target = $region25
    $region24: #{tpu_custom_call.1} parent=1 // pred_region
      _
    $region25: #{tpu_custom_call.1} parent=1 // pred_fallthru
      _
    // Predicated region
    $region26: #{tpu_custom_call.1} parent=1 // pred_check
      _
    $region27: #{tpu_custom_call.1} parent=1 // pred_check_branch
      %32 = sbr.rel (0) target = $region29
    $region28: #{tpu_custom_call.1} parent=1 // pred_region
      _
    $region29: #{tpu_custom_call.1} parent=1 // pred_fallthru
      _
    // Predicated region
    $region30: #{tpu_custom_call.1} parent=1 // pred_check
      _
    $region31: #{tpu_custom_call.1} parent=1 // pred_check_branch
      %34 = sbr.rel (0) target = $region33
    $region32: #{tpu_custom_call.1} parent=1 // pred_region
      %s36 = ssub.s32 2048, 2048
      %37 = vsyncadd [#allocation3], %s36
      %s38 = sshll.u32 [#allocation2], 4
      %s39 = int_to_ptr.vmem [resolvable:$true] %s38
      %44 = dma.hbm_to_vmem [thread:$0]  %s7, 2048, %s39, [#allocation3], 128, 128, 8
    $region33: #{tpu_custom_call.1} parent=1 // pred_fallthru
      _
    // Predicated region
    $region34: #{tpu_custom_call.1} parent=1 // pred_check
      _
    $region35: #{tpu_custom_call.1} parent=1 // pred_check_branch
      %46 = sbr.rel (0) target = $region37
    $region36: #{tpu_custom_call.1} parent=1 // pred_region
      _
    $region37: #{tpu_custom_call.1} parent=1 // pred_fallthru
      _
    // Predicated region
    $region38: #{tpu_custom_call.1} parent=1 // pred_check
      _
    $region39: #{tpu_custom_call.1} parent=1 // pred_check_branch
      %48 = sbr.rel (0) target = $region41
    $region40: #{tpu_custom_call.1} parent=1 // pred_region
      %s50 = ssub.s32 2048, 2048
      %51 = vsyncadd [#allocation6], %s50
      %s52 = sshll.u32 [#allocation5], 4
      %s53 = int_to_ptr.vmem [resolvable:$true] %s52
      %58 = dma.hbm_to_vmem [thread:$0]  %s9, 2048, %s53, [#allocation6], 128, 128, 8
    $region41: #{tpu_custom_call.1} parent=1 // pred_fallthru
      _
    // Predicated region
    $region42: #{tpu_custom_call.1} parent=1 // pred_check
      _
    $region43: #{tpu_custom_call.1} parent=1 // pred_check_branch
      %60 = sbr.rel (0) target = $region45
    $region44: #{tpu_custom_call.1} parent=1 // pred_region
      _
    $region45: #{tpu_custom_call.1} parent=1 // pred_fallthru
      _
    // Predicated region
    $region46: #{tpu_custom_call.1} parent=1 // pred_check
      _
    $region47: #{tpu_custom_call.1} parent=1 // pred_check_branch
      %62 = sbr.rel (0) target = $region49
    $region48: #{tpu_custom_call.1} parent=1 // pred_region
      %63 = dma.done [#allocation3], 2048
    $region49: #{tpu_custom_call.1} parent=1 // pred_fallthru
      _
    // Predicated region
    $region50: #{tpu_custom_call.1} parent=1 // pred_check
      _
    $region51: #{tpu_custom_call.1} parent=1 // pred_check_branch
      %65 = sbr.rel (0) target = $region53
    $region52: #{tpu_custom_call.1} parent=1 // pred_region
      %66 = dma.done [#allocation6], 2048
    $region53: #{tpu_custom_call.1} parent=1 // pred_fallthru
      _
    %s67 = smul.u32 0, 128
    %s68 = scalar_lea.vmem %s0, %s67
    %v69 = vld [vmem:[%s68] sm:$0xff]
    %v70 = vld [vmem:[%s68 + $0x8] sm:$0xff]
    %v71 = vld [vmem:[%s68 + $0x10] sm:$0xff]
    %v72 = vld [vmem:[%s68 + $0x18] sm:$0xff]
    %v73 = vld [vmem:[%s68 + $0x20] sm:$0xff]
    %v74 = vld [vmem:[%s68 + $0x28] sm:$0xff]
    %v75 = vld [vmem:[%s68 + $0x30] sm:$0xff]
    %v76 = vld [vmem:[%s68 + $0x38] sm:$0xff]
    %v77 = vld [vmem:[%s68 + $0x40] sm:$0xff]
    %v78 = vld [vmem:[%s68 + $0x48] sm:$0xff]
    %v79 = vld [vmem:[%s68 + $0x50] sm:$0xff]
    %v80 = vld [vmem:[%s68 + $0x58] sm:$0xff]
    %v81 = vld [vmem:[%s68 + $0x60] sm:$0xff]
    %v82 = vld [vmem:[%s68 + $0x68] sm:$0xff]
    %v83 = vld [vmem:[%s68 + $0x70] sm:$0xff]
    %v84 = vld [vmem:[%s68 + $0x78] sm:$0xff]
    %v85 = vld [vmem:[%s2] sm:$0xff]
    %v86 = vld [vmem:[%s2 + $0x8] sm:$0xff]
    %v87 = vld [vmem:[%s2 + $0x10] sm:$0xff]
    %v88 = vld [vmem:[%s2 + $0x18] sm:$0xff]
    %v89 = vld [vmem:[%s2 + $0x20] sm:$0xff]
    %v90 = vld [vmem:[%s2 + $0x28] sm:$0xff]
    %v91 = vld [vmem:[%s2 + $0x30] sm:$0xff]
    %v92 = vld [vmem:[%s2 + $0x38] sm:$0xff]
    %v93 = vld [vmem:[%s2 + $0x40] sm:$0xff]
    %v94 = vld [vmem:[%s2 + $0x48] sm:$0xff]
    %v95 = vld [vmem:[%s2 + $0x50] sm:$0xff]
    %v96 = vld [vmem:[%s2 + $0x58] sm:$0xff]
    %v97 = vld [vmem:[%s2 + $0x60] sm:$0xff]
    %v98 = vld [vmem:[%s2 + $0x68] sm:$0xff]
    %v99 = vld [vmem:[%s2 + $0x70] sm:$0xff]
    %v100 = vld [vmem:[%s2 + $0x78] sm:$0xff]
    %v101 = vld [vmem:[%s1] sm:$0xff]
    %v102 = vld [vmem:[%s1 + $0x8] sm:$0xff]
    %v103 = vld [vmem:[%s1 + $0x10] sm:$0xff]
    %v104 = vld [vmem:[%s1 + $0x18] sm:$0xff]
    %v105 = vld [vmem:[%s1 + $0x20] sm:$0xff]
    %v106 = vld [vmem:[%s1 + $0x28] sm:$0xff]
    %v107 = vld [vmem:[%s1 + $0x30] sm:$0xff]
    %v108 = vld [vmem:[%s1 + $0x38] sm:$0xff]
    %v109 = vld [vmem:[%s1 + $0x40] sm:$0xff]
    %v110 = vld [vmem:[%s1 + $0x48] sm:$0xff]
    %v111 = vld [vmem:[%s1 + $0x50] sm:$0xff]
    %v112 = vld [vmem:[%s1 + $0x58] sm:$0xff]
    %v113 = vld [vmem:[%s1 + $0x60] sm:$0xff]
    %v114 = vld [vmem:[%s1 + $0x68] sm:$0xff]
    %v115 = vld [vmem:[%s1 + $0x70] sm:$0xff]
    %v116 = vld [vmem:[%s1 + $0x78] sm:$0xff]
    %v117 = vld [vmem:[%s0] sm:$0xff]
    %v118 = vld [vmem:[%s0 + $0x8] sm:$0xff]
    %v119 = vld [vmem:[%s0 + $0x10] sm:$0xff]
    %v120 = vld [vmem:[%s0 + $0x18] sm:$0xff]
    %v121 = vld [vmem:[%s0 + $0x20] sm:$0xff]
    %v122 = vld [vmem:[%s0 + $0x28] sm:$0xff]
    %v123 = vld [vmem:[%s0 + $0x30] sm:$0xff]
    %v124 = vld [vmem:[%s0 + $0x38] sm:$0xff]
    %v125 = vld [vmem:[%s0 + $0x40] sm:$0xff]
    %v126 = vld [vmem:[%s0 + $0x48] sm:$0xff]
    %v127 = vld [vmem:[%s0 + $0x50] sm:$0xff]
    %v128 = vld [vmem:[%s0 + $0x58] sm:$0xff]
    %v129 = vld [vmem:[%s0 + $0x60] sm:$0xff]
    %v130 = vld [vmem:[%s0 + $0x68] sm:$0xff]
    %v131 = vld [vmem:[%s0 + $0x70] sm:$0xff]
    %v132 = vld [vmem:[%s0 + $0x78] sm:$0xff]
    %133 = vmatprep.subr.mxu0 0.0
    %134 = vmatpush1.msra.mxu0 %v132
    %135 = vmatprep.subr.mxu0 0.0
    %136 = vmatpush1.msra.mxu0 %v131
    %137 = vmatprep.subr.mxu0 0.0
    %138 = vmatpush1.msra.mxu0 %v130
    %139 = vmatprep.subr.mxu0 0.0
    %140 = vmatpush1.msra.mxu0 %v129
    %141 = vmatprep.subr.mxu0 0.0
    %142 = vmatpush1.msra.mxu0 %v128
    %143 = vmatprep.subr.mxu0 0.0
    %144 = vmatpush1.msra.mxu0 %v127
    %145 = vmatprep.subr.mxu0 0.0
    %146 = vmatpush1.msra.mxu0 %v126
    %147 = vmatprep.subr.mxu0 0.0
    %148 = vmatpush1.msra.mxu0 %v125
    %149 = vmatprep.subr.mxu0 0.0
    %150 = vmatpush1.msra.mxu0 %v124
    %151 = vmatprep.subr.mxu0 0.0
    %152 = vmatpush1.msra.mxu0 %v123
    %153 = vmatprep.subr.mxu0 0.0
    %154 = vmatpush1.msra.mxu0 %v122
    %155 = vmatprep.subr.mxu0 0.0
    %156 = vmatpush1.msra.mxu0 %v121
    %157 = vmatprep.subr.mxu0 0.0
    %158 = vmatpush1.msra.mxu0 %v120
    %159 = vmatprep.subr.mxu0 0.0
    %160 = vmatpush1.msra.mxu0 %v119
    %161 = vmatprep.subr.mxu0 0.0
    %162 = vmatpush1.msra.mxu0 %v118
    %163 = vmatprep.subr.mxu0 0.0
    %164 = vmatpush1.msra.mxu0 %v117
    %165 = vmatprep.subr.mxu0 0.0
    %166 = vmatpush2.msra.mxu0 0.0
    %167 = vmatprep.subr.mxu0 0.0
    %168 = vmatpush2.msra.mxu0 0.0
    %169 = vmatprep.subr.mxu0 0.0
    %170 = vmatpush2.msra.mxu0 0.0
    %171 = vmatprep.subr.mxu0 0.0
    %172 = vmatpush2.msra.mxu0 0.0
    %173 = vmatprep.subr.mxu0 0.0
    %174 = vmatpush2.msra.mxu0 0.0
    %175 = vmatprep.subr.mxu0 0.0
    %176 = vmatpush2.msra.mxu0 0.0
    %177 = vmatprep.subr.mxu0 0.0
    %178 = vmatpush2.msra.mxu0 0.0
    %179 = vmatprep.subr.mxu0 0.0
    %180 = vmatpush2.msra.mxu0 0.0
    %181 = vmatprep.subr.mxu0 0.0
    %182 = vmatpush2.msra.mxu0 0.0
    %183 = vmatprep.subr.mxu0 0.0
    %184 = vmatpush2.msra.mxu0 0.0
    %185 = vmatprep.subr.mxu0 0.0
    %186 = vmatpush2.msra.mxu0 0.0
    %187 = vmatprep.subr.mxu0 0.0
    %188 = vmatpush2.msra.mxu0 0.0
    %189 = vmatprep.subr.mxu0 0.0
    %190 = vmatpush2.msra.mxu0 0.0
    %191 = vmatprep.subr.mxu0 0.0
    %192 = vmatpush2.msra.mxu0 0.0
    %193 = vmatprep.subr.mxu0 0.0
    %194 = vmatpush2.msra.mxu0 0.0
    %195 = vmatprep.subr.mxu0 0.0
    %196 = vmatpush2.msra.mxu0 0.0
    %197 = vmatprep.mubr.f32.mxu0 0.0
    %198 = vmatmul.mubr.f32.gmra.mxu0 %v101
    %v199 = vpop.f32.mrf.mxu0
    %v200 = vadd.f32 0.0, %v199
    %v201 = vpop.f32.mrf.mxu0
    %202 = vmatprep.mubr.f32.mxu0 0.0
    %203 = vmatmul.mubr.f32.gmra.mxu0 %v102
    %v204 = vpop.f32.mrf.mxu0
    %v205 = vadd.f32 0.0, %v204
    %v206 = vpop.f32.mrf.mxu0
    %207 = vmatprep.mubr.f32.mxu0 0.0
    %208 = vmatmul.mubr.f32.gmra.mxu0 %v103
    %v209 = vpop.f32.mrf.mxu0
    %v210 = vadd.f32 0.0, %v209
    %v211 = vpop.f32.mrf.mxu0
    %212 = vmatprep.mubr.f32.mxu0 0.0
    %213 = vmatmul.mubr.f32.gmra.mxu0 %v104
    %v214 = vpop.f32.mrf.mxu0
    %v215 = vadd.f32 0.0, %v214
    %v216 = vpop.f32.mrf.mxu0
    %217 = vmatprep.mubr.f32.mxu0 0.0
    %218 = vmatmul.mubr.f32.gmra.mxu0 %v105
    %v219 = vpop.f32.mrf.mxu0
    %v220 = vadd.f32 0.0, %v219
    %v221 = vpop.f32.mrf.mxu0
    %222 = vmatprep.mubr.f32.mxu0 0.0
    %223 = vmatmul.mubr.f32.gmra.mxu0 %v106
    %v224 = vpop.f32.mrf.mxu0
    %v225 = vadd.f32 0.0, %v224
    %v226 = vpop.f32.mrf.mxu0
    %227 = vmatprep.mubr.f32.mxu0 0.0
    %228 = vmatmul.mubr.f32.gmra.mxu0 %v107
    %v229 = vpop.f32.mrf.mxu0
    %v230 = vadd.f32 0.0, %v229
    %v231 = vpop.f32.mrf.mxu0
    %232 = vmatprep.mubr.f32.mxu0 0.0
    %233 = vmatmul.mubr.f32.gmra.mxu0 %v108
    %v234 = vpop.f32.mrf.mxu0
    %v235 = vadd.f32 0.0, %v234
    %v236 = vpop.f32.mrf.mxu0
    %237 = vmatprep.mubr.f32.mxu0 0.0
    %238 = vmatmul.mubr.f32.gmra.mxu0 %v109
    %v239 = vpop.f32.mrf.mxu0
    %v240 = vadd.f32 0.0, %v239
    %v241 = vpop.f32.mrf.mxu0
    %242 = vmatprep.mubr.f32.mxu0 0.0
    %243 = vmatmul.mubr.f32.gmra.mxu0 %v110
    %v244 = vpop.f32.mrf.mxu0
    %v245 = vadd.f32 0.0, %v244
    %v246 = vpop.f32.mrf.mxu0
    %247 = vmatprep.mubr.f32.mxu0 0.0
    %248 = vmatmul.mubr.f32.gmra.mxu0 %v111
    %v249 = vpop.f32.mrf.mxu0
    %v250 = vadd.f32 0.0, %v249
    %v251 = vpop.f32.mrf.mxu0
    %252 = vmatprep.mubr.f32.mxu0 0.0
    %253 = vmatmul.mubr.f32.gmra.mxu0 %v112
    %v254 = vpop.f32.mrf.mxu0
    %v255 = vadd.f32 0.0, %v254
    %v256 = vpop.f32.mrf.mxu0
    %257 = vmatprep.mubr.f32.mxu0 0.0
    %258 = vmatmul.mubr.f32.gmra.mxu0 %v113
    %v259 = vpop.f32.mrf.mxu0
    %v260 = vadd.f32 0.0, %v259
    %v261 = vpop.f32.mrf.mxu0
    %262 = vmatprep.mubr.f32.mxu0 0.0
    %263 = vmatmul.mubr.f32.gmra.mxu0 %v114
    %v264 = vpop.f32.mrf.mxu0
    %v265 = vadd.f32 0.0, %v264
    %v266 = vpop.f32.mrf.mxu0
    %267 = vmatprep.mubr.f32.mxu0 0.0
    %268 = vmatmul.mubr.f32.gmra.mxu0 %v115
    %v269 = vpop.f32.mrf.mxu0
    %v270 = vadd.f32 0.0, %v269
    %v271 = vpop.f32.mrf.mxu0
    %272 = vmatprep.mubr.f32.mxu0 0.0
    %273 = vmatmul.mubr.f32.gmra.mxu0 %v116
    %v274 = vpop.f32.mrf.mxu0
    %v275 = vadd.f32 0.0, %v274
    %v276 = vpop.f32.mrf.mxu0
    %277 = vdwg.mxu0
    %v278 = vadd.f32 %v69, %v200
    %v279 = vadd.f32 %v70, %v205
    %v280 = vadd.f32 %v71, %v210
    %v281 = vadd.f32 %v72, %v215
    %v282 = vadd.f32 %v73, %v220
    %v283 = vadd.f32 %v74, %v225
    %v284 = vadd.f32 %v75, %v230
    %v285 = vadd.f32 %v76, %v235
    %v286 = vadd.f32 %v77, %v240
    %v287 = vadd.f32 %v78, %v245
    %v288 = vadd.f32 %v79, %v250
    %v289 = vadd.f32 %v80, %v255
    %v290 = vadd.f32 %v81, %v260
    %v291 = vadd.f32 %v82, %v265
    %v292 = vadd.f32 %v83, %v270
    %v293 = vadd.f32 %v84, %v275
    %v294 = vlaneseq
    %v295 = vand.u32 %v294, 127
    %296 = vset.pattern.permute.xlu0 0
    %297 = vperm.xlu0 %296, %v85
    %v298 = vpop.permute.xlu0 %297
    %299 = vset.pattern.permute.xlu0 0
    %300 = vperm.xlu0 %299, %v86
    %v301 = vpop.permute.xlu0 %300
    %302 = vset.pattern.permute.xlu0 0
    %303 = vperm.xlu0 %302, %v87
    %v304 = vpop.permute.xlu0 %303
    %305 = vset.pattern.permute.xlu0 0
    %306 = vperm.xlu0 %305, %v88
    %v307 = vpop.permute.xlu0 %306
    %308 = vset.pattern.permute.xlu0 0
    %309 = vperm.xlu0 %308, %v89
    %v310 = vpop.permute.xlu0 %309
    %311 = vset.pattern.permute.xlu0 0
    %312 = vperm.xlu0 %311, %v90
    %v313 = vpop.permute.xlu0 %312
    %314 = vset.pattern.permute.xlu0 0
    %315 = vperm.xlu0 %314, %v91
    %v316 = vpop.permute.xlu0 %315
    %317 = vset.pattern.permute.xlu0 0
    %318 = vperm.xlu0 %317, %v92
    %v319 = vpop.permute.xlu0 %318
    %320 = vset.pattern.permute.xlu0 0
    %321 = vperm.xlu0 %320, %v93
    %v322 = vpop.permute.xlu0 %321
    %323 = vset.pattern.permute.xlu0 0
    %324 = vperm.xlu0 %323, %v94
    %v325 = vpop.permute.xlu0 %324
    %326 = vset.pattern.permute.xlu0 0
    %327 = vperm.xlu0 %326, %v95
    %v328 = vpop.permute.xlu0 %327
    %329 = vset.pattern.permute.xlu0 0
    %330 = vperm.xlu0 %329, %v96
    %v331 = vpop.permute.xlu0 %330
    %332 = vset.pattern.permute.xlu0 0
    %333 = vperm.xlu0 %332, %v97
    %v334 = vpop.permute.xlu0 %333
    %335 = vset.pattern.permute.xlu0 0
    %336 = vperm.xlu0 %335, %v98
    %v337 = vpop.permute.xlu0 %336
    %338 = vset.pattern.permute.xlu0 0
    %339 = vperm.xlu0 %338, %v99
    %v340 = vpop.permute.xlu0 %339
    %341 = vset.pattern.permute.xlu0 0
    %342 = vperm.xlu0 %341, %v100
    %v343 = vpop.permute.xlu0 %342
    %vm344 = vcmp.lt.s32.totalorder %v295, %v298
    %vm345 = vcmp.lt.s32.totalorder %v295, %v301
    %vm346 = vcmp.lt.s32.totalorder %v295, %v304
    %vm347 = vcmp.lt.s32.totalorder %v295, %v307
    %vm348 = vcmp.lt.s32.totalorder %v295, %v310
    %vm349 = vcmp.lt.s32.totalorder %v295, %v313
    %vm350 = vcmp.lt.s32.totalorder %v295, %v316
    %vm351 = vcmp.lt.s32.totalorder %v295, %v319
    %vm352 = vcmp.lt.s32.totalorder %v295, %v322
    %vm353 = vcmp.lt.s32.totalorder %v295, %v325
    %vm354 = vcmp.lt.s32.totalorder %v295, %v328
    %vm355 = vcmp.lt.s32.totalorder %v295, %v331
    %vm356 = vcmp.lt.s32.totalorder %v295, %v334
    %vm357 = vcmp.lt.s32.totalorder %v295, %v337
    %vm358 = vcmp.lt.s32.totalorder %v295, %v340
    %vm359 = vcmp.lt.s32.totalorder %v295, %v343
    %v360 = vsel %vm344, 1, 0
    %v361 = vsel %vm345, 1, 0
    %v362 = vsel %vm346, 1, 0
    %v363 = vsel %vm347, 1, 0
    %v364 = vsel %vm348, 1, 0
    %v365 = vsel %vm349, 1, 0
    %v366 = vsel %vm350, 1, 0
    %v367 = vsel %vm351, 1, 0
    %v368 = vsel %vm352, 1, 0
    %v369 = vsel %vm353, 1, 0
    %v370 = vsel %vm354, 1, 0
    %v371 = vsel %vm355, 1, 0
    %v372 = vsel %vm356, 1, 0
    %v373 = vsel %vm357, 1, 0
    %v374 = vsel %vm358, 1, 0
    %v375 = vsel %vm359, 1, 0
    %v376 = vcvt.s32.f32 %v360
    %v377 = vcvt.s32.f32 %v361
    %v378 = vcvt.s32.f32 %v362
    %v379 = vcvt.s32.f32 %v363
    %v380 = vcvt.s32.f32 %v364
    %v381 = vcvt.s32.f32 %v365
    %v382 = vcvt.s32.f32 %v366
    %v383 = vcvt.s32.f32 %v367
    %v384 = vcvt.s32.f32 %v368
    %v385 = vcvt.s32.f32 %v369
    %v386 = vcvt.s32.f32 %v370
    %v387 = vcvt.s32.f32 %v371
    %v388 = vcvt.s32.f32 %v372
    %v389 = vcvt.s32.f32 %v373
    %v390 = vcvt.s32.f32 %v374
    %v391 = vcvt.s32.f32 %v375
    %v392 = vand.u32 2147483647, %v278
    %v393 = vand.u32 2147483647, %v279
    %v394 = vand.u32 2147483647, %v280
    %v395 = vand.u32 2147483647, %v281
    %v396 = vand.u32 2147483647, %v282
    %v397 = vand.u32 2147483647, %v283
    %v398 = vand.u32 2147483647, %v284
    %v399 = vand.u32 2147483647, %v285
    %v400 = vand.u32 2147483647, %v286
    %v401 = vand.u32 2147483647, %v287
    %v402 = vand.u32 2147483647, %v288
    %v403 = vand.u32 2147483647, %v289
    %v404 = vand.u32 2147483647, %v290
    %v405 = vand.u32 2147483647, %v291
    %v406 = vand.u32 2147483647, %v292
    %v407 = vand.u32 2147483647, %v293
    %v408 = vmul.f32 %v376, %v392
    %v409 = vmul.f32 %v377, %v393
    %v410 = vmul.f32 %v378, %v394
    %v411 = vmul.f32 %v379, %v395
    %v412 = vmul.f32 %v380, %v396
    %v413 = vmul.f32 %v381, %v397
    %v414 = vmul.f32 %v382, %v398
    %v415 = vmul.f32 %v383, %v399
    %v416 = vmul.f32 %v384, %v400
    %v417 = vmul.f32 %v385, %v401
    %v418 = vmul.f32 %v386, %v402
    %v419 = vmul.f32 %v387, %v403
    %v420 = vmul.f32 %v388, %v404
    %v421 = vmul.f32 %v389, %v405
    %v422 = vmul.f32 %v390, %v406
    %v423 = vmul.f32 %v391, %v407
    %vm424 = vcmp.lt.s32.totalorder %v85, 8
    %v425 = vsel %vm424, %v85, 8
    %vm426 = vcmp.lt.s32.totalorder %v86, 8
    %v427 = vsel %vm426, %v86, 8
    %vm428 = vcmp.lt.s32.totalorder %v87, 8
    %v429 = vsel %vm428, %v87, 8
    %vm430 = vcmp.lt.s32.totalorder %v88, 8
    %v431 = vsel %vm430, %v88, 8
    %vm432 = vcmp.lt.s32.totalorder %v89, 8
    %v433 = vsel %vm432, %v89, 8
    %vm434 = vcmp.lt.s32.totalorder %v90, 8
    %v435 = vsel %vm434, %v90, 8
    %vm436 = vcmp.lt.s32.totalorder %v91, 8
    %v437 = vsel %vm436, %v91, 8
    %vm438 = vcmp.lt.s32.totalorder %v92, 8
    %v439 = vsel %vm438, %v92, 8
    %vm440 = vcmp.lt.s32.totalorder %v93, 8
    %v441 = vsel %vm440, %v93, 8
    %vm442 = vcmp.lt.s32.totalorder %v94, 8
    %v443 = vsel %vm442, %v94, 8
    %vm444 = vcmp.lt.s32.totalorder %v95, 8
    %v445 = vsel %vm444, %v95, 8
    %vm446 = vcmp.lt.s32.totalorder %v96, 8
    %v447 = vsel %vm446, %v96, 8
    %vm448 = vcmp.lt.s32.totalorder %v97, 8
    %v449 = vsel %vm448, %v97, 8
    %vm450 = vcmp.lt.s32.totalorder %v98, 8
    %v451 = vsel %vm450, %v98, 8
    %vm452 = vcmp.lt.s32.totalorder %v99, 8
    %v453 = vsel %vm452, %v99, 8
    %vm454 = vcmp.lt.s32.totalorder %v100, 8
    %v455 = vsel %vm454, %v100, 8
    %v456 = vcvt.s32.f32 %v425
    %v457 = vcvt.s32.f32 %v427
    %v458 = vcvt.s32.f32 %v429
    %v459 = vcvt.s32.f32 %v431
    %v460 = vcvt.s32.f32 %v433
    %v461 = vcvt.s32.f32 %v435
    %v462 = vcvt.s32.f32 %v437
    %v463 = vcvt.s32.f32 %v439
    %v464 = vcvt.s32.f32 %v441
    %v465 = vcvt.s32.f32 %v443
    %v466 = vcvt.s32.f32 %v445
    %v467 = vcvt.s32.f32 %v447
    %v468 = vcvt.s32.f32 %v449
    %v469 = vcvt.s32.f32 %v451
    %v470 = vcvt.s32.f32 %v453
    %v471 = vcvt.s32.f32 %v455
    %v472 = vld [vmem:[%s3] sm:$0x1]
    %v473 = vld [vmem:[%s4] sm:$0x1]
    %v474 = vlaneseq
    %v475 = vshrl.u32 %v474, 7
    %v476 = vsub.s32 0, %v475
    %v477 = vrot.slane %v408, %v476
    %479 = vbcast.lane.b32.xlu0 %v477, 256
    %v480 = vpop.permute.xlu0 %479
    %v481 = vlaneseq
    %v482 = vshrl.u32 %v481, 7
    %v483 = vsub.s32 1, %v482
    %v484 = vrot.slane %v408, %v483
    %486 = vbcast.lane.b32.xlu0 %v484, 256
    %v487 = vpop.permute.xlu0 %486
    %v488 = vlaneseq
    %v489 = vshrl.u32 %v488, 7
    %v490 = vsub.s32 2, %v489
    %v491 = vrot.slane %v408, %v490
    %493 = vbcast.lane.b32.xlu0 %v491, 256
    %v494 = vpop.permute.xlu0 %493
    %v495 = vlaneseq
    %v496 = vshrl.u32 %v495, 7
    %v497 = vsub.s32 3, %v496
    %v498 = vrot.slane %v408, %v497
    %500 = vbcast.lane.b32.xlu0 %v498, 256
    %v501 = vpop.permute.xlu0 %500
    %v502 = vlaneseq
    %v503 = vshrl.u32 %v502, 7
    %v504 = vsub.s32 4, %v503
    %v505 = vrot.slane %v408, %v504
    %507 = vbcast.lane.b32.xlu0 %v505, 256
    %v508 = vpop.permute.xlu0 %507
    %v509 = vlaneseq
    %v510 = vshrl.u32 %v509, 7
    %v511 = vsub.s32 5, %v510
    %v512 = vrot.slane %v408, %v511
    %514 = vbcast.lane.b32.xlu0 %v512, 256
    %v515 = vpop.permute.xlu0 %514
    %v516 = vlaneseq
    %v517 = vshrl.u32 %v516, 7
    %v518 = vsub.s32 6, %v517
    %v519 = vrot.slane %v408, %v518
    %521 = vbcast.lane.b32.xlu0 %v519, 256
    %v522 = vpop.permute.xlu0 %521
    %v523 = vlaneseq
    %v524 = vshrl.u32 %v523, 7
    %v525 = vsub.s32 7, %v524
    %v526 = vrot.slane %v408, %v525
    %528 = vbcast.lane.b32.xlu0 %v526, 256
    %v529 = vpop.permute.xlu0 %528
    %v530 = vlaneseq
    %v531 = vshrl.u32 %v530, 7
    %v532 = vsub.s32 0, %v531
    %v533 = vrot.slane %v409, %v532
    %535 = vbcast.lane.b32.xlu0 %v533, 256
    %v536 = vpop.permute.xlu0 %535
    %v537 = vlaneseq
    %v538 = vshrl.u32 %v537, 7
    %v539 = vsub.s32 1, %v538
    %v540 = vrot.slane %v409, %v539
    %542 = vbcast.lane.b32.xlu0 %v540, 256
    %v543 = vpop.permute.xlu0 %542
    %v544 = vlaneseq
    %v545 = vshrl.u32 %v544, 7
    %v546 = vsub.s32 2, %v545
    %v547 = vrot.slane %v409, %v546
    %549 = vbcast.lane.b32.xlu0 %v547, 256
    %v550 = vpop.permute.xlu0 %549
    %v551 = vlaneseq
    %v552 = vshrl.u32 %v551, 7
    %v553 = vsub.s32 3, %v552
    %v554 = vrot.slane %v409, %v553
    %556 = vbcast.lane.b32.xlu0 %v554, 256
    %v557 = vpop.permute.xlu0 %556
    %v558 = vlaneseq
    %v559 = vshrl.u32 %v558, 7
    %v560 = vsub.s32 4, %v559
    %v561 = vrot.slane %v409, %v560
    %563 = vbcast.lane.b32.xlu0 %v561, 256
    %v564 = vpop.permute.xlu0 %563
    %v565 = vlaneseq
    %v566 = vshrl.u32 %v565, 7
    %v567 = vsub.s32 5, %v566
    %v568 = vrot.slane %v409, %v567
    %570 = vbcast.lane.b32.xlu0 %v568, 256
    %v571 = vpop.permute.xlu0 %570
    %v572 = vlaneseq
    %v573 = vshrl.u32 %v572, 7
    %v574 = vsub.s32 6, %v573
    %v575 = vrot.slane %v409, %v574
    %577 = vbcast.lane.b32.xlu0 %v575, 256
    %v578 = vpop.permute.xlu0 %577
    %v579 = vlaneseq
    %v580 = vshrl.u32 %v579, 7
    %v581 = vsub.s32 7, %v580
    %v582 = vrot.slane %v409, %v581
    %584 = vbcast.lane.b32.xlu0 %v582, 256
    %v585 = vpop.permute.xlu0 %584
    %v586 = vlaneseq
    %v587 = vshrl.u32 %v586, 7
    %v588 = vsub.s32 0, %v587
    %v589 = vrot.slane %v410, %v588
    %591 = vbcast.lane.b32.xlu0 %v589, 256
    %v592 = vpop.permute.xlu0 %591
    %v593 = vlaneseq
    %v594 = vshrl.u32 %v593, 7
    %v595 = vsub.s32 1, %v594
    %v596 = vrot.slane %v410, %v595
    %598 = vbcast.lane.b32.xlu0 %v596, 256
    %v599 = vpop.permute.xlu0 %598
    %v600 = vlaneseq
    %v601 = vshrl.u32 %v600, 7
    %v602 = vsub.s32 2, %v601
    %v603 = vrot.slane %v410, %v602
    %605 = vbcast.lane.b32.xlu0 %v603, 256
    %v606 = vpop.permute.xlu0 %605
    %v607 = vlaneseq
    %v608 = vshrl.u32 %v607, 7
    %v609 = vsub.s32 3, %v608
    %v610 = vrot.slane %v410, %v609
    %612 = vbcast.lane.b32.xlu0 %v610, 256
    %v613 = vpop.permute.xlu0 %612
    %v614 = vlaneseq
    %v615 = vshrl.u32 %v614, 7
    %v616 = vsub.s32 4, %v615
    %v617 = vrot.slane %v410, %v616
    %619 = vbcast.lane.b32.xlu0 %v617, 256
    %v620 = vpop.permute.xlu0 %619
    %v621 = vlaneseq
    %v622 = vshrl.u32 %v621, 7
    %v623 = vsub.s32 5, %v622
    %v624 = vrot.slane %v410, %v623
    %626 = vbcast.lane.b32.xlu0 %v624, 256
    %v627 = vpop.permute.xlu0 %626
    %v628 = vlaneseq
    %v629 = vshrl.u32 %v628, 7
    %v630 = vsub.s32 6, %v629
    %v631 = vrot.slane %v410, %v630
    %633 = vbcast.lane.b32.xlu0 %v631, 256
    %v634 = vpop.permute.xlu0 %633
    %v635 = vlaneseq
    %v636 = vshrl.u32 %v635, 7
    %v637 = vsub.s32 7, %v636
    %v638 = vrot.slane %v410, %v637
    %640 = vbcast.lane.b32.xlu0 %v638, 256
    %v641 = vpop.permute.xlu0 %640
    %v642 = vlaneseq
    %v643 = vshrl.u32 %v642, 7
    %v644 = vsub.s32 0, %v643
    %v645 = vrot.slane %v411, %v644
    %647 = vbcast.lane.b32.xlu0 %v645, 256
    %v648 = vpop.permute.xlu0 %647
    %v649 = vlaneseq
    %v650 = vshrl.u32 %v649, 7
    %v651 = vsub.s32 1, %v650
    %v652 = vrot.slane %v411, %v651
    %654 = vbcast.lane.b32.xlu0 %v652, 256
    %v655 = vpop.permute.xlu0 %654
    %v656 = vlaneseq
    %v657 = vshrl.u32 %v656, 7
    %v658 = vsub.s32 2, %v657
    %v659 = vrot.slane %v411, %v658
    %661 = vbcast.lane.b32.xlu0 %v659, 256
    %v662 = vpop.permute.xlu0 %661
    %v663 = vlaneseq
    %v664 = vshrl.u32 %v663, 7
    %v665 = vsub.s32 3, %v664
    %v666 = vrot.slane %v411, %v665
    %668 = vbcast.lane.b32.xlu0 %v666, 256
    %v669 = vpop.permute.xlu0 %668
    %v670 = vlaneseq
    %v671 = vshrl.u32 %v670, 7
    %v672 = vsub.s32 4, %v671
    %v673 = vrot.slane %v411, %v672
    %675 = vbcast.lane.b32.xlu0 %v673, 256
    %v676 = vpop.permute.xlu0 %675
    %v677 = vlaneseq
    %v678 = vshrl.u32 %v677, 7
    %v679 = vsub.s32 5, %v678
    %v680 = vrot.slane %v411, %v679
    %682 = vbcast.lane.b32.xlu0 %v680, 256
    %v683 = vpop.permute.xlu0 %682
    %v684 = vlaneseq
    %v685 = vshrl.u32 %v684, 7
    %v686 = vsub.s32 6, %v685
    %v687 = vrot.slane %v411, %v686
    %689 = vbcast.lane.b32.xlu0 %v687, 256
    %v690 = vpop.permute.xlu0 %689
    %v691 = vlaneseq
    %v692 = vshrl.u32 %v691, 7
    %v693 = vsub.s32 7, %v692
    %v694 = vrot.slane %v411, %v693
    %696 = vbcast.lane.b32.xlu0 %v694, 256
    %v697 = vpop.permute.xlu0 %696
    %v698 = vlaneseq
    %v699 = vshrl.u32 %v698, 7
    %v700 = vsub.s32 0, %v699
    %v701 = vrot.slane %v412, %v700
    %703 = vbcast.lane.b32.xlu0 %v701, 256
    %v704 = vpop.permute.xlu0 %703
    %v705 = vlaneseq
    %v706 = vshrl.u32 %v705, 7
    %v707 = vsub.s32 1, %v706
    %v708 = vrot.slane %v412, %v707
    %710 = vbcast.lane.b32.xlu0 %v708, 256
    %v711 = vpop.permute.xlu0 %710
    %v712 = vlaneseq
    %v713 = vshrl.u32 %v712, 7
    %v714 = vsub.s32 2, %v713
    %v715 = vrot.slane %v412, %v714
    %717 = vbcast.lane.b32.xlu0 %v715, 256
    %v718 = vpop.permute.xlu0 %717
    %v719 = vlaneseq
    %v720 = vshrl.u32 %v719, 7
    %v721 = vsub.s32 3, %v720
    %v722 = vrot.slane %v412, %v721
    %724 = vbcast.lane.b32.xlu0 %v722, 256
    %v725 = vpop.permute.xlu0 %724
    %v726 = vlaneseq
    %v727 = vshrl.u32 %v726, 7
    %v728 = vsub.s32 4, %v727
    %v729 = vrot.slane %v412, %v728
    %731 = vbcast.lane.b32.xlu0 %v729, 256
    %v732 = vpop.permute.xlu0 %731
    %v733 = vlaneseq
    %v734 = vshrl.u32 %v733, 7
    %v735 = vsub.s32 5, %v734
    %v736 = vrot.slane %v412, %v735
    %738 = vbcast.lane.b32.xlu0 %v736, 256
    %v739 = vpop.permute.xlu0 %738
    %v740 = vlaneseq
    %v741 = vshrl.u32 %v740, 7
    %v742 = vsub.s32 6, %v741
    %v743 = vrot.slane %v412, %v742
    %745 = vbcast.lane.b32.xlu0 %v743, 256
    %v746 = vpop.permute.xlu0 %745
    %v747 = vlaneseq
    %v748 = vshrl.u32 %v747, 7
    %v749 = vsub.s32 7, %v748
    %v750 = vrot.slane %v412, %v749
    %752 = vbcast.lane.b32.xlu0 %v750, 256
    %v753 = vpop.permute.xlu0 %752
    %v754 = vlaneseq
    %v755 = vshrl.u32 %v754, 7
    %v756 = vsub.s32 0, %v755
    %v757 = vrot.slane %v413, %v756
    %759 = vbcast.lane.b32.xlu0 %v757, 256
    %v760 = vpop.permute.xlu0 %759
    %v761 = vlaneseq
    %v762 = vshrl.u32 %v761, 7
    %v763 = vsub.s32 1, %v762
    %v764 = vrot.slane %v413, %v763
    %766 = vbcast.lane.b32.xlu0 %v764, 256
    %v767 = vpop.permute.xlu0 %766
    %v768 = vlaneseq
    %v769 = vshrl.u32 %v768, 7
    %v770 = vsub.s32 2, %v769
    %v771 = vrot.slane %v413, %v770
    %773 = vbcast.lane.b32.xlu0 %v771, 256
    %v774 = vpop.permute.xlu0 %773
    %v775 = vlaneseq
    %v776 = vshrl.u32 %v775, 7
    %v777 = vsub.s32 3, %v776
    %v778 = vrot.slane %v413, %v777
    %780 = vbcast.lane.b32.xlu0 %v778, 256
    %v781 = vpop.permute.xlu0 %780
    %v782 = vlaneseq
    %v783 = vshrl.u32 %v782, 7
    %v784 = vsub.s32 4, %v783
    %v785 = vrot.slane %v413, %v784
    %787 = vbcast.lane.b32.xlu0 %v785, 256
    %v788 = vpop.permute.xlu0 %787
    %v789 = vlaneseq
    %v790 = vshrl.u32 %v789, 7
    %v791 = vsub.s32 5, %v790
    %v792 = vrot.slane %v413, %v791
    %794 = vbcast.lane.b32.xlu0 %v792, 256
    %v795 = vpop.permute.xlu0 %794
    %v796 = vlaneseq
    %v797 = vshrl.u32 %v796, 7
    %v798 = vsub.s32 6, %v797
    %v799 = vrot.slane %v413, %v798
    %801 = vbcast.lane.b32.xlu0 %v799, 256
    %v802 = vpop.permute.xlu0 %801
    %v803 = vlaneseq
    %v804 = vshrl.u32 %v803, 7
    %v805 = vsub.s32 7, %v804
    %v806 = vrot.slane %v413, %v805
    %808 = vbcast.lane.b32.xlu0 %v806, 256
    %v809 = vpop.permute.xlu0 %808
    %v810 = vlaneseq
    %v811 = vshrl.u32 %v810, 7
    %v812 = vsub.s32 0, %v811
    %v813 = vrot.slane %v414, %v812
    %815 = vbcast.lane.b32.xlu0 %v813, 256
    %v816 = vpop.permute.xlu0 %815
    %v817 = vlaneseq
    %v818 = vshrl.u32 %v817, 7
    %v819 = vsub.s32 1, %v818
    %v820 = vrot.slane %v414, %v819
    %822 = vbcast.lane.b32.xlu0 %v820, 256
    %v823 = vpop.permute.xlu0 %822
    %v824 = vlaneseq
    %v825 = vshrl.u32 %v824, 7
    %v826 = vsub.s32 2, %v825
    %v827 = vrot.slane %v414, %v826
    %829 = vbcast.lane.b32.xlu0 %v827, 256
    %v830 = vpop.permute.xlu0 %829
    %v831 = vlaneseq
    %v832 = vshrl.u32 %v831, 7
    %v833 = vsub.s32 3, %v832
    %v834 = vrot.slane %v414, %v833
    %836 = vbcast.lane.b32.xlu0 %v834, 256
    %v837 = vpop.permute.xlu0 %836
    %v838 = vlaneseq
    %v839 = vshrl.u32 %v838, 7
    %v840 = vsub.s32 4, %v839
    %v841 = vrot.slane %v414, %v840
    %843 = vbcast.lane.b32.xlu0 %v841, 256
    %v844 = vpop.permute.xlu0 %843
    %v845 = vlaneseq
    %v846 = vshrl.u32 %v845, 7
    %v847 = vsub.s32 5, %v846
    %v848 = vrot.slane %v414, %v847
    %850 = vbcast.lane.b32.xlu0 %v848, 256
    %v851 = vpop.permute.xlu0 %850
    %v852 = vlaneseq
    %v853 = vshrl.u32 %v852, 7
    %v854 = vsub.s32 6, %v853
    %v855 = vrot.slane %v414, %v854
    %857 = vbcast.lane.b32.xlu0 %v855, 256
    %v858 = vpop.permute.xlu0 %857
    %v859 = vlaneseq
    %v860 = vshrl.u32 %v859, 7
    %v861 = vsub.s32 7, %v860
    %v862 = vrot.slane %v414, %v861
    %864 = vbcast.lane.b32.xlu0 %v862, 256
    %v865 = vpop.permute.xlu0 %864
    %v866 = vlaneseq
    %v867 = vshrl.u32 %v866, 7
    %v868 = vsub.s32 0, %v867
    %v869 = vrot.slane %v415, %v868
    %871 = vbcast.lane.b32.xlu0 %v869, 256
    %v872 = vpop.permute.xlu0 %871
    %v873 = vlaneseq
    %v874 = vshrl.u32 %v873, 7
    %v875 = vsub.s32 1, %v874
    %v876 = vrot.slane %v415, %v875
    %878 = vbcast.lane.b32.xlu0 %v876, 256
    %v879 = vpop.permute.xlu0 %878
    %v880 = vlaneseq
    %v881 = vshrl.u32 %v880, 7
    %v882 = vsub.s32 2, %v881
    %v883 = vrot.slane %v415, %v882
    %885 = vbcast.lane.b32.xlu0 %v883, 256
    %v886 = vpop.permute.xlu0 %885
    %v887 = vlaneseq
    %v888 = vshrl.u32 %v887, 7
    %v889 = vsub.s32 3, %v888
    %v890 = vrot.slane %v415, %v889
    %892 = vbcast.lane.b32.xlu0 %v890, 256
    %v893 = vpop.permute.xlu0 %892
    %v894 = vlaneseq
    %v895 = vshrl.u32 %v894, 7
    %v896 = vsub.s32 4, %v895
    %v897 = vrot.slane %v415, %v896
    %899 = vbcast.lane.b32.xlu0 %v897, 256
    %v900 = vpop.permute.xlu0 %899
    %v901 = vlaneseq
    %v902 = vshrl.u32 %v901, 7
    %v903 = vsub.s32 5, %v902
    %v904 = vrot.slane %v415, %v903
    %906 = vbcast.lane.b32.xlu0 %v904, 256
    %v907 = vpop.permute.xlu0 %906
    %v908 = vlaneseq
    %v909 = vshrl.u32 %v908, 7
    %v910 = vsub.s32 6, %v909
    %v911 = vrot.slane %v415, %v910
    %913 = vbcast.lane.b32.xlu0 %v911, 256
    %v914 = vpop.permute.xlu0 %913
    %v915 = vlaneseq
    %v916 = vshrl.u32 %v915, 7
    %v917 = vsub.s32 7, %v916
    %v918 = vrot.slane %v415, %v917
    %920 = vbcast.lane.b32.xlu0 %v918, 256
    %v921 = vpop.permute.xlu0 %920
    %v922 = vlaneseq
    %v923 = vshrl.u32 %v922, 7
    %v924 = vsub.s32 0, %v923
    %v925 = vrot.slane %v416, %v924
    %927 = vbcast.lane.b32.xlu0 %v925, 256
    %v928 = vpop.permute.xlu0 %927
    %v929 = vlaneseq
    %v930 = vshrl.u32 %v929, 7
    %v931 = vsub.s32 1, %v930
    %v932 = vrot.slane %v416, %v931
    %934 = vbcast.lane.b32.xlu0 %v932, 256
    %v935 = vpop.permute.xlu0 %934
    %v936 = vlaneseq
    %v937 = vshrl.u32 %v936, 7
    %v938 = vsub.s32 2, %v937
    %v939 = vrot.slane %v416, %v938
    %941 = vbcast.lane.b32.xlu0 %v939, 256
    %v942 = vpop.permute.xlu0 %941
    %v943 = vlaneseq
    %v944 = vshrl.u32 %v943, 7
    %v945 = vsub.s32 3, %v944
    %v946 = vrot.slane %v416, %v945
    %948 = vbcast.lane.b32.xlu0 %v946, 256
    %v949 = vpop.permute.xlu0 %948
    %v950 = vlaneseq
    %v951 = vshrl.u32 %v950, 7
    %v952 = vsub.s32 4, %v951
    %v953 = vrot.slane %v416, %v952
    %955 = vbcast.lane.b32.xlu0 %v953, 256
    %v956 = vpop.permute.xlu0 %955
    %v957 = vlaneseq
    %v958 = vshrl.u32 %v957, 7
    %v959 = vsub.s32 5, %v958
    %v960 = vrot.slane %v416, %v959
    %962 = vbcast.lane.b32.xlu0 %v960, 256
    %v963 = vpop.permute.xlu0 %962
    %v964 = vlaneseq
    %v965 = vshrl.u32 %v964, 7
    %v966 = vsub.s32 6, %v965
    %v967 = vrot.slane %v416, %v966
    %969 = vbcast.lane.b32.xlu0 %v967, 256
    %v970 = vpop.permute.xlu0 %969
    %v971 = vlaneseq
    %v972 = vshrl.u32 %v971, 7
    %v973 = vsub.s32 7, %v972
    %v974 = vrot.slane %v416, %v973
    %976 = vbcast.lane.b32.xlu0 %v974, 256
    %v977 = vpop.permute.xlu0 %976
    %v978 = vlaneseq
    %v979 = vshrl.u32 %v978, 7
    %v980 = vsub.s32 0, %v979
    %v981 = vrot.slane %v417, %v980
    %983 = vbcast.lane.b32.xlu0 %v981, 256
    %v984 = vpop.permute.xlu0 %983
    %v985 = vlaneseq
    %v986 = vshrl.u32 %v985, 7
    %v987 = vsub.s32 1, %v986
    %v988 = vrot.slane %v417, %v987
    %990 = vbcast.lane.b32.xlu0 %v988, 256
    %v991 = vpop.permute.xlu0 %990
    %v992 = vlaneseq
    %v993 = vshrl.u32 %v992, 7
    %v994 = vsub.s32 2, %v993
    %v995 = vrot.slane %v417, %v994
    %997 = vbcast.lane.b32.xlu0 %v995, 256
    %v998 = vpop.permute.xlu0 %997
    %v999 = vlaneseq
    %v1000 = vshrl.u32 %v999, 7
    %v1001 = vsub.s32 3, %v1000
    %v1002 = vrot.slane %v417, %v1001
    %1004 = vbcast.lane.b32.xlu0 %v1002, 256
    %v1005 = vpop.permute.xlu0 %1004
    %v1006 = vlaneseq
    %v1007 = vshrl.u32 %v1006, 7
    %v1008 = vsub.s32 4, %v1007
    %v1009 = vrot.slane %v417, %v1008
    %1011 = vbcast.lane.b32.xlu0 %v1009, 256
    %v1012 = vpop.permute.xlu0 %1011
    %v1013 = vlaneseq
    %v1014 = vshrl.u32 %v1013, 7
    %v1015 = vsub.s32 5, %v1014
    %v1016 = vrot.slane %v417, %v1015
    %1018 = vbcast.lane.b32.xlu0 %v1016, 256
    %v1019 = vpop.permute.xlu0 %1018
    %v1020 = vlaneseq
    %v1021 = vshrl.u32 %v1020, 7
    %v1022 = vsub.s32 6, %v1021
    %v1023 = vrot.slane %v417, %v1022
    %1025 = vbcast.lane.b32.xlu0 %v1023, 256
    %v1026 = vpop.permute.xlu0 %1025
    %v1027 = vlaneseq
    %v1028 = vshrl.u32 %v1027, 7
    %v1029 = vsub.s32 7, %v1028
    %v1030 = vrot.slane %v417, %v1029
    %1032 = vbcast.lane.b32.xlu0 %v1030, 256
    %v1033 = vpop.permute.xlu0 %1032
    %v1034 = vlaneseq
    %v1035 = vshrl.u32 %v1034, 7
    %v1036 = vsub.s32 0, %v1035
    %v1037 = vrot.slane %v418, %v1036
    %1039 = vbcast.lane.b32.xlu0 %v1037, 256
    %v1040 = vpop.permute.xlu0 %1039
    %v1041 = vlaneseq
    %v1042 = vshrl.u32 %v1041, 7
    %v1043 = vsub.s32 1, %v1042
    %v1044 = vrot.slane %v418, %v1043
    %1046 = vbcast.lane.b32.xlu0 %v1044, 256
    %v1047 = vpop.permute.xlu0 %1046
    %v1048 = vlaneseq
    %v1049 = vshrl.u32 %v1048, 7
    %v1050 = vsub.s32 2, %v1049
    %v1051 = vrot.slane %v418, %v1050
    %1053 = vbcast.lane.b32.xlu0 %v1051, 256
    %v1054 = vpop.permute.xlu0 %1053
    %v1055 = vlaneseq
    %v1056 = vshrl.u32 %v1055, 7
    %v1057 = vsub.s32 3, %v1056
    %v1058 = vrot.slane %v418, %v1057
    %1060 = vbcast.lane.b32.xlu0 %v1058, 256
    %v1061 = vpop.permute.xlu0 %1060
    %v1062 = vlaneseq
    %v1063 = vshrl.u32 %v1062, 7
    %v1064 = vsub.s32 4, %v1063
    %v1065 = vrot.slane %v418, %v1064
    %1067 = vbcast.lane.b32.xlu0 %v1065, 256
    %v1068 = vpop.permute.xlu0 %1067
    %v1069 = vlaneseq
    %v1070 = vshrl.u32 %v1069, 7
    %v1071 = vsub.s32 5, %v1070
    %v1072 = vrot.slane %v418, %v1071
    %1074 = vbcast.lane.b32.xlu0 %v1072, 256
    %v1075 = vpop.permute.xlu0 %1074
    %v1076 = vlaneseq
    %v1077 = vshrl.u32 %v1076, 7
    %v1078 = vsub.s32 6, %v1077
    %v1079 = vrot.slane %v418, %v1078
    %1081 = vbcast.lane.b32.xlu0 %v1079, 256
    %v1082 = vpop.permute.xlu0 %1081
    %v1083 = vlaneseq
    %v1084 = vshrl.u32 %v1083, 7
    %v1085 = vsub.s32 7, %v1084
    %v1086 = vrot.slane %v418, %v1085
    %1088 = vbcast.lane.b32.xlu0 %v1086, 256
    %v1089 = vpop.permute.xlu0 %1088
    %v1090 = vlaneseq
    %v1091 = vshrl.u32 %v1090, 7
    %v1092 = vsub.s32 0, %v1091
    %v1093 = vrot.slane %v419, %v1092
    %1095 = vbcast.lane.b32.xlu0 %v1093, 256
    %v1096 = vpop.permute.xlu0 %1095
    %v1097 = vlaneseq
    %v1098 = vshrl.u32 %v1097, 7
    %v1099 = vsub.s32 1, %v1098
    %v1100 = vrot.slane %v419, %v1099
    %1102 = vbcast.lane.b32.xlu0 %v1100, 256
    %v1103 = vpop.permute.xlu0 %1102
    %v1104 = vlaneseq
    %v1105 = vshrl.u32 %v1104, 7
    %v1106 = vsub.s32 2, %v1105
    %v1107 = vrot.slane %v419, %v1106
    %1109 = vbcast.lane.b32.xlu0 %v1107, 256
    %v1110 = vpop.permute.xlu0 %1109
    %v1111 = vlaneseq
    %v1112 = vshrl.u32 %v1111, 7
    %v1113 = vsub.s32 3, %v1112
    %v1114 = vrot.slane %v419, %v1113
    %1116 = vbcast.lane.b32.xlu0 %v1114, 256
    %v1117 = vpop.permute.xlu0 %1116
    %v1118 = vlaneseq
    %v1119 = vshrl.u32 %v1118, 7
    %v1120 = vsub.s32 4, %v1119
    %v1121 = vrot.slane %v419, %v1120
    %1123 = vbcast.lane.b32.xlu0 %v1121, 256
    %v1124 = vpop.permute.xlu0 %1123
    %v1125 = vlaneseq
    %v1126 = vshrl.u32 %v1125, 7
    %v1127 = vsub.s32 5, %v1126
    %v1128 = vrot.slane %v419, %v1127
    %1130 = vbcast.lane.b32.xlu0 %v1128, 256
    %v1131 = vpop.permute.xlu0 %1130
    %v1132 = vlaneseq
    %v1133 = vshrl.u32 %v1132, 7
    %v1134 = vsub.s32 6, %v1133
    %v1135 = vrot.slane %v419, %v1134
    %1137 = vbcast.lane.b32.xlu0 %v1135, 256
    %v1138 = vpop.permute.xlu0 %1137
    %v1139 = vlaneseq
    %v1140 = vshrl.u32 %v1139, 7
    %v1141 = vsub.s32 7, %v1140
    %v1142 = vrot.slane %v419, %v1141
    %1144 = vbcast.lane.b32.xlu0 %v1142, 256
    %v1145 = vpop.permute.xlu0 %1144
    %v1146 = vlaneseq
    %v1147 = vshrl.u32 %v1146, 7
    %v1148 = vsub.s32 0, %v1147
    %v1149 = vrot.slane %v420, %v1148
    %1151 = vbcast.lane.b32.xlu0 %v1149, 256
    %v1152 = vpop.permute.xlu0 %1151
    %v1153 = vlaneseq
    %v1154 = vshrl.u32 %v1153, 7
    %v1155 = vsub.s32 1, %v1154
    %v1156 = vrot.slane %v420, %v1155
    %1158 = vbcast.lane.b32.xlu0 %v1156, 256
    %v1159 = vpop.permute.xlu0 %1158
    %v1160 = vlaneseq
    %v1161 = vshrl.u32 %v1160, 7
    %v1162 = vsub.s32 2, %v1161
    %v1163 = vrot.slane %v420, %v1162
    %1165 = vbcast.lane.b32.xlu0 %v1163, 256
    %v1166 = vpop.permute.xlu0 %1165
    %v1167 = vlaneseq
    %v1168 = vshrl.u32 %v1167, 7
    %v1169 = vsub.s32 3, %v1168
    %v1170 = vrot.slane %v420, %v1169
    %1172 = vbcast.lane.b32.xlu0 %v1170, 256
    %v1173 = vpop.permute.xlu0 %1172
    %v1174 = vlaneseq
    %v1175 = vshrl.u32 %v1174, 7
    %v1176 = vsub.s32 4, %v1175
    %v1177 = vrot.slane %v420, %v1176
    %1179 = vbcast.lane.b32.xlu0 %v1177, 256
    %v1180 = vpop.permute.xlu0 %1179
    %v1181 = vlaneseq
    %v1182 = vshrl.u32 %v1181, 7
    %v1183 = vsub.s32 5, %v1182
    %v1184 = vrot.slane %v420, %v1183
    %1186 = vbcast.lane.b32.xlu0 %v1184, 256
    %v1187 = vpop.permute.xlu0 %1186
    %v1188 = vlaneseq
    %v1189 = vshrl.u32 %v1188, 7
    %v1190 = vsub.s32 6, %v1189
    %v1191 = vrot.slane %v420, %v1190
    %1193 = vbcast.lane.b32.xlu0 %v1191, 256
    %v1194 = vpop.permute.xlu0 %1193
    %v1195 = vlaneseq
    %v1196 = vshrl.u32 %v1195, 7
    %v1197 = vsub.s32 7, %v1196
    %v1198 = vrot.slane %v420, %v1197
    %1200 = vbcast.lane.b32.xlu0 %v1198, 256
    %v1201 = vpop.permute.xlu0 %1200
    %v1202 = vlaneseq
    %v1203 = vshrl.u32 %v1202, 7
    %v1204 = vsub.s32 0, %v1203
    %v1205 = vrot.slane %v421, %v1204
    %1207 = vbcast.lane.b32.xlu0 %v1205, 256
    %v1208 = vpop.permute.xlu0 %1207
    %v1209 = vlaneseq
    %v1210 = vshrl.u32 %v1209, 7
    %v1211 = vsub.s32 1, %v1210
    %v1212 = vrot.slane %v421, %v1211
    %1214 = vbcast.lane.b32.xlu0 %v1212, 256
    %v1215 = vpop.permute.xlu0 %1214
    %v1216 = vlaneseq
    %v1217 = vshrl.u32 %v1216, 7
    %v1218 = vsub.s32 2, %v1217
    %v1219 = vrot.slane %v421, %v1218
    %1221 = vbcast.lane.b32.xlu0 %v1219, 256
    %v1222 = vpop.permute.xlu0 %1221
    %v1223 = vlaneseq
    %v1224 = vshrl.u32 %v1223, 7
    %v1225 = vsub.s32 3, %v1224
    %v1226 = vrot.slane %v421, %v1225
    %1228 = vbcast.lane.b32.xlu0 %v1226, 256
    %v1229 = vpop.permute.xlu0 %1228
    %v1230 = vlaneseq
    %v1231 = vshrl.u32 %v1230, 7
    %v1232 = vsub.s32 4, %v1231
    %v1233 = vrot.slane %v421, %v1232
    %1235 = vbcast.lane.b32.xlu0 %v1233, 256
    %v1236 = vpop.permute.xlu0 %1235
    %v1237 = vlaneseq
    %v1238 = vshrl.u32 %v1237, 7
    %v1239 = vsub.s32 5, %v1238
    %v1240 = vrot.slane %v421, %v1239
    %1242 = vbcast.lane.b32.xlu0 %v1240, 256
    %v1243 = vpop.permute.xlu0 %1242
    %v1244 = vlaneseq
    %v1245 = vshrl.u32 %v1244, 7
    %v1246 = vsub.s32 6, %v1245
    %v1247 = vrot.slane %v421, %v1246
    %1249 = vbcast.lane.b32.xlu0 %v1247, 256
    %v1250 = vpop.permute.xlu0 %1249
    %v1251 = vlaneseq
    %v1252 = vshrl.u32 %v1251, 7
    %v1253 = vsub.s32 7, %v1252
    %v1254 = vrot.slane %v421, %v1253
    %1256 = vbcast.lane.b32.xlu0 %v1254, 256
    %v1257 = vpop.permute.xlu0 %1256
    %v1258 = vlaneseq
    %v1259 = vshrl.u32 %v1258, 7
    %v1260 = vsub.s32 0, %v1259
    %v1261 = vrot.slane %v422, %v1260
    %1263 = vbcast.lane.b32.xlu0 %v1261, 256
    %v1264 = vpop.permute.xlu0 %1263
    %v1265 = vlaneseq
    %v1266 = vshrl.u32 %v1265, 7
    %v1267 = vsub.s32 1, %v1266
    %v1268 = vrot.slane %v422, %v1267
    %1270 = vbcast.lane.b32.xlu0 %v1268, 256
    %v1271 = vpop.permute.xlu0 %1270
    %v1272 = vlaneseq
    %v1273 = vshrl.u32 %v1272, 7
    %v1274 = vsub.s32 2, %v1273
    %v1275 = vrot.slane %v422, %v1274
    %1277 = vbcast.lane.b32.xlu0 %v1275, 256
    %v1278 = vpop.permute.xlu0 %1277
    %v1279 = vlaneseq
    %v1280 = vshrl.u32 %v1279, 7
    %v1281 = vsub.s32 3, %v1280
    %v1282 = vrot.slane %v422, %v1281
    %1284 = vbcast.lane.b32.xlu0 %v1282, 256
    %v1285 = vpop.permute.xlu0 %1284
    %v1286 = vlaneseq
    %v1287 = vshrl.u32 %v1286, 7
    %v1288 = vsub.s32 4, %v1287
    %v1289 = vrot.slane %v422, %v1288
    %1291 = vbcast.lane.b32.xlu0 %v1289, 256
    %v1292 = vpop.permute.xlu0 %1291
    %v1293 = vlaneseq
    %v1294 = vshrl.u32 %v1293, 7
    %v1295 = vsub.s32 5, %v1294
    %v1296 = vrot.slane %v422, %v1295
    %1298 = vbcast.lane.b32.xlu0 %v1296, 256
    %v1299 = vpop.permute.xlu0 %1298
    %v1300 = vlaneseq
    %v1301 = vshrl.u32 %v1300, 7
    %v1302 = vsub.s32 6, %v1301
    %v1303 = vrot.slane %v422, %v1302
    %1305 = vbcast.lane.b32.xlu0 %v1303, 256
    %v1306 = vpop.permute.xlu0 %1305
    %v1307 = vlaneseq
    %v1308 = vshrl.u32 %v1307, 7
    %v1309 = vsub.s32 7, %v1308
    %v1310 = vrot.slane %v422, %v1309
    %1312 = vbcast.lane.b32.xlu0 %v1310, 256
    %v1313 = vpop.permute.xlu0 %1312
    %v1314 = vlaneseq
    %v1315 = vshrl.u32 %v1314, 7
    %v1316 = vsub.s32 0, %v1315
    %v1317 = vrot.slane %v423, %v1316
    %1319 = vbcast.lane.b32.xlu0 %v1317, 256
    %v1320 = vpop.permute.xlu0 %1319
    %v1321 = vlaneseq
    %v1322 = vshrl.u32 %v1321, 7
    %v1323 = vsub.s32 1, %v1322
    %v1324 = vrot.slane %v423, %v1323
    %1326 = vbcast.lane.b32.xlu0 %v1324, 256
    %v1327 = vpop.permute.xlu0 %1326
    %v1328 = vlaneseq
    %v1329 = vshrl.u32 %v1328, 7
    %v1330 = vsub.s32 2, %v1329
    %v1331 = vrot.slane %v423, %v1330
    %1333 = vbcast.lane.b32.xlu0 %v1331, 256
    %v1334 = vpop.permute.xlu0 %1333
    %v1335 = vlaneseq
    %v1336 = vshrl.u32 %v1335, 7
    %v1337 = vsub.s32 3, %v1336
    %v1338 = vrot.slane %v423, %v1337
    %1340 = vbcast.lane.b32.xlu0 %v1338, 256
    %v1341 = vpop.permute.xlu0 %1340
    %v1342 = vlaneseq
    %v1343 = vshrl.u32 %v1342, 7
    %v1344 = vsub.s32 4, %v1343
    %v1345 = vrot.slane %v423, %v1344
    %1347 = vbcast.lane.b32.xlu0 %v1345, 256
    %v1348 = vpop.permute.xlu0 %1347
    %v1349 = vlaneseq
    %v1350 = vshrl.u32 %v1349, 7
    %v1351 = vsub.s32 5, %v1350
    %v1352 = vrot.slane %v423, %v1351
    %1354 = vbcast.lane.b32.xlu0 %v1352, 256
    %v1355 = vpop.permute.xlu0 %1354
    %v1356 = vlaneseq
    %v1357 = vshrl.u32 %v1356, 7
    %v1358 = vsub.s32 6, %v1357
    %v1359 = vrot.slane %v423, %v1358
    %1361 = vbcast.lane.b32.xlu0 %v1359, 256
    %v1362 = vpop.permute.xlu0 %1361
    %v1363 = vlaneseq
    %v1364 = vshrl.u32 %v1363, 7
    %v1365 = vsub.s32 7, %v1364
    %v1366 = vrot.slane %v423, %v1365
    %1368 = vbcast.lane.b32.xlu0 %v1366, 256
    %v1369 = vpop.permute.xlu0 %1368
    %v1371 = vlaneseq
    %v1372 = vshrl.u32 %v1371, 7
    %v1373 = vsub.s32 0, %v1372
    %v1374 = vrot.slane %v472, %v1373
    %v1376 = vmul.f32 %v480, %v1374
    %v1377 = vmul.f32 %v487, %v1374
    %v1378 = vmul.f32 %v494, %v1374
    %v1379 = vmul.f32 %v501, %v1374
    %v1380 = vmul.f32 %v508, %v1374
    %v1381 = vmul.f32 %v515, %v1374
    %v1382 = vmul.f32 %v522, %v1374
    %v1383 = vmul.f32 %v529, %v1374
    %v1384 = vmul.f32 %v536, %v1374
    %v1385 = vmul.f32 %v543, %v1374
    %v1386 = vmul.f32 %v550, %v1374
    %v1387 = vmul.f32 %v557, %v1374
    %v1388 = vmul.f32 %v564, %v1374
    %v1389 = vmul.f32 %v571, %v1374
    %v1390 = vmul.f32 %v578, %v1374
    %v1391 = vmul.f32 %v585, %v1374
    %v1392 = vmul.f32 %v592, %v1374
    %v1393 = vmul.f32 %v599, %v1374
    %v1394 = vmul.f32 %v606, %v1374
    %v1395 = vmul.f32 %v613, %v1374
    %v1396 = vmul.f32 %v620, %v1374
    %v1397 = vmul.f32 %v627, %v1374
    %v1398 = vmul.f32 %v634, %v1374
    %v1399 = vmul.f32 %v641, %v1374
    %v1400 = vmul.f32 %v648, %v1374
    %v1401 = vmul.f32 %v655, %v1374
    %v1402 = vmul.f32 %v662, %v1374
    %v1403 = vmul.f32 %v669, %v1374
    %v1404 = vmul.f32 %v676, %v1374
    %v1405 = vmul.f32 %v683, %v1374
    %v1406 = vmul.f32 %v690, %v1374
    %v1407 = vmul.f32 %v697, %v1374
    %v1408 = vmul.f32 %v704, %v1374
    %v1409 = vmul.f32 %v711, %v1374
    %v1410 = vmul.f32 %v718, %v1374
    %v1411 = vmul.f32 %v725, %v1374
    %v1412 = vmul.f32 %v732, %v1374
    %v1413 = vmul.f32 %v739, %v1374
    %v1414 = vmul.f32 %v746, %v1374
    %v1415 = vmul.f32 %v753, %v1374
    %v1416 = vmul.f32 %v760, %v1374
    %v1417 = vmul.f32 %v767, %v1374
    %v1418 = vmul.f32 %v774, %v1374
    %v1419 = vmul.f32 %v781, %v1374
    %v1420 = vmul.f32 %v788, %v1374
    %v1421 = vmul.f32 %v795, %v1374
    %v1422 = vmul.f32 %v802, %v1374
    %v1423 = vmul.f32 %v809, %v1374
    %v1424 = vmul.f32 %v816, %v1374
    %v1425 = vmul.f32 %v823, %v1374
    %v1426 = vmul.f32 %v830, %v1374
    %v1427 = vmul.f32 %v837, %v1374
    %v1428 = vmul.f32 %v844, %v1374
    %v1429 = vmul.f32 %v851, %v1374
    %v1430 = vmul.f32 %v858, %v1374
    %v1431 = vmul.f32 %v865, %v1374
    %v1432 = vmul.f32 %v872, %v1374
    %v1433 = vmul.f32 %v879, %v1374
    %v1434 = vmul.f32 %v886, %v1374
    %v1435 = vmul.f32 %v893, %v1374
    %v1436 = vmul.f32 %v900, %v1374
    %v1437 = vmul.f32 %v907, %v1374
    %v1438 = vmul.f32 %v914, %v1374
    %v1439 = vmul.f32 %v921, %v1374
    %v1440 = vmul.f32 %v928, %v1374
    %v1441 = vmul.f32 %v935, %v1374
    %v1442 = vmul.f32 %v942, %v1374
    %v1443 = vmul.f32 %v949, %v1374
    %v1444 = vmul.f32 %v956, %v1374
    %v1445 = vmul.f32 %v963, %v1374
    %v1446 = vmul.f32 %v970, %v1374
    %v1447 = vmul.f32 %v977, %v1374
    %v1448 = vmul.f32 %v984, %v1374
    %v1449 = vmul.f32 %v991, %v1374
    %v1450 = vmul.f32 %v998, %v1374
    %v1451 = vmul.f32 %v1005, %v1374
    %v1452 = vmul.f32 %v1012, %v1374
    %v1453 = vmul.f32 %v1019, %v1374
    %v1454 = vmul.f32 %v1026, %v1374
    %v1455 = vmul.f32 %v1033, %v1374
    %v1456 = vmul.f32 %v1040, %v1374
    %v1457 = vmul.f32 %v1047, %v1374
    %v1458 = vmul.f32 %v1054, %v1374
    %v1459 = vmul.f32 %v1061, %v1374
    %v1460 = vmul.f32 %v1068, %v1374
    %v1461 = vmul.f32 %v1075, %v1374
    %v1462 = vmul.f32 %v1082, %v1374
    %v1463 = vmul.f32 %v1089, %v1374
    %v1464 = vmul.f32 %v1096, %v1374
    %v1465 = vmul.f32 %v1103, %v1374
    %v1466 = vmul.f32 %v1110, %v1374
    %v1467 = vmul.f32 %v1117, %v1374
    %v1468 = vmul.f32 %v1124, %v1374
    %v1469 = vmul.f32 %v1131, %v1374
    %v1470 = vmul.f32 %v1138, %v1374
    %v1471 = vmul.f32 %v1145, %v1374
    %v1472 = vmul.f32 %v1152, %v1374
    %v1473 = vmul.f32 %v1159, %v1374
    %v1474 = vmul.f32 %v1166, %v1374
    %v1475 = vmul.f32 %v1173, %v1374
    %v1476 = vmul.f32 %v1180, %v1374
    %v1477 = vmul.f32 %v1187, %v1374
    %v1478 = vmul.f32 %v1194, %v1374
    %v1479 = vmul.f32 %v1201, %v1374
    %v1480 = vmul.f32 %v1208, %v1374
    %v1481 = vmul.f32 %v1215, %v1374
    %v1482 = vmul.f32 %v1222, %v1374
    %v1483 = vmul.f32 %v1229, %v1374
    %v1484 = vmul.f32 %v1236, %v1374
    %v1485 = vmul.f32 %v1243, %v1374
    %v1486 = vmul.f32 %v1250, %v1374
    %v1487 = vmul.f32 %v1257, %v1374
    %v1488 = vmul.f32 %v1264, %v1374
    %v1489 = vmul.f32 %v1271, %v1374
    %v1490 = vmul.f32 %v1278, %v1374
    %v1491 = vmul.f32 %v1285, %v1374
    %v1492 = vmul.f32 %v1292, %v1374
    %v1493 = vmul.f32 %v1299, %v1374
    %v1494 = vmul.f32 %v1306, %v1374
    %v1495 = vmul.f32 %v1313, %v1374
    %v1496 = vmul.f32 %v1320, %v1374
    %v1497 = vmul.f32 %v1327, %v1374
    %v1498 = vmul.f32 %v1334, %v1374
    %v1499 = vmul.f32 %v1341, %v1374
    %v1500 = vmul.f32 %v1348, %v1374
    %v1501 = vmul.f32 %v1355, %v1374
    %v1502 = vmul.f32 %v1362, %v1374
    %v1503 = vmul.f32 %v1369, %v1374
    %v1505 = vlaneseq
    %v1506 = vshrl.u32 %v1505, 7
    %v1507 = vsub.s32 0, %v1506
    %v1508 = vrot.slane %v473, %v1507
    %v1510 = vsub.f32 %v1376, %v1508
    %v1511 = vsub.f32 %v1377, %v1508
    %v1512 = vsub.f32 %v1378, %v1508
    %v1513 = vsub.f32 %v1379, %v1508
    %v1514 = vsub.f32 %v1380, %v1508
    %v1515 = vsub.f32 %v1381, %v1508
    %v1516 = vsub.f32 %v1382, %v1508
    %v1517 = vsub.f32 %v1383, %v1508
    %v1518 = vsub.f32 %v1384, %v1508
    %v1519 = vsub.f32 %v1385, %v1508
    %v1520 = vsub.f32 %v1386, %v1508
    %v1521 = vsub.f32 %v1387, %v1508
    %v1522 = vsub.f32 %v1388, %v1508
    %v1523 = vsub.f32 %v1389, %v1508
    %v1524 = vsub.f32 %v1390, %v1508
    %v1525 = vsub.f32 %v1391, %v1508
    %v1526 = vsub.f32 %v1392, %v1508
    %v1527 = vsub.f32 %v1393, %v1508
    %v1528 = vsub.f32 %v1394, %v1508
    %v1529 = vsub.f32 %v1395, %v1508
    %v1530 = vsub.f32 %v1396, %v1508
    %v1531 = vsub.f32 %v1397, %v1508
    %v1532 = vsub.f32 %v1398, %v1508
    %v1533 = vsub.f32 %v1399, %v1508
    %v1534 = vsub.f32 %v1400, %v1508
    %v1535 = vsub.f32 %v1401, %v1508
    %v1536 = vsub.f32 %v1402, %v1508
    %v1537 = vsub.f32 %v1403, %v1508
    %v1538 = vsub.f32 %v1404, %v1508
    %v1539 = vsub.f32 %v1405, %v1508
    %v1540 = vsub.f32 %v1406, %v1508
    %v1541 = vsub.f32 %v1407, %v1508
    %v1542 = vsub.f32 %v1408, %v1508
    %v1543 = vsub.f32 %v1409, %v1508
    %v1544 = vsub.f32 %v1410, %v1508
    %v1545 = vsub.f32 %v1411, %v1508
    %v1546 = vsub.f32 %v1412, %v1508
    %v1547 = vsub.f32 %v1413, %v1508
    %v1548 = vsub.f32 %v1414, %v1508
    %v1549 = vsub.f32 %v1415, %v1508
    %v1550 = vsub.f32 %v1416, %v1508
    %v1551 = vsub.f32 %v1417, %v1508
    %v1552 = vsub.f32 %v1418, %v1508
    %v1553 = vsub.f32 %v1419, %v1508
    %v1554 = vsub.f32 %v1420, %v1508
    %v1555 = vsub.f32 %v1421, %v1508
    %v1556 = vsub.f32 %v1422, %v1508
    %v1557 = vsub.f32 %v1423, %v1508
    %v1558 = vsub.f32 %v1424, %v1508
    %v1559 = vsub.f32 %v1425, %v1508
    %v1560 = vsub.f32 %v1426, %v1508
    %v1561 = vsub.f32 %v1427, %v1508
    %v1562 = vsub.f32 %v1428, %v1508
    %v1563 = vsub.f32 %v1429, %v1508
    %v1564 = vsub.f32 %v1430, %v1508
    %v1565 = vsub.f32 %v1431, %v1508
    %v1566 = vsub.f32 %v1432, %v1508
    %v1567 = vsub.f32 %v1433, %v1508
    %v1568 = vsub.f32 %v1434, %v1508
    %v1569 = vsub.f32 %v1435, %v1508
    %v1570 = vsub.f32 %v1436, %v1508
    %v1571 = vsub.f32 %v1437, %v1508
    %v1572 = vsub.f32 %v1438, %v1508
    %v1573 = vsub.f32 %v1439, %v1508
    %v1574 = vsub.f32 %v1440, %v1508
    %v1575 = vsub.f32 %v1441, %v1508
    %v1576 = vsub.f32 %v1442, %v1508
    %v1577 = vsub.f32 %v1443, %v1508
    %v1578 = vsub.f32 %v1444, %v1508
    %v1579 = vsub.f32 %v1445, %v1508
    %v1580 = vsub.f32 %v1446, %v1508
    %v1581 = vsub.f32 %v1447, %v1508
    %v1582 = vsub.f32 %v1448, %v1508
    %v1583 = vsub.f32 %v1449, %v1508
    %v1584 = vsub.f32 %v1450, %v1508
    %v1585 = vsub.f32 %v1451, %v1508
    %v1586 = vsub.f32 %v1452, %v1508
    %v1587 = vsub.f32 %v1453, %v1508
    %v1588 = vsub.f32 %v1454, %v1508
    %v1589 = vsub.f32 %v1455, %v1508
    %v1590 = vsub.f32 %v1456, %v1508
    %v1591 = vsub.f32 %v1457, %v1508
    %v1592 = vsub.f32 %v1458, %v1508
    %v1593 = vsub.f32 %v1459, %v1508
    %v1594 = vsub.f32 %v1460, %v1508
    %v1595 = vsub.f32 %v1461, %v1508
    %v1596 = vsub.f32 %v1462, %v1508
    %v1597 = vsub.f32 %v1463, %v1508
    %v1598 = vsub.f32 %v1464, %v1508
    %v1599 = vsub.f32 %v1465, %v1508
    %v1600 = vsub.f32 %v1466, %v1508
    %v1601 = vsub.f32 %v1467, %v1508
    %v1602 = vsub.f32 %v1468, %v1508
    %v1603 = vsub.f32 %v1469, %v1508
    %v1604 = vsub.f32 %v1470, %v1508
    %v1605 = vsub.f32 %v1471, %v1508
    %v1606 = vsub.f32 %v1472, %v1508
    %v1607 = vsub.f32 %v1473, %v1508
    %v1608 = vsub.f32 %v1474, %v1508
    %v1609 = vsub.f32 %v1475, %v1508
    %v1610 = vsub.f32 %v1476, %v1508
    %v1611 = vsub.f32 %v1477, %v1508
    %v1612 = vsub.f32 %v1478, %v1508
    %v1613 = vsub.f32 %v1479, %v1508
    %v1614 = vsub.f32 %v1480, %v1508
    %v1615 = vsub.f32 %v1481, %v1508
    %v1616 = vsub.f32 %v1482, %v1508
    %v1617 = vsub.f32 %v1483, %v1508
    %v1618 = vsub.f32 %v1484, %v1508
    %v1619 = vsub.f32 %v1485, %v1508
    %v1620 = vsub.f32 %v1486, %v1508
    %v1621 = vsub.f32 %v1487, %v1508
    %v1622 = vsub.f32 %v1488, %v1508
    %v1623 = vsub.f32 %v1489, %v1508
    %v1624 = vsub.f32 %v1490, %v1508
    %v1625 = vsub.f32 %v1491, %v1508
    %v1626 = vsub.f32 %v1492, %v1508
    %v1627 = vsub.f32 %v1493, %v1508
    %v1628 = vsub.f32 %v1494, %v1508
    %v1629 = vsub.f32 %v1495, %v1508
    %v1630 = vsub.f32 %v1496, %v1508
    %v1631 = vsub.f32 %v1497, %v1508
    %v1632 = vsub.f32 %v1498, %v1508
    %v1633 = vsub.f32 %v1499, %v1508
    %v1634 = vsub.f32 %v1500, %v1508
    %v1635 = vsub.f32 %v1501, %v1508
    %v1636 = vsub.f32 %v1502, %v1508
    %v1637 = vsub.f32 %v1503, %v1508
    %v1638 = vmax.f32 %v1510, 0.0
    %v1639 = vmax.f32 %v1511, 0.0
    %v1640 = vmax.f32 %v1512, 0.0
    %v1641 = vmax.f32 %v1513, 0.0
    %v1642 = vmax.f32 %v1514, 0.0
    %v1643 = vmax.f32 %v1515, 0.0
    %v1644 = vmax.f32 %v1516, 0.0
    %v1645 = vmax.f32 %v1517, 0.0
    %v1646 = vmax.f32 %v1518, 0.0
    %v1647 = vmax.f32 %v1519, 0.0
    %v1648 = vmax.f32 %v1520, 0.0
    %v1649 = vmax.f32 %v1521, 0.0
    %v1650 = vmax.f32 %v1522, 0.0
    %v1651 = vmax.f32 %v1523, 0.0
    %v1652 = vmax.f32 %v1524, 0.0
    %v1653 = vmax.f32 %v1525, 0.0
    %v1654 = vmax.f32 %v1526, 0.0
    %v1655 = vmax.f32 %v1527, 0.0
    %v1656 = vmax.f32 %v1528, 0.0
    %v1657 = vmax.f32 %v1529, 0.0
    %v1658 = vmax.f32 %v1530, 0.0
    %v1659 = vmax.f32 %v1531, 0.0
    %v1660 = vmax.f32 %v1532, 0.0
    %v1661 = vmax.f32 %v1533, 0.0
    %v1662 = vmax.f32 %v1534, 0.0
    %v1663 = vmax.f32 %v1535, 0.0
    %v1664 = vmax.f32 %v1536, 0.0
    %v1665 = vmax.f32 %v1537, 0.0
    %v1666 = vmax.f32 %v1538, 0.0
    %v1667 = vmax.f32 %v1539, 0.0
    %v1668 = vmax.f32 %v1540, 0.0
    %v1669 = vmax.f32 %v1541, 0.0
    %v1670 = vmax.f32 %v1542, 0.0
    %v1671 = vmax.f32 %v1543, 0.0
    %v1672 = vmax.f32 %v1544, 0.0
    %v1673 = vmax.f32 %v1545, 0.0
    %v1674 = vmax.f32 %v1546, 0.0
    %v1675 = vmax.f32 %v1547, 0.0
    %v1676 = vmax.f32 %v1548, 0.0
    %v1677 = vmax.f32 %v1549, 0.0
    %v1678 = vmax.f32 %v1550, 0.0
    %v1679 = vmax.f32 %v1551, 0.0
    %v1680 = vmax.f32 %v1552, 0.0
    %v1681 = vmax.f32 %v1553, 0.0
    %v1682 = vmax.f32 %v1554, 0.0
    %v1683 = vmax.f32 %v1555, 0.0
    %v1684 = vmax.f32 %v1556, 0.0
    %v1685 = vmax.f32 %v1557, 0.0
    %v1686 = vmax.f32 %v1558, 0.0
    %v1687 = vmax.f32 %v1559, 0.0
    %v1688 = vmax.f32 %v1560, 0.0
    %v1689 = vmax.f32 %v1561, 0.0
    %v1690 = vmax.f32 %v1562, 0.0
    %v1691 = vmax.f32 %v1563, 0.0
    %v1692 = vmax.f32 %v1564, 0.0
    %v1693 = vmax.f32 %v1565, 0.0
    %v1694 = vmax.f32 %v1566, 0.0
    %v1695 = vmax.f32 %v1567, 0.0
    %v1696 = vmax.f32 %v1568, 0.0
    %v1697 = vmax.f32 %v1569, 0.0
    %v1698 = vmax.f32 %v1570, 0.0
    %v1699 = vmax.f32 %v1571, 0.0
    %v1700 = vmax.f32 %v1572, 0.0
    %v1701 = vmax.f32 %v1573, 0.0
    %v1702 = vmax.f32 %v1574, 0.0
    %v1703 = vmax.f32 %v1575, 0.0
    %v1704 = vmax.f32 %v1576, 0.0
    %v1705 = vmax.f32 %v1577, 0.0
    %v1706 = vmax.f32 %v1578, 0.0
    %v1707 = vmax.f32 %v1579, 0.0
    %v1708 = vmax.f32 %v1580, 0.0
    %v1709 = vmax.f32 %v1581, 0.0
    %v1710 = vmax.f32 %v1582, 0.0
    %v1711 = vmax.f32 %v1583, 0.0
    %v1712 = vmax.f32 %v1584, 0.0
    %v1713 = vmax.f32 %v1585, 0.0
    %v1714 = vmax.f32 %v1586, 0.0
    %v1715 = vmax.f32 %v1587, 0.0
    %v1716 = vmax.f32 %v1588, 0.0
    %v1717 = vmax.f32 %v1589, 0.0
    %v1718 = vmax.f32 %v1590, 0.0
    %v1719 = vmax.f32 %v1591, 0.0
    %v1720 = vmax.f32 %v1592, 0.0
    %v1721 = vmax.f32 %v1593, 0.0
    %v1722 = vmax.f32 %v1594, 0.0
    %v1723 = vmax.f32 %v1595, 0.0
    %v1724 = vmax.f32 %v1596, 0.0
    %v1725 = vmax.f32 %v1597, 0.0
    %v1726 = vmax.f32 %v1598, 0.0
    %v1727 = vmax.f32 %v1599, 0.0
    %v1728 = vmax.f32 %v1600, 0.0
    %v1729 = vmax.f32 %v1601, 0.0
    %v1730 = vmax.f32 %v1602, 0.0
    %v1731 = vmax.f32 %v1603, 0.0
    %v1732 = vmax.f32 %v1604, 0.0
    %v1733 = vmax.f32 %v1605, 0.0
    %v1734 = vmax.f32 %v1606, 0.0
    %v1735 = vmax.f32 %v1607, 0.0
    %v1736 = vmax.f32 %v1608, 0.0
    %v1737 = vmax.f32 %v1609, 0.0
    %v1738 = vmax.f32 %v1610, 0.0
    %v1739 = vmax.f32 %v1611, 0.0
    %v1740 = vmax.f32 %v1612, 0.0
    %v1741 = vmax.f32 %v1613, 0.0
    %v1742 = vmax.f32 %v1614, 0.0
    %v1743 = vmax.f32 %v1615, 0.0
    %v1744 = vmax.f32 %v1616, 0.0
    %v1745 = vmax.f32 %v1617, 0.0
    %v1746 = vmax.f32 %v1618, 0.0
    %v1747 = vmax.f32 %v1619, 0.0
    %v1748 = vmax.f32 %v1620, 0.0
    %v1749 = vmax.f32 %v1621, 0.0
    %v1750 = vmax.f32 %v1622, 0.0
    %v1751 = vmax.f32 %v1623, 0.0
    %v1752 = vmax.f32 %v1624, 0.0
    %v1753 = vmax.f32 %v1625, 0.0
    %v1754 = vmax.f32 %v1626, 0.0
    %v1755 = vmax.f32 %v1627, 0.0
    %v1756 = vmax.f32 %v1628, 0.0
    %v1757 = vmax.f32 %v1629, 0.0
    %v1758 = vmax.f32 %v1630, 0.0
    %v1759 = vmax.f32 %v1631, 0.0
    %v1760 = vmax.f32 %v1632, 0.0
    %v1761 = vmax.f32 %v1633, 0.0
    %v1762 = vmax.f32 %v1634, 0.0
    %v1763 = vmax.f32 %v1635, 0.0
    %v1764 = vmax.f32 %v1636, 0.0
    %v1765 = vmax.f32 %v1637, 0.0
    %v1766 = vrot.slane %v1638, 4
    %v1767 = vadd.f32 %v1638, %v1766
    %v1768 = vrot.slane %v1767, 2
    %v1769 = vadd.f32 %v1767, %v1768
    %v1770 = vrot.slane %v1769, 1
    %v1771 = vadd.f32 %v1769, %v1770
    %v1772 = vrot.slane %v1639, 4
    %v1773 = vadd.f32 %v1639, %v1772
    %v1774 = vrot.slane %v1773, 2
    %v1775 = vadd.f32 %v1773, %v1774
    %v1776 = vrot.slane %v1775, 1
    %v1777 = vadd.f32 %v1775, %v1776
    %v1778 = vrot.slane %v1640, 4
    %v1779 = vadd.f32 %v1640, %v1778
    %v1780 = vrot.slane %v1779, 2
    %v1781 = vadd.f32 %v1779, %v1780
    %v1782 = vrot.slane %v1781, 1
    %v1783 = vadd.f32 %v1781, %v1782
    %v1784 = vrot.slane %v1641, 4
    %v1785 = vadd.f32 %v1641, %v1784
    %v1786 = vrot.slane %v1785, 2
    %v1787 = vadd.f32 %v1785, %v1786
    %v1788 = vrot.slane %v1787, 1
    %v1789 = vadd.f32 %v1787, %v1788
    %v1790 = vrot.slane %v1642, 4
    %v1791 = vadd.f32 %v1642, %v1790
    %v1792 = vrot.slane %v1791, 2
    %v1793 = vadd.f32 %v1791, %v1792
    %v1794 = vrot.slane %v1793, 1
    %v1795 = vadd.f32 %v1793, %v1794
    %v1796 = vrot.slane %v1643, 4
    %v1797 = vadd.f32 %v1643, %v1796
    %v1798 = vrot.slane %v1797, 2
    %v1799 = vadd.f32 %v1797, %v1798
    %v1800 = vrot.slane %v1799, 1
    %v1801 = vadd.f32 %v1799, %v1800
    %v1802 = vrot.slane %v1644, 4
    %v1803 = vadd.f32 %v1644, %v1802
    %v1804 = vrot.slane %v1803, 2
    %v1805 = vadd.f32 %v1803, %v1804
    %v1806 = vrot.slane %v1805, 1
    %v1807 = vadd.f32 %v1805, %v1806
    %v1808 = vrot.slane %v1645, 4
    %v1809 = vadd.f32 %v1645, %v1808
    %v1810 = vrot.slane %v1809, 2
    %v1811 = vadd.f32 %v1809, %v1810
    %v1812 = vrot.slane %v1811, 1
    %v1813 = vadd.f32 %v1811, %v1812
    %v1814 = vrot.slane %v1646, 4
    %v1815 = vadd.f32 %v1646, %v1814
    %v1816 = vrot.slane %v1815, 2
    %v1817 = vadd.f32 %v1815, %v1816
    %v1818 = vrot.slane %v1817, 1
    %v1819 = vadd.f32 %v1817, %v1818
    %v1820 = vrot.slane %v1647, 4
    %v1821 = vadd.f32 %v1647, %v1820
    %v1822 = vrot.slane %v1821, 2
    %v1823 = vadd.f32 %v1821, %v1822
    %v1824 = vrot.slane %v1823, 1
    %v1825 = vadd.f32 %v1823, %v1824
    %v1826 = vrot.slane %v1648, 4
    %v1827 = vadd.f32 %v1648, %v1826
    %v1828 = vrot.slane %v1827, 2
    %v1829 = vadd.f32 %v1827, %v1828
    %v1830 = vrot.slane %v1829, 1
    %v1831 = vadd.f32 %v1829, %v1830
    %v1832 = vrot.slane %v1649, 4
    %v1833 = vadd.f32 %v1649, %v1832
    %v1834 = vrot.slane %v1833, 2
    %v1835 = vadd.f32 %v1833, %v1834
    %v1836 = vrot.slane %v1835, 1
    %v1837 = vadd.f32 %v1835, %v1836
    %v1838 = vrot.slane %v1650, 4
    %v1839 = vadd.f32 %v1650, %v1838
    %v1840 = vrot.slane %v1839, 2
    %v1841 = vadd.f32 %v1839, %v1840
    %v1842 = vrot.slane %v1841, 1
    %v1843 = vadd.f32 %v1841, %v1842
    %v1844 = vrot.slane %v1651, 4
    %v1845 = vadd.f32 %v1651, %v1844
    %v1846 = vrot.slane %v1845, 2
    %v1847 = vadd.f32 %v1845, %v1846
    %v1848 = vrot.slane %v1847, 1
    %v1849 = vadd.f32 %v1847, %v1848
    %v1850 = vrot.slane %v1652, 4
    %v1851 = vadd.f32 %v1652, %v1850
    %v1852 = vrot.slane %v1851, 2
    %v1853 = vadd.f32 %v1851, %v1852
    %v1854 = vrot.slane %v1853, 1
    %v1855 = vadd.f32 %v1853, %v1854
    %v1856 = vrot.slane %v1653, 4
    %v1857 = vadd.f32 %v1653, %v1856
    %v1858 = vrot.slane %v1857, 2
    %v1859 = vadd.f32 %v1857, %v1858
    %v1860 = vrot.slane %v1859, 1
    %v1861 = vadd.f32 %v1859, %v1860
    %v1862 = vrot.slane %v1654, 4
    %v1863 = vadd.f32 %v1654, %v1862
    %v1864 = vrot.slane %v1863, 2
    %v1865 = vadd.f32 %v1863, %v1864
    %v1866 = vrot.slane %v1865, 1
    %v1867 = vadd.f32 %v1865, %v1866
    %v1868 = vrot.slane %v1655, 4
    %v1869 = vadd.f32 %v1655, %v1868
    %v1870 = vrot.slane %v1869, 2
    %v1871 = vadd.f32 %v1869, %v1870
    %v1872 = vrot.slane %v1871, 1
    %v1873 = vadd.f32 %v1871, %v1872
    %v1874 = vrot.slane %v1656, 4
    %v1875 = vadd.f32 %v1656, %v1874
    %v1876 = vrot.slane %v1875, 2
    %v1877 = vadd.f32 %v1875, %v1876
    %v1878 = vrot.slane %v1877, 1
    %v1879 = vadd.f32 %v1877, %v1878
    %v1880 = vrot.slane %v1657, 4
    %v1881 = vadd.f32 %v1657, %v1880
    %v1882 = vrot.slane %v1881, 2
    %v1883 = vadd.f32 %v1881, %v1882
    %v1884 = vrot.slane %v1883, 1
    %v1885 = vadd.f32 %v1883, %v1884
    %v1886 = vrot.slane %v1658, 4
    %v1887 = vadd.f32 %v1658, %v1886
    %v1888 = vrot.slane %v1887, 2
    %v1889 = vadd.f32 %v1887, %v1888
    %v1890 = vrot.slane %v1889, 1
    %v1891 = vadd.f32 %v1889, %v1890
    %v1892 = vrot.slane %v1659, 4
    %v1893 = vadd.f32 %v1659, %v1892
    %v1894 = vrot.slane %v1893, 2
    %v1895 = vadd.f32 %v1893, %v1894
    %v1896 = vrot.slane %v1895, 1
    %v1897 = vadd.f32 %v1895, %v1896
    %v1898 = vrot.slane %v1660, 4
    %v1899 = vadd.f32 %v1660, %v1898
    %v1900 = vrot.slane %v1899, 2
    %v1901 = vadd.f32 %v1899, %v1900
    %v1902 = vrot.slane %v1901, 1
    %v1903 = vadd.f32 %v1901, %v1902
    %v1904 = vrot.slane %v1661, 4
    %v1905 = vadd.f32 %v1661, %v1904
    %v1906 = vrot.slane %v1905, 2
    %v1907 = vadd.f32 %v1905, %v1906
    %v1908 = vrot.slane %v1907, 1
    %v1909 = vadd.f32 %v1907, %v1908
    %v1910 = vrot.slane %v1662, 4
    %v1911 = vadd.f32 %v1662, %v1910
    %v1912 = vrot.slane %v1911, 2
    %v1913 = vadd.f32 %v1911, %v1912
    %v1914 = vrot.slane %v1913, 1
    %v1915 = vadd.f32 %v1913, %v1914
    %v1916 = vrot.slane %v1663, 4
    %v1917 = vadd.f32 %v1663, %v1916
    %v1918 = vrot.slane %v1917, 2
    %v1919 = vadd.f32 %v1917, %v1918
    %v1920 = vrot.slane %v1919, 1
    %v1921 = vadd.f32 %v1919, %v1920
    %v1922 = vrot.slane %v1664, 4
    %v1923 = vadd.f32 %v1664, %v1922
    %v1924 = vrot.slane %v1923, 2
    %v1925 = vadd.f32 %v1923, %v1924
    %v1926 = vrot.slane %v1925, 1
    %v1927 = vadd.f32 %v1925, %v1926
    %v1928 = vrot.slane %v1665, 4
    %v1929 = vadd.f32 %v1665, %v1928
    %v1930 = vrot.slane %v1929, 2
    %v1931 = vadd.f32 %v1929, %v1930
    %v1932 = vrot.slane %v1931, 1
    %v1933 = vadd.f32 %v1931, %v1932
    %v1934 = vrot.slane %v1666, 4
    %v1935 = vadd.f32 %v1666, %v1934
    %v1936 = vrot.slane %v1935, 2
    %v1937 = vadd.f32 %v1935, %v1936
    %v1938 = vrot.slane %v1937, 1
    %v1939 = vadd.f32 %v1937, %v1938
    %v1940 = vrot.slane %v1667, 4
    %v1941 = vadd.f32 %v1667, %v1940
    %v1942 = vrot.slane %v1941, 2
    %v1943 = vadd.f32 %v1941, %v1942
    %v1944 = vrot.slane %v1943, 1
    %v1945 = vadd.f32 %v1943, %v1944
    %v1946 = vrot.slane %v1668, 4
    %v1947 = vadd.f32 %v1668, %v1946
    %v1948 = vrot.slane %v1947, 2
    %v1949 = vadd.f32 %v1947, %v1948
    %v1950 = vrot.slane %v1949, 1
    %v1951 = vadd.f32 %v1949, %v1950
    %v1952 = vrot.slane %v1669, 4
    %v1953 = vadd.f32 %v1669, %v1952
    %v1954 = vrot.slane %v1953, 2
    %v1955 = vadd.f32 %v1953, %v1954
    %v1956 = vrot.slane %v1955, 1
    %v1957 = vadd.f32 %v1955, %v1956
    %v1958 = vrot.slane %v1670, 4
    %v1959 = vadd.f32 %v1670, %v1958
    %v1960 = vrot.slane %v1959, 2
    %v1961 = vadd.f32 %v1959, %v1960
    %v1962 = vrot.slane %v1961, 1
    %v1963 = vadd.f32 %v1961, %v1962
    %v1964 = vrot.slane %v1671, 4
    %v1965 = vadd.f32 %v1671, %v1964
    %v1966 = vrot.slane %v1965, 2
    %v1967 = vadd.f32 %v1965, %v1966
    %v1968 = vrot.slane %v1967, 1
    %v1969 = vadd.f32 %v1967, %v1968
    %v1970 = vrot.slane %v1672, 4
    %v1971 = vadd.f32 %v1672, %v1970
    %v1972 = vrot.slane %v1971, 2
    %v1973 = vadd.f32 %v1971, %v1972
    %v1974 = vrot.slane %v1973, 1
    %v1975 = vadd.f32 %v1973, %v1974
    %v1976 = vrot.slane %v1673, 4
    %v1977 = vadd.f32 %v1673, %v1976
    %v1978 = vrot.slane %v1977, 2
    %v1979 = vadd.f32 %v1977, %v1978
    %v1980 = vrot.slane %v1979, 1
    %v1981 = vadd.f32 %v1979, %v1980
    %v1982 = vrot.slane %v1674, 4
    %v1983 = vadd.f32 %v1674, %v1982
    %v1984 = vrot.slane %v1983, 2
    %v1985 = vadd.f32 %v1983, %v1984
    %v1986 = vrot.slane %v1985, 1
    %v1987 = vadd.f32 %v1985, %v1986
    %v1988 = vrot.slane %v1675, 4
    %v1989 = vadd.f32 %v1675, %v1988
    %v1990 = vrot.slane %v1989, 2
    %v1991 = vadd.f32 %v1989, %v1990
    %v1992 = vrot.slane %v1991, 1
    %v1993 = vadd.f32 %v1991, %v1992
    %v1994 = vrot.slane %v1676, 4
    %v1995 = vadd.f32 %v1676, %v1994
    %v1996 = vrot.slane %v1995, 2
    %v1997 = vadd.f32 %v1995, %v1996
    %v1998 = vrot.slane %v1997, 1
    %v1999 = vadd.f32 %v1997, %v1998
    %v2000 = vrot.slane %v1677, 4
    %v2001 = vadd.f32 %v1677, %v2000
    %v2002 = vrot.slane %v2001, 2
    %v2003 = vadd.f32 %v2001, %v2002
    %v2004 = vrot.slane %v2003, 1
    %v2005 = vadd.f32 %v2003, %v2004
    %v2006 = vrot.slane %v1678, 4
    %v2007 = vadd.f32 %v1678, %v2006
    %v2008 = vrot.slane %v2007, 2
    %v2009 = vadd.f32 %v2007, %v2008
    %v2010 = vrot.slane %v2009, 1
    %v2011 = vadd.f32 %v2009, %v2010
    %v2012 = vrot.slane %v1679, 4
    %v2013 = vadd.f32 %v1679, %v2012
    %v2014 = vrot.slane %v2013, 2
    %v2015 = vadd.f32 %v2013, %v2014
    %v2016 = vrot.slane %v2015, 1
    %v2017 = vadd.f32 %v2015, %v2016
    %v2018 = vrot.slane %v1680, 4
    %v2019 = vadd.f32 %v1680, %v2018
    %v2020 = vrot.slane %v2019, 2
    %v2021 = vadd.f32 %v2019, %v2020
    %v2022 = vrot.slane %v2021, 1
    %v2023 = vadd.f32 %v2021, %v2022
    %v2024 = vrot.slane %v1681, 4
    %v2025 = vadd.f32 %v1681, %v2024
    %v2026 = vrot.slane %v2025, 2
    %v2027 = vadd.f32 %v2025, %v2026
    %v2028 = vrot.slane %v2027, 1
    %v2029 = vadd.f32 %v2027, %v2028
    %v2030 = vrot.slane %v1682, 4
    %v2031 = vadd.f32 %v1682, %v2030
    %v2032 = vrot.slane %v2031, 2
    %v2033 = vadd.f32 %v2031, %v2032
    %v2034 = vrot.slane %v2033, 1
    %v2035 = vadd.f32 %v2033, %v2034
    %v2036 = vrot.slane %v1683, 4
    %v2037 = vadd.f32 %v1683, %v2036
    %v2038 = vrot.slane %v2037, 2
    %v2039 = vadd.f32 %v2037, %v2038
    %v2040 = vrot.slane %v2039, 1
    %v2041 = vadd.f32 %v2039, %v2040
    %v2042 = vrot.slane %v1684, 4
    %v2043 = vadd.f32 %v1684, %v2042
    %v2044 = vrot.slane %v2043, 2
    %v2045 = vadd.f32 %v2043, %v2044
    %v2046 = vrot.slane %v2045, 1
    %v2047 = vadd.f32 %v2045, %v2046
    %v2048 = vrot.slane %v1685, 4
    %v2049 = vadd.f32 %v1685, %v2048
    %v2050 = vrot.slane %v2049, 2
    %v2051 = vadd.f32 %v2049, %v2050
    %v2052 = vrot.slane %v2051, 1
    %v2053 = vadd.f32 %v2051, %v2052
    %v2054 = vrot.slane %v1686, 4
    %v2055 = vadd.f32 %v1686, %v2054
    %v2056 = vrot.slane %v2055, 2
    %v2057 = vadd.f32 %v2055, %v2056
    %v2058 = vrot.slane %v2057, 1
    %v2059 = vadd.f32 %v2057, %v2058
    %v2060 = vrot.slane %v1687, 4
    %v2061 = vadd.f32 %v1687, %v2060
    %v2062 = vrot.slane %v2061, 2
    %v2063 = vadd.f32 %v2061, %v2062
    %v2064 = vrot.slane %v2063, 1
    %v2065 = vadd.f32 %v2063, %v2064
    %v2066 = vrot.slane %v1688, 4
    %v2067 = vadd.f32 %v1688, %v2066
    %v2068 = vrot.slane %v2067, 2
    %v2069 = vadd.f32 %v2067, %v2068
    %v2070 = vrot.slane %v2069, 1
    %v2071 = vadd.f32 %v2069, %v2070
    %v2072 = vrot.slane %v1689, 4
    %v2073 = vadd.f32 %v1689, %v2072
    %v2074 = vrot.slane %v2073, 2
    %v2075 = vadd.f32 %v2073, %v2074
    %v2076 = vrot.slane %v2075, 1
    %v2077 = vadd.f32 %v2075, %v2076
    %v2078 = vrot.slane %v1690, 4
    %v2079 = vadd.f32 %v1690, %v2078
    %v2080 = vrot.slane %v2079, 2
    %v2081 = vadd.f32 %v2079, %v2080
    %v2082 = vrot.slane %v2081, 1
    %v2083 = vadd.f32 %v2081, %v2082
    %v2084 = vrot.slane %v1691, 4
    %v2085 = vadd.f32 %v1691, %v2084
    %v2086 = vrot.slane %v2085, 2
    %v2087 = vadd.f32 %v2085, %v2086
    %v2088 = vrot.slane %v2087, 1
    %v2089 = vadd.f32 %v2087, %v2088
    %v2090 = vrot.slane %v1692, 4
    %v2091 = vadd.f32 %v1692, %v2090
    %v2092 = vrot.slane %v2091, 2
    %v2093 = vadd.f32 %v2091, %v2092
    %v2094 = vrot.slane %v2093, 1
    %v2095 = vadd.f32 %v2093, %v2094
    %v2096 = vrot.slane %v1693, 4
    %v2097 = vadd.f32 %v1693, %v2096
    %v2098 = vrot.slane %v2097, 2
    %v2099 = vadd.f32 %v2097, %v2098
    %v2100 = vrot.slane %v2099, 1
    %v2101 = vadd.f32 %v2099, %v2100
    %v2102 = vrot.slane %v1694, 4
    %v2103 = vadd.f32 %v1694, %v2102
    %v2104 = vrot.slane %v2103, 2
    %v2105 = vadd.f32 %v2103, %v2104
    %v2106 = vrot.slane %v2105, 1
    %v2107 = vadd.f32 %v2105, %v2106
    %v2108 = vrot.slane %v1695, 4
    %v2109 = vadd.f32 %v1695, %v2108
    %v2110 = vrot.slane %v2109, 2
    %v2111 = vadd.f32 %v2109, %v2110
    %v2112 = vrot.slane %v2111, 1
    %v2113 = vadd.f32 %v2111, %v2112
    %v2114 = vrot.slane %v1696, 4
    %v2115 = vadd.f32 %v1696, %v2114
    %v2116 = vrot.slane %v2115, 2
    %v2117 = vadd.f32 %v2115, %v2116
    %v2118 = vrot.slane %v2117, 1
    %v2119 = vadd.f32 %v2117, %v2118
    %v2120 = vrot.slane %v1697, 4
    %v2121 = vadd.f32 %v1697, %v2120
    %v2122 = vrot.slane %v2121, 2
    %v2123 = vadd.f32 %v2121, %v2122
    %v2124 = vrot.slane %v2123, 1
    %v2125 = vadd.f32 %v2123, %v2124
    %v2126 = vrot.slane %v1698, 4
    %v2127 = vadd.f32 %v1698, %v2126
    %v2128 = vrot.slane %v2127, 2
    %v2129 = vadd.f32 %v2127, %v2128
    %v2130 = vrot.slane %v2129, 1
    %v2131 = vadd.f32 %v2129, %v2130
    %v2132 = vrot.slane %v1699, 4
    %v2133 = vadd.f32 %v1699, %v2132
    %v2134 = vrot.slane %v2133, 2
    %v2135 = vadd.f32 %v2133, %v2134
    %v2136 = vrot.slane %v2135, 1
    %v2137 = vadd.f32 %v2135, %v2136
    %v2138 = vrot.slane %v1700, 4
    %v2139 = vadd.f32 %v1700, %v2138
    %v2140 = vrot.slane %v2139, 2
    %v2141 = vadd.f32 %v2139, %v2140
    %v2142 = vrot.slane %v2141, 1
    %v2143 = vadd.f32 %v2141, %v2142
    %v2144 = vrot.slane %v1701, 4
    %v2145 = vadd.f32 %v1701, %v2144
    %v2146 = vrot.slane %v2145, 2
    %v2147 = vadd.f32 %v2145, %v2146
    %v2148 = vrot.slane %v2147, 1
    %v2149 = vadd.f32 %v2147, %v2148
    %v2150 = vrot.slane %v1702, 4
    %v2151 = vadd.f32 %v1702, %v2150
    %v2152 = vrot.slane %v2151, 2
    %v2153 = vadd.f32 %v2151, %v2152
    %v2154 = vrot.slane %v2153, 1
    %v2155 = vadd.f32 %v2153, %v2154
    %v2156 = vrot.slane %v1703, 4
    %v2157 = vadd.f32 %v1703, %v2156
    %v2158 = vrot.slane %v2157, 2
    %v2159 = vadd.f32 %v2157, %v2158
    %v2160 = vrot.slane %v2159, 1
    %v2161 = vadd.f32 %v2159, %v2160
    %v2162 = vrot.slane %v1704, 4
    %v2163 = vadd.f32 %v1704, %v2162
    %v2164 = vrot.slane %v2163, 2
    %v2165 = vadd.f32 %v2163, %v2164
    %v2166 = vrot.slane %v2165, 1
    %v2167 = vadd.f32 %v2165, %v2166
    %v2168 = vrot.slane %v1705, 4
    %v2169 = vadd.f32 %v1705, %v2168
    %v2170 = vrot.slane %v2169, 2
    %v2171 = vadd.f32 %v2169, %v2170
    %v2172 = vrot.slane %v2171, 1
    %v2173 = vadd.f32 %v2171, %v2172
    %v2174 = vrot.slane %v1706, 4
    %v2175 = vadd.f32 %v1706, %v2174
    %v2176 = vrot.slane %v2175, 2
    %v2177 = vadd.f32 %v2175, %v2176
    %v2178 = vrot.slane %v2177, 1
    %v2179 = vadd.f32 %v2177, %v2178
    %v2180 = vrot.slane %v1707, 4
    %v2181 = vadd.f32 %v1707, %v2180
    %v2182 = vrot.slane %v2181, 2
    %v2183 = vadd.f32 %v2181, %v2182
    %v2184 = vrot.slane %v2183, 1
    %v2185 = vadd.f32 %v2183, %v2184
    %v2186 = vrot.slane %v1708, 4
    %v2187 = vadd.f32 %v1708, %v2186
    %v2188 = vrot.slane %v2187, 2
    %v2189 = vadd.f32 %v2187, %v2188
    %v2190 = vrot.slane %v2189, 1
    %v2191 = vadd.f32 %v2189, %v2190
    %v2192 = vrot.slane %v1709, 4
    %v2193 = vadd.f32 %v1709, %v2192
    %v2194 = vrot.slane %v2193, 2
    %v2195 = vadd.f32 %v2193, %v2194
    %v2196 = vrot.slane %v2195, 1
    %v2197 = vadd.f32 %v2195, %v2196
    %v2198 = vrot.slane %v1710, 4
    %v2199 = vadd.f32 %v1710, %v2198
    %v2200 = vrot.slane %v2199, 2
    %v2201 = vadd.f32 %v2199, %v2200
    %v2202 = vrot.slane %v2201, 1
    %v2203 = vadd.f32 %v2201, %v2202
    %v2204 = vrot.slane %v1711, 4
    %v2205 = vadd.f32 %v1711, %v2204
    %v2206 = vrot.slane %v2205, 2
    %v2207 = vadd.f32 %v2205, %v2206
    %v2208 = vrot.slane %v2207, 1
    %v2209 = vadd.f32 %v2207, %v2208
    %v2210 = vrot.slane %v1712, 4
    %v2211 = vadd.f32 %v1712, %v2210
    %v2212 = vrot.slane %v2211, 2
    %v2213 = vadd.f32 %v2211, %v2212
    %v2214 = vrot.slane %v2213, 1
    %v2215 = vadd.f32 %v2213, %v2214
    %v2216 = vrot.slane %v1713, 4
    %v2217 = vadd.f32 %v1713, %v2216
    %v2218 = vrot.slane %v2217, 2
    %v2219 = vadd.f32 %v2217, %v2218
    %v2220 = vrot.slane %v2219, 1
    %v2221 = vadd.f32 %v2219, %v2220
    %v2222 = vrot.slane %v1714, 4
    %v2223 = vadd.f32 %v1714, %v2222
    %v2224 = vrot.slane %v2223, 2
    %v2225 = vadd.f32 %v2223, %v2224
    %v2226 = vrot.slane %v2225, 1
    %v2227 = vadd.f32 %v2225, %v2226
    %v2228 = vrot.slane %v1715, 4
    %v2229 = vadd.f32 %v1715, %v2228
    %v2230 = vrot.slane %v2229, 2
    %v2231 = vadd.f32 %v2229, %v2230
    %v2232 = vrot.slane %v2231, 1
    %v2233 = vadd.f32 %v2231, %v2232
    %v2234 = vrot.slane %v1716, 4
    %v2235 = vadd.f32 %v1716, %v2234
    %v2236 = vrot.slane %v2235, 2
    %v2237 = vadd.f32 %v2235, %v2236
    %v2238 = vrot.slane %v2237, 1
    %v2239 = vadd.f32 %v2237, %v2238
    %v2240 = vrot.slane %v1717, 4
    %v2241 = vadd.f32 %v1717, %v2240
    %v2242 = vrot.slane %v2241, 2
    %v2243 = vadd.f32 %v2241, %v2242
    %v2244 = vrot.slane %v2243, 1
    %v2245 = vadd.f32 %v2243, %v2244
    %v2246 = vrot.slane %v1718, 4
    %v2247 = vadd.f32 %v1718, %v2246
    %v2248 = vrot.slane %v2247, 2
    %v2249 = vadd.f32 %v2247, %v2248
    %v2250 = vrot.slane %v2249, 1
    %v2251 = vadd.f32 %v2249, %v2250
    %v2252 = vrot.slane %v1719, 4
    %v2253 = vadd.f32 %v1719, %v2252
    %v2254 = vrot.slane %v2253, 2
    %v2255 = vadd.f32 %v2253, %v2254
    %v2256 = vrot.slane %v2255, 1
    %v2257 = vadd.f32 %v2255, %v2256
    %v2258 = vrot.slane %v1720, 4
    %v2259 = vadd.f32 %v1720, %v2258
    %v2260 = vrot.slane %v2259, 2
    %v2261 = vadd.f32 %v2259, %v2260
    %v2262 = vrot.slane %v2261, 1
    %v2263 = vadd.f32 %v2261, %v2262
    %v2264 = vrot.slane %v1721, 4
    %v2265 = vadd.f32 %v1721, %v2264
    %v2266 = vrot.slane %v2265, 2
    %v2267 = vadd.f32 %v2265, %v2266
    %v2268 = vrot.slane %v2267, 1
    %v2269 = vadd.f32 %v2267, %v2268
    %v2270 = vrot.slane %v1722, 4
    %v2271 = vadd.f32 %v1722, %v2270
    %v2272 = vrot.slane %v2271, 2
    %v2273 = vadd.f32 %v2271, %v2272
    %v2274 = vrot.slane %v2273, 1
    %v2275 = vadd.f32 %v2273, %v2274
    %v2276 = vrot.slane %v1723, 4
    %v2277 = vadd.f32 %v1723, %v2276
    %v2278 = vrot.slane %v2277, 2
    %v2279 = vadd.f32 %v2277, %v2278
    %v2280 = vrot.slane %v2279, 1
    %v2281 = vadd.f32 %v2279, %v2280
    %v2282 = vrot.slane %v1724, 4
    %v2283 = vadd.f32 %v1724, %v2282
    %v2284 = vrot.slane %v2283, 2
    %v2285 = vadd.f32 %v2283, %v2284
    %v2286 = vrot.slane %v2285, 1
    %v2287 = vadd.f32 %v2285, %v2286
    %v2288 = vrot.slane %v1725, 4
    %v2289 = vadd.f32 %v1725, %v2288
    %v2290 = vrot.slane %v2289, 2
    %v2291 = vadd.f32 %v2289, %v2290
    %v2292 = vrot.slane %v2291, 1
    %v2293 = vadd.f32 %v2291, %v2292
    %v2294 = vrot.slane %v1726, 4
    %v2295 = vadd.f32 %v1726, %v2294
    %v2296 = vrot.slane %v2295, 2
    %v2297 = vadd.f32 %v2295, %v2296
    %v2298 = vrot.slane %v2297, 1
    %v2299 = vadd.f32 %v2297, %v2298
    %v2300 = vrot.slane %v1727, 4
    %v2301 = vadd.f32 %v1727, %v2300
    %v2302 = vrot.slane %v2301, 2
    %v2303 = vadd.f32 %v2301, %v2302
    %v2304 = vrot.slane %v2303, 1
    %v2305 = vadd.f32 %v2303, %v2304
    %v2306 = vrot.slane %v1728, 4
    %v2307 = vadd.f32 %v1728, %v2306
    %v2308 = vrot.slane %v2307, 2
    %v2309 = vadd.f32 %v2307, %v2308
    %v2310 = vrot.slane %v2309, 1
    %v2311 = vadd.f32 %v2309, %v2310
    %v2312 = vrot.slane %v1729, 4
    %v2313 = vadd.f32 %v1729, %v2312
    %v2314 = vrot.slane %v2313, 2
    %v2315 = vadd.f32 %v2313, %v2314
    %v2316 = vrot.slane %v2315, 1
    %v2317 = vadd.f32 %v2315, %v2316
    %v2318 = vrot.slane %v1730, 4
    %v2319 = vadd.f32 %v1730, %v2318
    %v2320 = vrot.slane %v2319, 2
    %v2321 = vadd.f32 %v2319, %v2320
    %v2322 = vrot.slane %v2321, 1
    %v2323 = vadd.f32 %v2321, %v2322
    %v2324 = vrot.slane %v1731, 4
    %v2325 = vadd.f32 %v1731, %v2324
    %v2326 = vrot.slane %v2325, 2
    %v2327 = vadd.f32 %v2325, %v2326
    %v2328 = vrot.slane %v2327, 1
    %v2329 = vadd.f32 %v2327, %v2328
    %v2330 = vrot.slane %v1732, 4
    %v2331 = vadd.f32 %v1732, %v2330
    %v2332 = vrot.slane %v2331, 2
    %v2333 = vadd.f32 %v2331, %v2332
    %v2334 = vrot.slane %v2333, 1
    %v2335 = vadd.f32 %v2333, %v2334
    %v2336 = vrot.slane %v1733, 4
    %v2337 = vadd.f32 %v1733, %v2336
    %v2338 = vrot.slane %v2337, 2
    %v2339 = vadd.f32 %v2337, %v2338
    %v2340 = vrot.slane %v2339, 1
    %v2341 = vadd.f32 %v2339, %v2340
    %v2342 = vrot.slane %v1734, 4
    %v2343 = vadd.f32 %v1734, %v2342
    %v2344 = vrot.slane %v2343, 2
    %v2345 = vadd.f32 %v2343, %v2344
    %v2346 = vrot.slane %v2345, 1
    %v2347 = vadd.f32 %v2345, %v2346
    %v2348 = vrot.slane %v1735, 4
    %v2349 = vadd.f32 %v1735, %v2348
    %v2350 = vrot.slane %v2349, 2
    %v2351 = vadd.f32 %v2349, %v2350
    %v2352 = vrot.slane %v2351, 1
    %v2353 = vadd.f32 %v2351, %v2352
    %v2354 = vrot.slane %v1736, 4
    %v2355 = vadd.f32 %v1736, %v2354
    %v2356 = vrot.slane %v2355, 2
    %v2357 = vadd.f32 %v2355, %v2356
    %v2358 = vrot.slane %v2357, 1
    %v2359 = vadd.f32 %v2357, %v2358
    %v2360 = vrot.slane %v1737, 4
    %v2361 = vadd.f32 %v1737, %v2360
    %v2362 = vrot.slane %v2361, 2
    %v2363 = vadd.f32 %v2361, %v2362
    %v2364 = vrot.slane %v2363, 1
    %v2365 = vadd.f32 %v2363, %v2364
    %v2366 = vrot.slane %v1738, 4
    %v2367 = vadd.f32 %v1738, %v2366
    %v2368 = vrot.slane %v2367, 2
    %v2369 = vadd.f32 %v2367, %v2368
    %v2370 = vrot.slane %v2369, 1
    %v2371 = vadd.f32 %v2369, %v2370
    %v2372 = vrot.slane %v1739, 4
    %v2373 = vadd.f32 %v1739, %v2372
    %v2374 = vrot.slane %v2373, 2
    %v2375 = vadd.f32 %v2373, %v2374
    %v2376 = vrot.slane %v2375, 1
    %v2377 = vadd.f32 %v2375, %v2376
    %v2378 = vrot.slane %v1740, 4
    %v2379 = vadd.f32 %v1740, %v2378
    %v2380 = vrot.slane %v2379, 2
    %v2381 = vadd.f32 %v2379, %v2380
    %v2382 = vrot.slane %v2381, 1
    %v2383 = vadd.f32 %v2381, %v2382
    %v2384 = vrot.slane %v1741, 4
    %v2385 = vadd.f32 %v1741, %v2384
    %v2386 = vrot.slane %v2385, 2
    %v2387 = vadd.f32 %v2385, %v2386
    %v2388 = vrot.slane %v2387, 1
    %v2389 = vadd.f32 %v2387, %v2388
    %v2390 = vrot.slane %v1742, 4
    %v2391 = vadd.f32 %v1742, %v2390
    %v2392 = vrot.slane %v2391, 2
    %v2393 = vadd.f32 %v2391, %v2392
    %v2394 = vrot.slane %v2393, 1
    %v2395 = vadd.f32 %v2393, %v2394
    %v2396 = vrot.slane %v1743, 4
    %v2397 = vadd.f32 %v1743, %v2396
    %v2398 = vrot.slane %v2397, 2
    %v2399 = vadd.f32 %v2397, %v2398
    %v2400 = vrot.slane %v2399, 1
    %v2401 = vadd.f32 %v2399, %v2400
    %v2402 = vrot.slane %v1744, 4
    %v2403 = vadd.f32 %v1744, %v2402
    %v2404 = vrot.slane %v2403, 2
    %v2405 = vadd.f32 %v2403, %v2404
    %v2406 = vrot.slane %v2405, 1
    %v2407 = vadd.f32 %v2405, %v2406
    %v2408 = vrot.slane %v1745, 4
    %v2409 = vadd.f32 %v1745, %v2408
    %v2410 = vrot.slane %v2409, 2
    %v2411 = vadd.f32 %v2409, %v2410
    %v2412 = vrot.slane %v2411, 1
    %v2413 = vadd.f32 %v2411, %v2412
    %v2414 = vrot.slane %v1746, 4
    %v2415 = vadd.f32 %v1746, %v2414
    %v2416 = vrot.slane %v2415, 2
    %v2417 = vadd.f32 %v2415, %v2416
    %v2418 = vrot.slane %v2417, 1
    %v2419 = vadd.f32 %v2417, %v2418
    %v2420 = vrot.slane %v1747, 4
    %v2421 = vadd.f32 %v1747, %v2420
    %v2422 = vrot.slane %v2421, 2
    %v2423 = vadd.f32 %v2421, %v2422
    %v2424 = vrot.slane %v2423, 1
    %v2425 = vadd.f32 %v2423, %v2424
    %v2426 = vrot.slane %v1748, 4
    %v2427 = vadd.f32 %v1748, %v2426
    %v2428 = vrot.slane %v2427, 2
    %v2429 = vadd.f32 %v2427, %v2428
    %v2430 = vrot.slane %v2429, 1
    %v2431 = vadd.f32 %v2429, %v2430
    %v2432 = vrot.slane %v1749, 4
    %v2433 = vadd.f32 %v1749, %v2432
    %v2434 = vrot.slane %v2433, 2
    %v2435 = vadd.f32 %v2433, %v2434
    %v2436 = vrot.slane %v2435, 1
    %v2437 = vadd.f32 %v2435, %v2436
    %v2438 = vrot.slane %v1750, 4
    %v2439 = vadd.f32 %v1750, %v2438
    %v2440 = vrot.slane %v2439, 2
    %v2441 = vadd.f32 %v2439, %v2440
    %v2442 = vrot.slane %v2441, 1
    %v2443 = vadd.f32 %v2441, %v2442
    %v2444 = vrot.slane %v1751, 4
    %v2445 = vadd.f32 %v1751, %v2444
    %v2446 = vrot.slane %v2445, 2
    %v2447 = vadd.f32 %v2445, %v2446
    %v2448 = vrot.slane %v2447, 1
    %v2449 = vadd.f32 %v2447, %v2448
    %v2450 = vrot.slane %v1752, 4
    %v2451 = vadd.f32 %v1752, %v2450
    %v2452 = vrot.slane %v2451, 2
    %v2453 = vadd.f32 %v2451, %v2452
    %v2454 = vrot.slane %v2453, 1
    %v2455 = vadd.f32 %v2453, %v2454
    %v2456 = vrot.slane %v1753, 4
    %v2457 = vadd.f32 %v1753, %v2456
    %v2458 = vrot.slane %v2457, 2
    %v2459 = vadd.f32 %v2457, %v2458
    %v2460 = vrot.slane %v2459, 1
    %v2461 = vadd.f32 %v2459, %v2460
    %v2462 = vrot.slane %v1754, 4
    %v2463 = vadd.f32 %v1754, %v2462
    %v2464 = vrot.slane %v2463, 2
    %v2465 = vadd.f32 %v2463, %v2464
    %v2466 = vrot.slane %v2465, 1
    %v2467 = vadd.f32 %v2465, %v2466
    %v2468 = vrot.slane %v1755, 4
    %v2469 = vadd.f32 %v1755, %v2468
    %v2470 = vrot.slane %v2469, 2
    %v2471 = vadd.f32 %v2469, %v2470
    %v2472 = vrot.slane %v2471, 1
    %v2473 = vadd.f32 %v2471, %v2472
    %v2474 = vrot.slane %v1756, 4
    %v2475 = vadd.f32 %v1756, %v2474
    %v2476 = vrot.slane %v2475, 2
    %v2477 = vadd.f32 %v2475, %v2476
    %v2478 = vrot.slane %v2477, 1
    %v2479 = vadd.f32 %v2477, %v2478
    %v2480 = vrot.slane %v1757, 4
    %v2481 = vadd.f32 %v1757, %v2480
    %v2482 = vrot.slane %v2481, 2
    %v2483 = vadd.f32 %v2481, %v2482
    %v2484 = vrot.slane %v2483, 1
    %v2485 = vadd.f32 %v2483, %v2484
    %v2486 = vrot.slane %v1758, 4
    %v2487 = vadd.f32 %v1758, %v2486
    %v2488 = vrot.slane %v2487, 2
    %v2489 = vadd.f32 %v2487, %v2488
    %v2490 = vrot.slane %v2489, 1
    %v2491 = vadd.f32 %v2489, %v2490
    %v2492 = vrot.slane %v1759, 4
    %v2493 = vadd.f32 %v1759, %v2492
    %v2494 = vrot.slane %v2493, 2
    %v2495 = vadd.f32 %v2493, %v2494
    %v2496 = vrot.slane %v2495, 1
    %v2497 = vadd.f32 %v2495, %v2496
    %v2498 = vrot.slane %v1760, 4
    %v2499 = vadd.f32 %v1760, %v2498
    %v2500 = vrot.slane %v2499, 2
    %v2501 = vadd.f32 %v2499, %v2500
    %v2502 = vrot.slane %v2501, 1
    %v2503 = vadd.f32 %v2501, %v2502
    %v2504 = vrot.slane %v1761, 4
    %v2505 = vadd.f32 %v1761, %v2504
    %v2506 = vrot.slane %v2505, 2
    %v2507 = vadd.f32 %v2505, %v2506
    %v2508 = vrot.slane %v2507, 1
    %v2509 = vadd.f32 %v2507, %v2508
    %v2510 = vrot.slane %v1762, 4
    %v2511 = vadd.f32 %v1762, %v2510
    %v2512 = vrot.slane %v2511, 2
    %v2513 = vadd.f32 %v2511, %v2512
    %v2514 = vrot.slane %v2513, 1
    %v2515 = vadd.f32 %v2513, %v2514
    %v2516 = vrot.slane %v1763, 4
    %v2517 = vadd.f32 %v1763, %v2516
    %v2518 = vrot.slane %v2517, 2
    %v2519 = vadd.f32 %v2517, %v2518
    %v2520 = vrot.slane %v2519, 1
    %v2521 = vadd.f32 %v2519, %v2520
    %v2522 = vrot.slane %v1764, 4
    %v2523 = vadd.f32 %v1764, %v2522
    %v2524 = vrot.slane %v2523, 2
    %v2525 = vadd.f32 %v2523, %v2524
    %v2526 = vrot.slane %v2525, 1
    %v2527 = vadd.f32 %v2525, %v2526
    %v2528 = vrot.slane %v1765, 4
    %v2529 = vadd.f32 %v1765, %v2528
    %v2530 = vrot.slane %v2529, 2
    %v2531 = vadd.f32 %v2529, %v2530
    %v2532 = vrot.slane %v2531, 1
    %v2533 = vadd.f32 %v2531, %v2532
    %v2534 = vld [vmem:[%s5] sm:$0xff]
    %v2535 = vld [vmem:[%s5 + $0x8] sm:$0xff]
    %v2536 = vld [vmem:[%s5 + $0x10] sm:$0xff]
    %v2537 = vld [vmem:[%s5 + $0x18] sm:$0xff]
    %v2538 = vld [vmem:[%s5 + $0x20] sm:$0xff]
    %v2539 = vld [vmem:[%s5 + $0x28] sm:$0xff]
    %v2540 = vld [vmem:[%s5 + $0x30] sm:$0xff]
    %v2541 = vld [vmem:[%s5 + $0x38] sm:$0xff]
    %v2542 = vld [vmem:[%s5 + $0x40] sm:$0xff]
    %v2543 = vld [vmem:[%s5 + $0x48] sm:$0xff]
    %v2544 = vld [vmem:[%s5 + $0x50] sm:$0xff]
    %v2545 = vld [vmem:[%s5 + $0x58] sm:$0xff]
    %v2546 = vld [vmem:[%s5 + $0x60] sm:$0xff]
    %v2547 = vld [vmem:[%s5 + $0x68] sm:$0xff]
    %v2548 = vld [vmem:[%s5 + $0x70] sm:$0xff]
    %v2549 = vld [vmem:[%s5 + $0x78] sm:$0xff]
    %v2550 = vld [vmem:[%s6] sm:$0x1]
    %2552 = vset.pattern.permute.xlu0 0
    %2553 = vperm.xlu0 %2552, %v456
    %v2554 = vpop.permute.xlu0 %2553
    %2557 = vset.pattern.permute.xlu0 0
    %2558 = vperm.xlu0 %2557, %v457
    %v2559 = vpop.permute.xlu0 %2558
    %2562 = vset.pattern.permute.xlu0 0
    %2563 = vperm.xlu0 %2562, %v458
    %v2564 = vpop.permute.xlu0 %2563
    %2567 = vset.pattern.permute.xlu0 0
    %2568 = vperm.xlu0 %2567, %v459
    %v2569 = vpop.permute.xlu0 %2568
    %2572 = vset.pattern.permute.xlu0 0
    %2573 = vperm.xlu0 %2572, %v460
    %v2574 = vpop.permute.xlu0 %2573
    %2577 = vset.pattern.permute.xlu0 0
    %2578 = vperm.xlu0 %2577, %v461
    %v2579 = vpop.permute.xlu0 %2578
    %2582 = vset.pattern.permute.xlu0 0
    %2583 = vperm.xlu0 %2582, %v462
    %v2584 = vpop.permute.xlu0 %2583
    %2587 = vset.pattern.permute.xlu0 0
    %2588 = vperm.xlu0 %2587, %v463
    %v2589 = vpop.permute.xlu0 %2588
    %2592 = vset.pattern.permute.xlu0 0
    %2593 = vperm.xlu0 %2592, %v464
    %v2594 = vpop.permute.xlu0 %2593
    %2597 = vset.pattern.permute.xlu0 0
    %2598 = vperm.xlu0 %2597, %v465
    %v2599 = vpop.permute.xlu0 %2598
    %2602 = vset.pattern.permute.xlu0 0
    %2603 = vperm.xlu0 %2602, %v466
    %v2604 = vpop.permute.xlu0 %2603
    %2607 = vset.pattern.permute.xlu0 0
    %2608 = vperm.xlu0 %2607, %v467
    %v2609 = vpop.permute.xlu0 %2608
    %2612 = vset.pattern.permute.xlu0 0
    %2613 = vperm.xlu0 %2612, %v468
    %v2614 = vpop.permute.xlu0 %2613
    %2617 = vset.pattern.permute.xlu0 0
    %2618 = vperm.xlu0 %2617, %v469
    %v2619 = vpop.permute.xlu0 %2618
    %2622 = vset.pattern.permute.xlu0 0
    %2623 = vperm.xlu0 %2622, %v470
    %v2624 = vpop.permute.xlu0 %2623
    %2627 = vset.pattern.permute.xlu0 0
    %2628 = vperm.xlu0 %2627, %v471
    %v2629 = vpop.permute.xlu0 %2628
    %v2632 = vlaneseq
    %v2633 = vshrl.u32 %v2632, 7
    %v2634 = vsub.s32 0, %v2633
    %v2635 = vrot.slane %v2550, %v2634
    %v2637 = vmul.f32 %v2554, %v2635
    %v2638 = vmul.f32 %v2559, %v2635
    %v2639 = vmul.f32 %v2564, %v2635
    %v2640 = vmul.f32 %v2569, %v2635
    %v2641 = vmul.f32 %v2574, %v2635
    %v2642 = vmul.f32 %v2579, %v2635
    %v2643 = vmul.f32 %v2584, %v2635
    %v2644 = vmul.f32 %v2589, %v2635
    %v2645 = vmul.f32 %v2594, %v2635
    %v2646 = vmul.f32 %v2599, %v2635
    %v2647 = vmul.f32 %v2604, %v2635
    %v2648 = vmul.f32 %v2609, %v2635
    %v2649 = vmul.f32 %v2614, %v2635
    %v2650 = vmul.f32 %v2619, %v2635
    %v2651 = vmul.f32 %v2624, %v2635
    %v2652 = vmul.f32 %v2629, %v2635
    %vm2781 = vcmask 1041409
    %v2782 = vsel %vm2781, %v1777, %v1771
    %vm2783 = vcmask 1042434
    %v2784 = vsel %vm2783, %v1783, %v2782
    %vm2785 = vcmask 1043459
    %v2786 = vsel %vm2785, %v1789, %v2784
    %vm2787 = vcmask 1044484
    %v2788 = vsel %vm2787, %v1795, %v2786
    %vm2789 = vcmask 1045509
    %v2790 = vsel %vm2789, %v1801, %v2788
    %vm2791 = vcmask 1046534
    %v2792 = vsel %vm2791, %v1807, %v2790
    %vm2793 = vcmask 1047559
    %v2794 = vsel %vm2793, %v1813, %v2792
    %v2795 = vsel %vm2781, %v1825, %v1819
    %v2796 = vsel %vm2783, %v1831, %v2795
    %v2797 = vsel %vm2785, %v1837, %v2796
    %v2798 = vsel %vm2787, %v1843, %v2797
    %v2799 = vsel %vm2789, %v1849, %v2798
    %v2800 = vsel %vm2791, %v1855, %v2799
    %v2801 = vsel %vm2793, %v1861, %v2800
    %v2802 = vsel %vm2781, %v1873, %v1867
    %v2803 = vsel %vm2783, %v1879, %v2802
    %v2804 = vsel %vm2785, %v1885, %v2803
    %v2805 = vsel %vm2787, %v1891, %v2804
    %v2806 = vsel %vm2789, %v1897, %v2805
    %v2807 = vsel %vm2791, %v1903, %v2806
    %v2808 = vsel %vm2793, %v1909, %v2807
    %v2809 = vsel %vm2781, %v1921, %v1915
    %v2810 = vsel %vm2783, %v1927, %v2809
    %v2811 = vsel %vm2785, %v1933, %v2810
    %v2812 = vsel %vm2787, %v1939, %v2811
    %v2813 = vsel %vm2789, %v1945, %v2812
    %v2814 = vsel %vm2791, %v1951, %v2813
    %v2815 = vsel %vm2793, %v1957, %v2814
    %v2816 = vsel %vm2781, %v1969, %v1963
    %v2817 = vsel %vm2783, %v1975, %v2816
    %v2818 = vsel %vm2785, %v1981, %v2817
    %v2819 = vsel %vm2787, %v1987, %v2818
    %v2820 = vsel %vm2789, %v1993, %v2819
    %v2821 = vsel %vm2791, %v1999, %v2820
    %v2822 = vsel %vm2793, %v2005, %v2821
    %v2823 = vsel %vm2781, %v2017, %v2011
    %v2824 = vsel %vm2783, %v2023, %v2823
    %v2825 = vsel %vm2785, %v2029, %v2824
    %v2826 = vsel %vm2787, %v2035, %v2825
    %v2827 = vsel %vm2789, %v2041, %v2826
    %v2828 = vsel %vm2791, %v2047, %v2827
    %v2829 = vsel %vm2793, %v2053, %v2828
    %v2830 = vsel %vm2781, %v2065, %v2059
    %v2831 = vsel %vm2783, %v2071, %v2830
    %v2832 = vsel %vm2785, %v2077, %v2831
    %v2833 = vsel %vm2787, %v2083, %v2832
    %v2834 = vsel %vm2789, %v2089, %v2833
    %v2835 = vsel %vm2791, %v2095, %v2834
    %v2836 = vsel %vm2793, %v2101, %v2835
    %v2837 = vsel %vm2781, %v2113, %v2107
    %v2838 = vsel %vm2783, %v2119, %v2837
    %v2839 = vsel %vm2785, %v2125, %v2838
    %v2840 = vsel %vm2787, %v2131, %v2839
    %v2841 = vsel %vm2789, %v2137, %v2840
    %v2842 = vsel %vm2791, %v2143, %v2841
    %v2843 = vsel %vm2793, %v2149, %v2842
    %v2844 = vsel %vm2781, %v2161, %v2155
    %v2845 = vsel %vm2783, %v2167, %v2844
    %v2846 = vsel %vm2785, %v2173, %v2845
    %v2847 = vsel %vm2787, %v2179, %v2846
    %v2848 = vsel %vm2789, %v2185, %v2847
    %v2849 = vsel %vm2791, %v2191, %v2848
    %v2850 = vsel %vm2793, %v2197, %v2849
    %v2851 = vsel %vm2781, %v2209, %v2203
    %v2852 = vsel %vm2783, %v2215, %v2851
    %v2853 = vsel %vm2785, %v2221, %v2852
    %v2854 = vsel %vm2787, %v2227, %v2853
    %v2855 = vsel %vm2789, %v2233, %v2854
    %v2856 = vsel %vm2791, %v2239, %v2855
    %v2857 = vsel %vm2793, %v2245, %v2856
    %v2858 = vsel %vm2781, %v2257, %v2251
    %v2859 = vsel %vm2783, %v2263, %v2858
    %v2860 = vsel %vm2785, %v2269, %v2859
    %v2861 = vsel %vm2787, %v2275, %v2860
    %v2862 = vsel %vm2789, %v2281, %v2861
    %v2863 = vsel %vm2791, %v2287, %v2862
    %v2864 = vsel %vm2793, %v2293, %v2863
    %v2865 = vsel %vm2781, %v2305, %v2299
    %v2866 = vsel %vm2783, %v2311, %v2865
    %v2867 = vsel %vm2785, %v2317, %v2866
    %v2868 = vsel %vm2787, %v2323, %v2867
    %v2869 = vsel %vm2789, %v2329, %v2868
    %v2870 = vsel %vm2791, %v2335, %v2869
    %v2871 = vsel %vm2793, %v2341, %v2870
    %v2872 = vsel %vm2781, %v2353, %v2347
    %v2873 = vsel %vm2783, %v2359, %v2872
    %v2874 = vsel %vm2785, %v2365, %v2873
    %v2875 = vsel %vm2787, %v2371, %v2874
    %v2876 = vsel %vm2789, %v2377, %v2875
    %v2877 = vsel %vm2791, %v2383, %v2876
    %v2878 = vsel %vm2793, %v2389, %v2877
    %v2879 = vsel %vm2781, %v2401, %v2395
    %v2880 = vsel %vm2783, %v2407, %v2879
    %v2881 = vsel %vm2785, %v2413, %v2880
    %v2882 = vsel %vm2787, %v2419, %v2881
    %v2883 = vsel %vm2789, %v2425, %v2882
    %v2884 = vsel %vm2791, %v2431, %v2883
    %v2885 = vsel %vm2793, %v2437, %v2884
    %v2886 = vsel %vm2781, %v2449, %v2443
    %v2887 = vsel %vm2783, %v2455, %v2886
    %v2888 = vsel %vm2785, %v2461, %v2887
    %v2889 = vsel %vm2787, %v2467, %v2888
    %v2890 = vsel %vm2789, %v2473, %v2889
    %v2891 = vsel %vm2791, %v2479, %v2890
    %v2892 = vsel %vm2793, %v2485, %v2891
    %v2893 = vsel %vm2781, %v2497, %v2491
    %v2894 = vsel %vm2783, %v2503, %v2893
    %v2895 = vsel %vm2785, %v2509, %v2894
    %v2896 = vsel %vm2787, %v2515, %v2895
    %v2897 = vsel %vm2789, %v2521, %v2896
    %v2898 = vsel %vm2791, %v2527, %v2897
    %v2899 = vsel %vm2793, %v2533, %v2898
    %2916 = vmatprep.subr.mxu0 0.0
    %2917 = vmatpush1.msra.mxu0 %v2549
    %2918 = vmatprep.subr.mxu0 0.0
    %2919 = vmatpush1.msra.mxu0 %v2548
    %2920 = vmatprep.subr.mxu0 0.0
    %2921 = vmatpush1.msra.mxu0 %v2547
    %2922 = vmatprep.subr.mxu0 0.0
    %2923 = vmatpush1.msra.mxu0 %v2546
    %2924 = vmatprep.subr.mxu0 0.0
    %2925 = vmatpush1.msra.mxu0 %v2545
    %2926 = vmatprep.subr.mxu0 0.0
    %2927 = vmatpush1.msra.mxu0 %v2544
    %2928 = vmatprep.subr.mxu0 0.0
    %2929 = vmatpush1.msra.mxu0 %v2543
    %2930 = vmatprep.subr.mxu0 0.0
    %2931 = vmatpush1.msra.mxu0 %v2542
    %2932 = vmatprep.subr.mxu0 0.0
    %2933 = vmatpush1.msra.mxu0 %v2541
    %2934 = vmatprep.subr.mxu0 0.0
    %2935 = vmatpush1.msra.mxu0 %v2540
    %2936 = vmatprep.subr.mxu0 0.0
    %2937 = vmatpush1.msra.mxu0 %v2539
    %2938 = vmatprep.subr.mxu0 0.0
    %2939 = vmatpush1.msra.mxu0 %v2538
    %2940 = vmatprep.subr.mxu0 0.0
    %2941 = vmatpush1.msra.mxu0 %v2537
    %2942 = vmatprep.subr.mxu0 0.0
    %2943 = vmatpush1.msra.mxu0 %v2536
    %2944 = vmatprep.subr.mxu0 0.0
    %2945 = vmatpush1.msra.mxu0 %v2535
    %2946 = vmatprep.subr.mxu0 0.0
    %2947 = vmatpush1.msra.mxu0 %v2534
    %2948 = vmatprep.subr.mxu0 0.0
    %2949 = vmatpush2.msra.mxu0 0.0
    %2950 = vmatprep.subr.mxu0 0.0
    %2951 = vmatpush2.msra.mxu0 0.0
    %2952 = vmatprep.subr.mxu0 0.0
    %2953 = vmatpush2.msra.mxu0 0.0
    %2954 = vmatprep.subr.mxu0 0.0
    %2955 = vmatpush2.msra.mxu0 0.0
    %2956 = vmatprep.subr.mxu0 0.0
    %2957 = vmatpush2.msra.mxu0 0.0
    %2958 = vmatprep.subr.mxu0 0.0
    %2959 = vmatpush2.msra.mxu0 0.0
    %2960 = vmatprep.subr.mxu0 0.0
    %2961 = vmatpush2.msra.mxu0 0.0
    %2962 = vmatprep.subr.mxu0 0.0
    %2963 = vmatpush2.msra.mxu0 0.0
    %2964 = vmatprep.subr.mxu0 0.0
    %2965 = vmatpush2.msra.mxu0 0.0
    %2966 = vmatprep.subr.mxu0 0.0
    %2967 = vmatpush2.msra.mxu0 0.0
    %2968 = vmatprep.subr.mxu0 0.0
    %2969 = vmatpush2.msra.mxu0 0.0
    %2970 = vmatprep.subr.mxu0 0.0
    %2971 = vmatpush2.msra.mxu0 0.0
    %2972 = vmatprep.subr.mxu0 0.0
    %2973 = vmatpush2.msra.mxu0 0.0
    %2974 = vmatprep.subr.mxu0 0.0
    %2975 = vmatpush2.msra.mxu0 0.0
    %2976 = vmatprep.subr.mxu0 0.0
    %2977 = vmatpush2.msra.mxu0 0.0
    %2978 = vmatprep.subr.mxu0 0.0
    %2979 = vmatpush2.msra.mxu0 0.0
    %2980 = vmatprep.mubr.f32.mxu0 0.0
    %2981 = vmatmul.mubr.f32.gmra.mxu0 %v2794
    %v2982 = vpop.f32.mrf.mxu0
    %v2983 = vadd.f32 %v2637, %v2982
    %v2984 = vpop.f32.mrf.mxu0
    %2985 = vmatprep.mubr.f32.mxu0 0.0
    %2986 = vmatmul.mubr.f32.gmra.mxu0 %v2801
    %v2987 = vpop.f32.mrf.mxu0
    %v2988 = vadd.f32 %v2638, %v2987
    %v2989 = vpop.f32.mrf.mxu0
    %2990 = vmatprep.mubr.f32.mxu0 0.0
    %2991 = vmatmul.mubr.f32.gmra.mxu0 %v2808
    %v2992 = vpop.f32.mrf.mxu0
    %v2993 = vadd.f32 %v2639, %v2992
    %v2994 = vpop.f32.mrf.mxu0
    %2995 = vmatprep.mubr.f32.mxu0 0.0
    %2996 = vmatmul.mubr.f32.gmra.mxu0 %v2815
    %v2997 = vpop.f32.mrf.mxu0
    %v2998 = vadd.f32 %v2640, %v2997
    %v2999 = vpop.f32.mrf.mxu0
    %3000 = vmatprep.mubr.f32.mxu0 0.0
    %3001 = vmatmul.mubr.f32.gmra.mxu0 %v2822
    %v3002 = vpop.f32.mrf.mxu0
    %v3003 = vadd.f32 %v2641, %v3002
    %v3004 = vpop.f32.mrf.mxu0
    %3005 = vmatprep.mubr.f32.mxu0 0.0
    %3006 = vmatmul.mubr.f32.gmra.mxu0 %v2829
    %v3007 = vpop.f32.mrf.mxu0
    %v3008 = vadd.f32 %v2642, %v3007
    %v3009 = vpop.f32.mrf.mxu0
    %3010 = vmatprep.mubr.f32.mxu0 0.0
    %3011 = vmatmul.mubr.f32.gmra.mxu0 %v2836
    %v3012 = vpop.f32.mrf.mxu0
    %v3013 = vadd.f32 %v2643, %v3012
    %v3014 = vpop.f32.mrf.mxu0
    %3015 = vmatprep.mubr.f32.mxu0 0.0
    %3016 = vmatmul.mubr.f32.gmra.mxu0 %v2843
    %v3017 = vpop.f32.mrf.mxu0
    %v3018 = vadd.f32 %v2644, %v3017
    %v3019 = vpop.f32.mrf.mxu0
    %3020 = vmatprep.mubr.f32.mxu0 0.0
    %3021 = vmatmul.mubr.f32.gmra.mxu0 %v2850
    %v3022 = vpop.f32.mrf.mxu0
    %v3023 = vadd.f32 %v2645, %v3022
    %v3024 = vpop.f32.mrf.mxu0
    %3025 = vmatprep.mubr.f32.mxu0 0.0
    %3026 = vmatmul.mubr.f32.gmra.mxu0 %v2857
    %v3027 = vpop.f32.mrf.mxu0
    %v3028 = vadd.f32 %v2646, %v3027
    %v3029 = vpop.f32.mrf.mxu0
    %3030 = vmatprep.mubr.f32.mxu0 0.0
    %3031 = vmatmul.mubr.f32.gmra.mxu0 %v2864
    %v3032 = vpop.f32.mrf.mxu0
    %v3033 = vadd.f32 %v2647, %v3032
    %v3034 = vpop.f32.mrf.mxu0
    %3035 = vmatprep.mubr.f32.mxu0 0.0
    %3036 = vmatmul.mubr.f32.gmra.mxu0 %v2871
    %v3037 = vpop.f32.mrf.mxu0
    %v3038 = vadd.f32 %v2648, %v3037
    %v3039 = vpop.f32.mrf.mxu0
    %3040 = vmatprep.mubr.f32.mxu0 0.0
    %3041 = vmatmul.mubr.f32.gmra.mxu0 %v2878
    %v3042 = vpop.f32.mrf.mxu0
    %v3043 = vadd.f32 %v2649, %v3042
    %v3044 = vpop.f32.mrf.mxu0
    %3045 = vmatprep.mubr.f32.mxu0 0.0
    %3046 = vmatmul.mubr.f32.gmra.mxu0 %v2885
    %v3047 = vpop.f32.mrf.mxu0
    %v3048 = vadd.f32 %v2650, %v3047
    %v3049 = vpop.f32.mrf.mxu0
    %3050 = vmatprep.mubr.f32.mxu0 0.0
    %3051 = vmatmul.mubr.f32.gmra.mxu0 %v2892
    %v3052 = vpop.f32.mrf.mxu0
    %v3053 = vadd.f32 %v2651, %v3052
    %v3054 = vpop.f32.mrf.mxu0
    %3055 = vmatprep.mubr.f32.mxu0 0.0
    %3056 = vmatmul.mubr.f32.gmra.mxu0 %v2899
    %v3057 = vpop.f32.mrf.mxu0
    %v3058 = vadd.f32 %v2652, %v3057
    %v3059 = vpop.f32.mrf.mxu0
    %3060 = vdwg.mxu0
    %v3061 = vld [vmem:[#allocation2] sm:$0xff]
    %v3062 = vld [vmem:[#allocation2 + $0x8] sm:$0xff]
    %v3063 = vld [vmem:[#allocation2 + $0x10] sm:$0xff]
    %v3064 = vld [vmem:[#allocation2 + $0x18] sm:$0xff]
    %v3065 = vld [vmem:[#allocation2 + $0x20] sm:$0xff]
    %v3066 = vld [vmem:[#allocation2 + $0x28] sm:$0xff]
    %v3067 = vld [vmem:[#allocation2 + $0x30] sm:$0xff]
    %v3068 = vld [vmem:[#allocation2 + $0x38] sm:$0xff]
    %v3069 = vld [vmem:[#allocation2 + $0x40] sm:$0xff]
    %v3070 = vld [vmem:[#allocation2 + $0x48] sm:$0xff]
    %v3071 = vld [vmem:[#allocation2 + $0x50] sm:$0xff]
    %v3072 = vld [vmem:[#allocation2 + $0x58] sm:$0xff]
    %v3073 = vld [vmem:[#allocation2 + $0x60] sm:$0xff]
    %v3074 = vld [vmem:[#allocation2 + $0x68] sm:$0xff]
    %v3075 = vld [vmem:[#allocation2 + $0x70] sm:$0xff]
    %v3076 = vld [vmem:[#allocation2 + $0x78] sm:$0xff]
    %v3077 = vld [vmem:[%s8] sm:$0x1]
    %v3079 = vlaneseq
    %v3080 = vshrl.u32 %v3079, 7
    %v3081 = vsub.s32 0, %v3080
    %v3082 = vrot.slane %v3077, %v3081
    %3084 = vmatprep.subr.mxu0 0.0
    %3085 = vmatpush1.msra.mxu0 %v3076
    %3086 = vmatprep.subr.mxu0 0.0
    %3087 = vmatpush1.msra.mxu0 %v3075
    %3088 = vmatprep.subr.mxu0 0.0
    %3089 = vmatpush1.msra.mxu0 %v3074
    %3090 = vmatprep.subr.mxu0 0.0
    %3091 = vmatpush1.msra.mxu0 %v3073
    %3092 = vmatprep.subr.mxu0 0.0
    %3093 = vmatpush1.msra.mxu0 %v3072
    %3094 = vmatprep.subr.mxu0 0.0
    %3095 = vmatpush1.msra.mxu0 %v3071
    %3096 = vmatprep.subr.mxu0 0.0
    %3097 = vmatpush1.msra.mxu0 %v3070
    %3098 = vmatprep.subr.mxu0 0.0
    %3099 = vmatpush1.msra.mxu0 %v3069
    %3100 = vmatprep.subr.mxu0 0.0
    %3101 = vmatpush1.msra.mxu0 %v3068
    %3102 = vmatprep.subr.mxu0 0.0
    %3103 = vmatpush1.msra.mxu0 %v3067
    %3104 = vmatprep.subr.mxu0 0.0
    %3105 = vmatpush1.msra.mxu0 %v3066
    %3106 = vmatprep.subr.mxu0 0.0
    %3107 = vmatpush1.msra.mxu0 %v3065
    %3108 = vmatprep.subr.mxu0 0.0
    %3109 = vmatpush1.msra.mxu0 %v3064
    %3110 = vmatprep.subr.mxu0 0.0
    %3111 = vmatpush1.msra.mxu0 %v3063
    %3112 = vmatprep.subr.mxu0 0.0
    %3113 = vmatpush1.msra.mxu0 %v3062
    %3114 = vmatprep.subr.mxu0 0.0
    %3115 = vmatpush1.msra.mxu0 %v3061
    %3116 = vmatprep.subr.mxu0 0.0
    %3117 = vmatpush2.msra.mxu0 0.0
    %3118 = vmatprep.subr.mxu0 0.0
    %3119 = vmatpush2.msra.mxu0 0.0
    %3120 = vmatprep.subr.mxu0 0.0
    %3121 = vmatpush2.msra.mxu0 0.0
    %3122 = vmatprep.subr.mxu0 0.0
    %3123 = vmatpush2.msra.mxu0 0.0
    %3124 = vmatprep.subr.mxu0 0.0
    %3125 = vmatpush2.msra.mxu0 0.0
    %3126 = vmatprep.subr.mxu0 0.0
    %3127 = vmatpush2.msra.mxu0 0.0
    %3128 = vmatprep.subr.mxu0 0.0
    %3129 = vmatpush2.msra.mxu0 0.0
    %3130 = vmatprep.subr.mxu0 0.0
    %3131 = vmatpush2.msra.mxu0 0.0
    %3132 = vmatprep.subr.mxu0 0.0
    %3133 = vmatpush2.msra.mxu0 0.0
    %3134 = vmatprep.subr.mxu0 0.0
    %3135 = vmatpush2.msra.mxu0 0.0
    %3136 = vmatprep.subr.mxu0 0.0
    %3137 = vmatpush2.msra.mxu0 0.0
    %3138 = vmatprep.subr.mxu0 0.0
    %3139 = vmatpush2.msra.mxu0 0.0
    %3140 = vmatprep.subr.mxu0 0.0
    %3141 = vmatpush2.msra.mxu0 0.0
    %3142 = vmatprep.subr.mxu0 0.0
    %3143 = vmatpush2.msra.mxu0 0.0
    %3144 = vmatprep.subr.mxu0 0.0
    %3145 = vmatpush2.msra.mxu0 0.0
    %3146 = vmatprep.subr.mxu0 0.0
    %3147 = vmatpush2.msra.mxu0 0.0
    %3148 = vmatprep.mubr.f32.mxu0 0.0
    %3149 = vmatmul.mubr.f32.gmra.mxu0 %v2983
    %v3150 = vpop.f32.mrf.mxu0
    %v3151 = vadd.f32 %v3082, %v3150
    %v3152 = vpop.f32.mrf.mxu0
    %3153 = vmatprep.mubr.f32.mxu0 0.0
    %3154 = vmatmul.mubr.f32.gmra.mxu0 %v2988
    %v3155 = vpop.f32.mrf.mxu0
    %v3156 = vadd.f32 %v3082, %v3155
    %v3157 = vpop.f32.mrf.mxu0
    %3158 = vmatprep.mubr.f32.mxu0 0.0
    %3159 = vmatmul.mubr.f32.gmra.mxu0 %v2993
    %v3160 = vpop.f32.mrf.mxu0
    %v3161 = vadd.f32 %v3082, %v3160
    %v3162 = vpop.f32.mrf.mxu0
    %3163 = vmatprep.mubr.f32.mxu0 0.0
    %3164 = vmatmul.mubr.f32.gmra.mxu0 %v2998
    %v3165 = vpop.f32.mrf.mxu0
    %v3166 = vadd.f32 %v3082, %v3165
    %v3167 = vpop.f32.mrf.mxu0
    %3168 = vmatprep.mubr.f32.mxu0 0.0
    %3169 = vmatmul.mubr.f32.gmra.mxu0 %v3003
    %v3170 = vpop.f32.mrf.mxu0
    %v3171 = vadd.f32 %v3082, %v3170
    %v3172 = vpop.f32.mrf.mxu0
    %3173 = vmatprep.mubr.f32.mxu0 0.0
    %3174 = vmatmul.mubr.f32.gmra.mxu0 %v3008
    %v3175 = vpop.f32.mrf.mxu0
    %v3176 = vadd.f32 %v3082, %v3175
    %v3177 = vpop.f32.mrf.mxu0
    %3178 = vmatprep.mubr.f32.mxu0 0.0
    %3179 = vmatmul.mubr.f32.gmra.mxu0 %v3013
    %v3180 = vpop.f32.mrf.mxu0
    %v3181 = vadd.f32 %v3082, %v3180
    %v3182 = vpop.f32.mrf.mxu0
    %3183 = vmatprep.mubr.f32.mxu0 0.0
    %3184 = vmatmul.mubr.f32.gmra.mxu0 %v3018
    %v3185 = vpop.f32.mrf.mxu0
    %v3186 = vadd.f32 %v3082, %v3185
    %v3187 = vpop.f32.mrf.mxu0
    %3188 = vmatprep.mubr.f32.mxu0 0.0
    %3189 = vmatmul.mubr.f32.gmra.mxu0 %v3023
    %v3190 = vpop.f32.mrf.mxu0
    %v3191 = vadd.f32 %v3082, %v3190
    %v3192 = vpop.f32.mrf.mxu0
    %3193 = vmatprep.mubr.f32.mxu0 0.0
    %3194 = vmatmul.mubr.f32.gmra.mxu0 %v3028
    %v3195 = vpop.f32.mrf.mxu0
    %v3196 = vadd.f32 %v3082, %v3195
    %v3197 = vpop.f32.mrf.mxu0
    %3198 = vmatprep.mubr.f32.mxu0 0.0
    %3199 = vmatmul.mubr.f32.gmra.mxu0 %v3033
    %v3200 = vpop.f32.mrf.mxu0
    %v3201 = vadd.f32 %v3082, %v3200
    %v3202 = vpop.f32.mrf.mxu0
    %3203 = vmatprep.mubr.f32.mxu0 0.0
    %3204 = vmatmul.mubr.f32.gmra.mxu0 %v3038
    %v3205 = vpop.f32.mrf.mxu0
    %v3206 = vadd.f32 %v3082, %v3205
    %v3207 = vpop.f32.mrf.mxu0
    %3208 = vmatprep.mubr.f32.mxu0 0.0
    %3209 = vmatmul.mubr.f32.gmra.mxu0 %v3043
    %v3210 = vpop.f32.mrf.mxu0
    %v3211 = vadd.f32 %v3082, %v3210
    %v3212 = vpop.f32.mrf.mxu0
    %3213 = vmatprep.mubr.f32.mxu0 0.0
    %3214 = vmatmul.mubr.f32.gmra.mxu0 %v3048
    %v3215 = vpop.f32.mrf.mxu0
    %v3216 = vadd.f32 %v3082, %v3215
    %v3217 = vpop.f32.mrf.mxu0
    %3218 = vmatprep.mubr.f32.mxu0 0.0
    %3219 = vmatmul.mubr.f32.gmra.mxu0 %v3053
    %v3220 = vpop.f32.mrf.mxu0
    %v3221 = vadd.f32 %v3082, %v3220
    %v3222 = vpop.f32.mrf.mxu0
    %3223 = vmatprep.mubr.f32.mxu0 0.0
    %3224 = vmatmul.mubr.f32.gmra.mxu0 %v3058
    %v3225 = vpop.f32.mrf.mxu0
    %v3226 = vadd.f32 %v3082, %v3225
    %v3227 = vpop.f32.mrf.mxu0
    %3228 = vdwg.mxu0
    %v3229 = vmax.f32 %v3151, 0.0
    %v3230 = vmax.f32 %v3156, 0.0
    %v3231 = vmax.f32 %v3161, 0.0
    %v3232 = vmax.f32 %v3166, 0.0
    %v3233 = vmax.f32 %v3171, 0.0
    %v3234 = vmax.f32 %v3176, 0.0
    %v3235 = vmax.f32 %v3181, 0.0
    %v3236 = vmax.f32 %v3186, 0.0
    %v3237 = vmax.f32 %v3191, 0.0
    %v3238 = vmax.f32 %v3196, 0.0
    %v3239 = vmax.f32 %v3201, 0.0
    %v3240 = vmax.f32 %v3206, 0.0
    %v3241 = vmax.f32 %v3211, 0.0
    %v3242 = vmax.f32 %v3216, 0.0
    %v3243 = vmax.f32 %v3221, 0.0
    %v3244 = vmax.f32 %v3226, 0.0
    %v3245 = vld [vmem:[#allocation5] sm:$0xff]
    %v3246 = vld [vmem:[#allocation5 + $0x8] sm:$0xff]
    %v3247 = vld [vmem:[#allocation5 + $0x10] sm:$0xff]
    %v3248 = vld [vmem:[#allocation5 + $0x18] sm:$0xff]
    %v3249 = vld [vmem:[#allocation5 + $0x20] sm:$0xff]
    %v3250 = vld [vmem:[#allocation5 + $0x28] sm:$0xff]
    %v3251 = vld [vmem:[#allocation5 + $0x30] sm:$0xff]
    %v3252 = vld [vmem:[#allocation5 + $0x38] sm:$0xff]
    %v3253 = vld [vmem:[#allocation5 + $0x40] sm:$0xff]
    %v3254 = vld [vmem:[#allocation5 + $0x48] sm:$0xff]
    %v3255 = vld [vmem:[#allocation5 + $0x50] sm:$0xff]
    %v3256 = vld [vmem:[#allocation5 + $0x58] sm:$0xff]
    %v3257 = vld [vmem:[#allocation5 + $0x60] sm:$0xff]
    %v3258 = vld [vmem:[#allocation5 + $0x68] sm:$0xff]
    %v3259 = vld [vmem:[#allocation5 + $0x70] sm:$0xff]
    %v3260 = vld [vmem:[#allocation5 + $0x78] sm:$0xff]
    %v3261 = vld [vmem:[%s10] sm:$0x1]
    %v3263 = vlaneseq
    %v3264 = vshrl.u32 %v3263, 7
    %v3265 = vsub.s32 0, %v3264
    %v3266 = vrot.slane %v3261, %v3265
    %3268 = vmatprep.subr.mxu0 0.0
    %3269 = vmatpush1.msra.mxu0 %v3260
    %3270 = vmatprep.subr.mxu0 0.0
    %3271 = vmatpush1.msra.mxu0 %v3259
    %3272 = vmatprep.subr.mxu0 0.0
    %3273 = vmatpush1.msra.mxu0 %v3258
    %3274 = vmatprep.subr.mxu0 0.0
    %3275 = vmatpush1.msra.mxu0 %v3257
    %3276 = vmatprep.subr.mxu0 0.0
    %3277 = vmatpush1.msra.mxu0 %v3256
    %3278 = vmatprep.subr.mxu0 0.0
    %3279 = vmatpush1.msra.mxu0 %v3255
    %3280 = vmatprep.subr.mxu0 0.0
    %3281 = vmatpush1.msra.mxu0 %v3254
    %3282 = vmatprep.subr.mxu0 0.0
    %3283 = vmatpush1.msra.mxu0 %v3253
    %3284 = vmatprep.subr.mxu0 0.0
    %3285 = vmatpush1.msra.mxu0 %v3252
    %3286 = vmatprep.subr.mxu0 0.0
    %3287 = vmatpush1.msra.mxu0 %v3251
    %3288 = vmatprep.subr.mxu0 0.0
    %3289 = vmatpush1.msra.mxu0 %v3250
    %3290 = vmatprep.subr.mxu0 0.0
    %3291 = vmatpush1.msra.mxu0 %v3249
    %3292 = vmatprep.subr.mxu0 0.0
    %3293 = vmatpush1.msra.mxu0 %v3248
    %3294 = vmatprep.subr.mxu0 0.0
    %3295 = vmatpush1.msra.mxu0 %v3247
    %3296 = vmatprep.subr.mxu0 0.0
    %3297 = vmatpush1.msra.mxu0 %v3246
    %3298 = vmatprep.subr.mxu0 0.0
    %3299 = vmatpush1.msra.mxu0 %v3245
    %3300 = vmatprep.subr.mxu0 0.0
    %3301 = vmatpush2.msra.mxu0 0.0
    %3302 = vmatprep.subr.mxu0 0.0
    %3303 = vmatpush2.msra.mxu0 0.0
    %3304 = vmatprep.subr.mxu0 0.0
    %3305 = vmatpush2.msra.mxu0 0.0
    %3306 = vmatprep.subr.mxu0 0.0
    %3307 = vmatpush2.msra.mxu0 0.0
    %3308 = vmatprep.subr.mxu0 0.0
    %3309 = vmatpush2.msra.mxu0 0.0
    %3310 = vmatprep.subr.mxu0 0.0
    %3311 = vmatpush2.msra.mxu0 0.0
    %3312 = vmatprep.subr.mxu0 0.0
    %3313 = vmatpush2.msra.mxu0 0.0
    %3314 = vmatprep.subr.mxu0 0.0
    %3315 = vmatpush2.msra.mxu0 0.0
    %3316 = vmatprep.subr.mxu0 0.0
    %3317 = vmatpush2.msra.mxu0 0.0
    %3318 = vmatprep.subr.mxu0 0.0
    %3319 = vmatpush2.msra.mxu0 0.0
    %3320 = vmatprep.subr.mxu0 0.0
    %3321 = vmatpush2.msra.mxu0 0.0
    %3322 = vmatprep.subr.mxu0 0.0
    %3323 = vmatpush2.msra.mxu0 0.0
    %3324 = vmatprep.subr.mxu0 0.0
    %3325 = vmatpush2.msra.mxu0 0.0
    %3326 = vmatprep.subr.mxu0 0.0
    %3327 = vmatpush2.msra.mxu0 0.0
    %3328 = vmatprep.subr.mxu0 0.0
    %3329 = vmatpush2.msra.mxu0 0.0
    %3330 = vmatprep.subr.mxu0 0.0
    %3331 = vmatpush2.msra.mxu0 0.0
    %3332 = vmatprep.mubr.f32.mxu0 0.0
    %3333 = vmatmul.mubr.f32.gmra.mxu0 %v3229
    %v3334 = vpop.f32.mrf.mxu0
    %v3335 = vadd.f32 %v3266, %v3334
    %v3336 = vpop.f32.mrf.mxu0
    %3337 = vmatprep.mubr.f32.mxu0 0.0
    %3338 = vmatmul.mubr.f32.gmra.mxu0 %v3230
    %v3339 = vpop.f32.mrf.mxu0
    %v3340 = vadd.f32 %v3266, %v3339
    %v3341 = vpop.f32.mrf.mxu0
    %3342 = vmatprep.mubr.f32.mxu0 0.0
    %3343 = vmatmul.mubr.f32.gmra.mxu0 %v3231
    %v3344 = vpop.f32.mrf.mxu0
    %v3345 = vadd.f32 %v3266, %v3344
    %v3346 = vpop.f32.mrf.mxu0
    %3347 = vmatprep.mubr.f32.mxu0 0.0
    %3348 = vmatmul.mubr.f32.gmra.mxu0 %v3232
    %v3349 = vpop.f32.mrf.mxu0
    %v3350 = vadd.f32 %v3266, %v3349
    %v3351 = vpop.f32.mrf.mxu0
    %3352 = vmatprep.mubr.f32.mxu0 0.0
    %3353 = vmatmul.mubr.f32.gmra.mxu0 %v3233
    %v3354 = vpop.f32.mrf.mxu0
    %v3355 = vadd.f32 %v3266, %v3354
    %v3356 = vpop.f32.mrf.mxu0
    %3357 = vmatprep.mubr.f32.mxu0 0.0
    %3358 = vmatmul.mubr.f32.gmra.mxu0 %v3234
    %v3359 = vpop.f32.mrf.mxu0
    %v3360 = vadd.f32 %v3266, %v3359
    %v3361 = vpop.f32.mrf.mxu0
    %3362 = vmatprep.mubr.f32.mxu0 0.0
    %3363 = vmatmul.mubr.f32.gmra.mxu0 %v3235
    %v3364 = vpop.f32.mrf.mxu0
    %v3365 = vadd.f32 %v3266, %v3364
    %v3366 = vpop.f32.mrf.mxu0
    %3367 = vmatprep.mubr.f32.mxu0 0.0
    %3368 = vmatmul.mubr.f32.gmra.mxu0 %v3236
    %v3369 = vpop.f32.mrf.mxu0
    %v3370 = vadd.f32 %v3266, %v3369
    %v3371 = vpop.f32.mrf.mxu0
    %3372 = vmatprep.mubr.f32.mxu0 0.0
    %3373 = vmatmul.mubr.f32.gmra.mxu0 %v3237
    %v3374 = vpop.f32.mrf.mxu0
    %v3375 = vadd.f32 %v3266, %v3374
    %v3376 = vpop.f32.mrf.mxu0
    %3377 = vmatprep.mubr.f32.mxu0 0.0
    %3378 = vmatmul.mubr.f32.gmra.mxu0 %v3238
    %v3379 = vpop.f32.mrf.mxu0
    %v3380 = vadd.f32 %v3266, %v3379
    %v3381 = vpop.f32.mrf.mxu0
    %3382 = vmatprep.mubr.f32.mxu0 0.0
    %3383 = vmatmul.mubr.f32.gmra.mxu0 %v3239
    %v3384 = vpop.f32.mrf.mxu0
    %v3385 = vadd.f32 %v3266, %v3384
    %v3386 = vpop.f32.mrf.mxu0
    %3387 = vmatprep.mubr.f32.mxu0 0.0
    %3388 = vmatmul.mubr.f32.gmra.mxu0 %v3240
    %v3389 = vpop.f32.mrf.mxu0
    %v3390 = vadd.f32 %v3266, %v3389
    %v3391 = vpop.f32.mrf.mxu0
    %3392 = vmatprep.mubr.f32.mxu0 0.0
    %3393 = vmatmul.mubr.f32.gmra.mxu0 %v3241
    %v3394 = vpop.f32.mrf.mxu0
    %v3395 = vadd.f32 %v3266, %v3394
    %v3396 = vpop.f32.mrf.mxu0
    %3397 = vmatprep.mubr.f32.mxu0 0.0
    %3398 = vmatmul.mubr.f32.gmra.mxu0 %v3242
    %v3399 = vpop.f32.mrf.mxu0
    %v3400 = vadd.f32 %v3266, %v3399
    %v3401 = vpop.f32.mrf.mxu0
    %3402 = vmatprep.mubr.f32.mxu0 0.0
    %3403 = vmatmul.mubr.f32.gmra.mxu0 %v3243
    %v3404 = vpop.f32.mrf.mxu0
    %v3405 = vadd.f32 %v3266, %v3404
    %v3406 = vpop.f32.mrf.mxu0
    %3407 = vmatprep.mubr.f32.mxu0 0.0
    %3408 = vmatmul.mubr.f32.gmra.mxu0 %v3244
    %v3409 = vpop.f32.mrf.mxu0
    %v3410 = vadd.f32 %v3266, %v3409
    %v3411 = vpop.f32.mrf.mxu0
    %3412 = vdwg.mxu0
    %3413 = vst [vmem:[#allocation7] sm:$0xff] %v3335
    %3414 = vst [vmem:[#allocation7 + $0x8] sm:$0xff] %v3340
    %3415 = vst [vmem:[#allocation7 + $0x10] sm:$0xff] %v3345
    %3416 = vst [vmem:[#allocation7 + $0x18] sm:$0xff] %v3350
    %3417 = vst [vmem:[#allocation7 + $0x20] sm:$0xff] %v3355
    %3418 = vst [vmem:[#allocation7 + $0x28] sm:$0xff] %v3360
    %3419 = vst [vmem:[#allocation7 + $0x30] sm:$0xff] %v3365
    %3420 = vst [vmem:[#allocation7 + $0x38] sm:$0xff] %v3370
    %3421 = vst [vmem:[#allocation7 + $0x40] sm:$0xff] %v3375
    %3422 = vst [vmem:[#allocation7 + $0x48] sm:$0xff] %v3380
    %3423 = vst [vmem:[#allocation7 + $0x50] sm:$0xff] %v3385
    %3424 = vst [vmem:[#allocation7 + $0x58] sm:$0xff] %v3390
    %3425 = vst [vmem:[#allocation7 + $0x60] sm:$0xff] %v3395
    %3426 = vst [vmem:[#allocation7 + $0x68] sm:$0xff] %v3400
    %3427 = vst [vmem:[#allocation7 + $0x70] sm:$0xff] %v3405
    %3428 = vst [vmem:[#allocation7 + $0x78] sm:$0xff] %v3410
    // Predicated region
    $region54: #{tpu_custom_call.1} parent=1 // pred_check
      _
    $region55: #{tpu_custom_call.1} parent=1 // pred_check_branch
      %3430 = sbr.rel (0) target = $region57
    $region56: #{tpu_custom_call.1} parent=1 // pred_region
      %s3432 = ssub.s32 2048, 2048
      %3433 = vsyncadd [#allocation4], %s3432
      %s3434 = sshll.u32 [#allocation7], 4
      %s3435 = int_to_ptr.vmem [resolvable:$true] %s3434
      %3440 = dma.vmem_to_hbm [thread:$0]  %s3435, 2048, %s11, [#allocation4], 128, 128, 8
    $region57: #{tpu_custom_call.1} parent=1 // pred_fallthru
      _
    // Predicated region
    $region58: #{tpu_custom_call.1} parent=1 // pred_check
      _
    $region59: #{tpu_custom_call.1} parent=1 // pred_check_branch
      %3442 = sbr.rel (0) target = $region61
    $region60: #{tpu_custom_call.1} parent=1 // pred_region
      %3443 = dma.done [#allocation4], 2048
    $region61: #{tpu_custom_call.1} parent=1 // pred_fallthru
      _
    %3444 = vsyncpa [#allocation3], 1
    %3445 = vsyncpa [#allocation6], 1
    %3446 = vsyncpa [#allocation4], 1

</llo_original>
